<compile_context>
chip_gen: v7x
topology: tpu7x:2x2x1
jax: 0.10.0
libtpu: 0.0.40
codegen_flags: <defaults>
</compile_context>

<pallas_src>
import functools

import jax
import jax.numpy as jnp
from jax.experimental import pallas as pl
from jax.experimental.pallas import tpu as pltpu


_CPAD = 128                        # lane-padded channel width
_VMEM_LIMIT = 32 * 1024 * 1024     # safe scoped-VMEM budget on v5e/v6e/v7x


def _round_up(x, m):
    return ((x + m - 1) // m) * m


def _pick_tm(m, tm_max=256):
    """Row-tile size: multiple of 8 sublanes, capped so double-buffered bf16
    input+output tiles stay tiny relative to scoped VMEM on every generation
    (incl. v7x's 64 MiB).  256 also keeps a multi-step pipelined grid even at
    toy shapes; bump toward 512-1024 for big M on v5e."""
    return min(tm_max, _round_up(m, 8))


# ----------------------------- Pallas kernels ------------------------------

def _nin_block_kernel(p_ref, w1_ref, b1_ref, w2_ref, b2_ref, w3_ref, b3_ref,
                      o_ref):
    """Fused NIN block on one (TM, Kpad) tile of im2col patches.

    p_ref  : (TM, Kpad)            bf16 patches (rows = output pixels)
    w*_ref : (Kpad|Cpad, Cpad)     bf16 weights, zero-padded to 128 lanes
    b*_ref : (1, Cpad)             f32 biases (zero in padded lanes)
    o_ref  : (TM, Cpad)            bf16 activations
    Matmuls accumulate in f32 on the MXU; bias/ReLU epilogues stay f32.
    """
    h = jnp.dot(p_ref[...], w1_ref[...], preferred_element_type=jnp.float32)
    h = jnp.maximum(h + b1_ref[...], 0.0)
    h = jnp.dot(h.astype(jnp.bfloat16), w2_ref[...],
                preferred_element_type=jnp.float32)
    h = jnp.maximum(h + b2_ref[...], 0.0)
    h = jnp.dot(h.astype(jnp.bfloat16), w3_ref[...],
                preferred_element_type=jnp.float32)
    o_ref[...] = jnp.maximum(h + b3_ref[...], 0.0).astype(o_ref.dtype)


def _final_block_gap_kernel(p_ref, w1_ref, b1_ref, w2_ref, b2_ref, w3_ref,
                            b3_ref, o_ref):
    """Final NIN block fused with global average pooling; one image per step.

    p_ref : (1, HW, Kpad) bf16 patches of a single image.
    o_ref : (1, 8, Cpad)  f32; GAP result broadcast over 8 sublanes so the
            store stays (8,128)-tile aligned (row 0 read by the wrapper).
    """
    p = p_ref[0]
    h = jnp.dot(p, w1_ref[...], preferred_element_type=jnp.float32)
    h = jnp.maximum(h + b1_ref[...], 0.0)
    h = jnp.dot(h.astype(jnp.bfloat16), w2_ref[...],
                preferred_element_type=jnp.float32)
    h = jnp.maximum(h + b2_ref[...], 0.0)
    h = jnp.dot(h.astype(jnp.bfloat16), w3_ref[...],
                preferred_element_type=jnp.float32)
    h = jnp.maximum(h + b3_ref[...], 0.0)
    gap = jnp.mean(h, axis=0, keepdims=True)          # (1, Cpad) global avg
    o_ref[...] = jnp.broadcast_to(gap.reshape(1, 1, -1), o_ref.shape)


def _max3_kernel(x_ref, o_ref):
    """x_ref: (3, TM, C) shifted/strided views -> o_ref: (TM, C) elementwise max."""
    o_ref[...] = jnp.max(x_ref[...], axis=0)


# --------------------------- weight / bias packing ---------------------------

def _pack_weight(w_oihw, c_in_act, c_out_pad):
    """OIHW -> (kh, kw, Cin, Cout) -> zero-pad Cin to the activation's channel
    count and Cout to the lane pad -> flatten to (k*k*c_in_act, c_out_pad),
    then pad rows to a multiple of 128.  Matches the im2col (kh, kw, C) order."""
    c_out, c_in, kh, kw = w_oihw.shape
    wt = jnp.transpose(w_oihw, (2, 3, 1, 0))
    wt = jnp.pad(wt, ((0, 0), (0, 0),
                      (0, c_in_act - c_in), (0, c_out_pad - c_out)))
    wt = wt.reshape(kh * kw * c_in_act, c_out_pad)
    k_pad = _round_up(wt.shape[0], 128)
    return jnp.pad(wt, ((0, k_pad - wt.shape[0]), (0, 0)))


def _pack_bias(b, c_out_pad):
    return jnp.pad(b, (0, c_out_pad - b.shape[0])).reshape(1, c_out_pad).astype(
        jnp.float32)


# ------------------------------ JAX glue code -------------------------------

def _im2col(x_nhwc, k, stride, pad):
    """Patches with (kh, kw, C) flatten order, C kept lane-minor (no transpose).

    Returns ((N*Hout*Wout, k*k*C), Hout, Wout)."""
    n, h, w, c = x_nhwc.shape
    xp = jnp.pad(x_nhwc, ((0, 0), (pad, pad), (pad, pad), (0, 0)))
    hout = (h + 2 * pad - k) // stride + 1
    wout = (w + 2 * pad - k) // stride + 1
    cols = []
    for di in range(k):
        for dj in range(k):
            cols.append(xp[:, di:di + stride * (hout - 1) + 1:stride,
                           dj:dj + stride * (wout - 1) + 1:stride, :])
    patches = jnp.concatenate(cols, axis=-1)          # cheap lane-axis concat
    return patches.reshape(n * hout * wout, k * k * c), hout, wout


def _apply_nin_block(x_nhwc, block_params, k, stride, pad, c_out_pad=_CPAD):
    (w1, b1), (w2, b2), (w3, b3) = block_params
    n, _h, _w, c_act = x_nhwc.shape
    cols, hout, wout = _im2col(x_nhwc, k, stride, pad)
    m, kdim = cols.shape
    k_pad = _round_up(kdim, 128)
    tm = _pick_tm(m)
    m_pad = _round_up(m, tm)
    cols = jnp.pad(cols, ((0, m_pad - m), (0, k_pad - kdim))).astype(jnp.bfloat16)

    w1m = _pack_weight(w1, c_act, c_out_pad).astype(jnp.bfloat16)
    w2m = _pack_weight(w2, c_out_pad, c_out_pad).astype(jnp.bfloat16)
    w3m = _pack_weight(w3, c_out_pad, c_out_pad).astype(jnp.bfloat16)
    b1p, b2p, b3p = (_pack_bias(b, c_out_pad) for b in (b1, b2, b3))

    out = pl.pallas_call(
        _nin_block_kernel,
        out_shape=jax.ShapeDtypeStruct((m_pad, c_out_pad), jnp.bfloat16),
        grid_spec=pltpu.PrefetchScalarGridSpec(
            num_scalar_prefetch=0,
            grid=(m_pad // tm,),
            in_specs=[
                pl.BlockSpec((tm, k_pad), lambda i: (i, 0)),          # patches
                pl.BlockSpec((k_pad, c_out_pad), lambda i: (0, 0)),   # w1 (resident)
                pl.BlockSpec((1, c_out_pad), lambda i: (0, 0)),       # b1
                pl.BlockSpec((c_out_pad, c_out_pad), lambda i: (0, 0)),
                pl.BlockSpec((1, c_out_pad), lambda i: (0, 0)),
                pl.BlockSpec((c_out_pad, c_out_pad), lambda i: (0, 0)),
                pl.BlockSpec((1, c_out_pad), lambda i: (0, 0)),
            ],
            out_specs=pl.BlockSpec((tm, c_out_pad), lambda i: (i, 0))),
        compiler_params=pltpu.CompilerParams(
            dimension_semantics=("parallel",),
            vmem_limit_bytes=_VMEM_LIMIT),
    )(cols, w1m, b1p, w2m, b2p, w3m, b3p)
    return out[:m].reshape(n, hout, wout, c_out_pad)


def _pooled_max3(views):
    """Elementwise max over 3 (M, C) views with an M-gridded Pallas kernel."""
    m, c = views[0].shape
    tm = _pick_tm(m)
    m_pad = _round_up(m, tm)
    stacked = jnp.stack(views, axis=0)
    stacked = jnp.pad(stacked, ((0, 0), (0, m_pad - m), (0, 0)))
    out = pl.pallas_call(
        _max3_kernel,
        out_shape=jax.ShapeDtypeStruct((m_pad, c), stacked.dtype),
        grid_spec=pltpu.PrefetchScalarGridSpec(
            num_scalar_prefetch=0,
            grid=(m_pad // tm,),
            in_specs=[pl.BlockSpec((3, tm, c), lambda i: (0, i, 0))],
            out_specs=pl.BlockSpec((tm, c), lambda i: (i, 0))),
        compiler_params=pltpu.CompilerParams(
            dimension_semantics=("parallel",),
            vmem_limit_bytes=_VMEM_LIMIT),
    )(stacked)
    return out[:m]


def _max_pool_3x3_s2(x_nhwc):
    """Separable 3x3/stride-2 max pool: max along W, then along H."""
    n, h, w, c = x_nhwc.shape
    k, s = 3, 2
    hout = (h - k) // s + 1
    wout = (w - k) // s + 1
    views_w = [x_nhwc[:, :, dj:dj + s * (wout - 1) + 1:s, :].reshape(n * h * wout, c)
               for dj in range(k)]
    y = _pooled_max3(views_w).reshape(n, h, wout, c)
    views_h = [y[:, di:di + s * (hout - 1) + 1:s, :, :].reshape(n * hout * wout, c)
               for di in range(k)]
    return _pooled_max3(views_h).reshape(n, hout, wout, c)


def _apply_final_block_gap(x_nhwc, block_params, k, stride, pad,
                           c_out_pad=_CPAD):
    """Final NIN block + fused global average pool + flatten -> (N, num_output)."""
    (w1, b1), (w2, b2), (w3, b3) = block_params
    n, _h, _w, c_act = x_nhwc.shape
    c_out = w1.shape[0]
    cols, hout, wout = _im2col(x_nhwc, k, stride, pad)
    kdim = cols.shape[1]
    k_pad = _round_up(kdim, 128)
    hw = hout * wout
    cols = jnp.pad(cols, ((0, 0), (0, k_pad - kdim))).astype(jnp.bfloat16)
    cols = cols.reshape(n, hw, k_pad)

    w1m = _pack_weight(w1, c_act, c_out_pad).astype(jnp.bfloat16)
    w2m = _pack_weight(w2, c_out_pad, c_out_pad).astype(jnp.bfloat16)
    w3m = _pack_weight(w3, c_out_pad, c_out_pad).astype(jnp.bfloat16)
    b1p, b2p, b3p = (_pack_bias(b, c_out_pad) for b in (b1, b2, b3))

    out = pl.pallas_call(
        _final_block_gap_kernel,
        out_shape=jax.ShapeDtypeStruct((n, 8, c_out_pad), jnp.float32),
        grid_spec=pltpu.PrefetchScalarGridSpec(
            num_scalar_prefetch=0,
            grid=(n,),
            in_specs=[
                pl.BlockSpec((1, hw, k_pad), lambda i: (i, 0, 0)),
                pl.BlockSpec((k_pad, c_out_pad), lambda i: (0, 0)),
                pl.BlockSpec((1, c_out_pad), lambda i: (0, 0)),
                pl.BlockSpec((c_out_pad, c_out_pad), lambda i: (0, 0)),
                pl.BlockSpec((1, c_out_pad), lambda i: (0, 0)),
                pl.BlockSpec((c_out_pad, c_out_pad), lambda i: (0, 0)),
                pl.BlockSpec((1, c_out_pad), lambda i: (0, 0)),
            ],
            out_specs=pl.BlockSpec((1, 8, c_out_pad), lambda i: (i, 0, 0))),
        compiler_params=pltpu.CompilerParams(
            dimension_semantics=("parallel",),
            vmem_limit_bytes=_VMEM_LIMIT),
    )(cols, w1m, b1p, w2m, b2p, w3m, b3p)
    return out[:, 0, :c_out]


def nin_forward(x_nchw, params, nin_blocks):
    x = jnp.transpose(x_nchw, (0, 2, 3, 1))  # NCHW -> NHWC (C lane-minor)
    for idx, (_c_in, _c_out, k, stride, pad) in enumerate(nin_blocks):
        x = _apply_nin_block(x, params['nin_%d' % idx], k, stride, pad)
        # Only one 'max_pool' survives the name collision in nn.Sequential,
        # positioned after the first block (dict key-order semantics).
        if idx == 0:
            x = _max_pool_3x3_s2(x)
    # Dropout(0.5): identity in eval mode.
    # TODO(synk): training-mode stochastic dropout mask is not implemented.
    return _apply_final_block_gap(x, params['final'], 3, 1, 1)


# ----------------------- deterministic parameter init -----------------------

def _init_conv(key, c_in, c_out, k):
    kw, kb = jax.random.split(key)
    fan_in = c_in * k * k
    bound = float(1.0 / (fan_in ** 0.5))
    w = jax.random.uniform(kw, (c_out, c_in, k, k), jnp.float32, -bound, bound)
    b = jax.random.uniform(kb, (c_out,), jnp.float32, -bound, bound)
    return w, b


def _init_nin_block(keys, c_in, c_out, k):
    return (_init_conv(keys[0], c_in, c_out, k),
            _init_conv(keys[1], c_out, c_out, 1),
            _init_conv(keys[2], c_out, c_out, 1))


# ----------------------------- pure-JAX reference ---------------------------

def _conv_ref(x, w, b, stride, pad):
    y = jax.lax.conv_general_dilated(
        x, w, window_strides=(stride, stride),
        padding=((pad, pad), (pad, pad)),
        dimension_numbers=('NCHW', 'OIHW', 'NCHW'))
    return y + b.reshape(1, -1, 1, 1)


def _nin_block_ref(x, block_params, stride, pad):
    (w1, b1), (w2, b2), (w3, b3) = block_params
    x = jax.nn.relu(_conv_ref(x, w1, b1, stride, pad))
    x = jax.nn.relu(_conv_ref(x, w2, b2, 1, 0))
    x = jax.nn.relu(_conv_ref(x, w3, b3, 1, 0))
    return x


def nin_ref(x, params, nin_blocks):
    for idx, (_c_in, _c_out, _k, stride, pad) in enumerate(nin_blocks):
        x = _nin_block_ref(x, params['nin_%d' % idx], stride, pad)
        if idx == 0:
            x = jax.lax.reduce_window(x, -jnp.inf, jax.lax.max,
                                      (1, 1, 3, 3), (1, 1, 2, 2), 'VALID')
    x = _nin_block_ref(x, params['final'], 1, 1)
    return jnp.mean(x, axis=(2, 3))


# ---------------------------------- main -------------------------------------

if __name__ == "__main__":
    key = jax.random.PRNGKey(0)
    kx, kp = jax.random.split(key)

    nin_blocks = [(4, 8, 3, 1, 1)]   # (in_ch, out_ch, kernel, stride, padding)
    num_output = 10
    N, H, W = 2, 16, 16

    x = jax.random.normal(kx, (N, nin_blocks[0][0], H, W), jnp.float32)

    keys = jax.random.split(kp, 6)
    params = {
        'nin_0': _init_nin_block(keys[0:3], nin_blocks[0][0], nin_blocks[0][1],
                                 nin_blocks[0][2]),
        'final': _init_nin_block(keys[3:6], nin_blocks[0][1], num_output, 3),
    }

    fwd = jax.jit(functools.partial(nin_forward, nin_blocks=nin_blocks))
    out = jax.block_until_ready(fwd(x, params))

    ref = nin_ref(x, params, nin_blocks)
    assert out.shape == (N, num_output), out.shape
    assert jnp.allclose(out, ref, rtol=2e-2, atol=2e-2), (out, ref)
    print("KERNEL_OK")
</pallas_src>

<mosaic_0001>
module attributes {stable_mosaic.version = 11 : i64} {
  func.func @_nin_block_kernel(%arg0: i32, %arg1: memref<256x128xbf16, #tpu.memory_space<vmem>>, %arg2: memref<128x128xbf16, #tpu.memory_space<vmem>>, %arg3: memref<1x128xf32, #tpu.memory_space<vmem>>, %arg4: memref<128x128xbf16, #tpu.memory_space<vmem>>, %arg5: memref<1x128xf32, #tpu.memory_space<vmem>>, %arg6: memref<128x128xbf16, #tpu.memory_space<vmem>>, %arg7: memref<1x128xf32, #tpu.memory_space<vmem>>, %arg8: memref<256x128xbf16, #tpu.memory_space<vmem>>) attributes {dimension_semantics = [#tpu.dimension_semantics<parallel>], iteration_bounds = array<i64: 2>, scalar_prefetch = 0 : i64, scratch_operands = 0 : i64, tpu.core_type = #tpu.core_type<tc>, window_params = [{transform_indices = @transform_0, window_bounds = array<i64: 256, 128>}, {pipeline_mode = #tpu.pipeline_mode<synchronous>, transform_indices = @transform_1, window_bounds = array<i64: 128, 128>}, {pipeline_mode = #tpu.pipeline_mode<synchronous>, transform_indices = @transform_2, window_bounds = array<i64: 1, 128>}, {pipeline_mode = #tpu.pipeline_mode<synchronous>, transform_indices = @transform_3, window_bounds = array<i64: 128, 128>}, {pipeline_mode = #tpu.pipeline_mode<synchronous>, transform_indices = @transform_4, window_bounds = array<i64: 1, 128>}, {pipeline_mode = #tpu.pipeline_mode<synchronous>, transform_indices = @transform_5, window_bounds = array<i64: 128, 128>}, {pipeline_mode = #tpu.pipeline_mode<synchronous>, transform_indices = @transform_6, window_bounds = array<i64: 1, 128>}, {transform_indices = @transform_7, window_bounds = array<i64: 256, 128>}]} {
    %c0 = arith.constant 0 : index
    %c0_0 = arith.constant 0 : index
    %0 = vector.load %arg1[%c0, %c0_0] : memref<256x128xbf16, #tpu.memory_space<vmem>>, vector<256x128xbf16>
    %c0_1 = arith.constant 0 : index
    %c0_2 = arith.constant 0 : index
    %1 = vector.load %arg2[%c0_1, %c0_2] : memref<128x128xbf16, #tpu.memory_space<vmem>>, vector<128x128xbf16>
    %cst = arith.constant dense<0.000000e+00> : vector<256x128xf32>
    %2 = tpu.matmul %0, %1, %cst {dimension_numbers = #tpu.dot_dimension_numbers<[1], [0], [0], [1], [0, 0, 1, 1], [], []>} : vector<256x128xbf16>, vector<128x128xbf16>, vector<256x128xf32> -> vector<256x128xf32>
    %c0_3 = arith.constant 0 : index
    %c0_4 = arith.constant 0 : index
    %3 = vector.load %arg3[%c0_3, %c0_4] : memref<1x128xf32, #tpu.memory_space<vmem>>, vector<1x128xf32>
    %4 = vector.broadcast %3 : vector<1x128xf32> to vector<256x128xf32>
    %5 = arith.addf %2, %4 : vector<256x128xf32>
    %cst_5 = arith.constant 0.000000e+00 : f32
    %6 = vector.broadcast %cst_5 : f32 to vector<256x128xf32>
    %7 = arith.maximumf %5, %6 : vector<256x128xf32>
    %8 = arith.truncf %7 : vector<256x128xf32> to vector<256x128xbf16>
    %c0_6 = arith.constant 0 : index
    %c0_7 = arith.constant 0 : index
    %9 = vector.load %arg4[%c0_6, %c0_7] : memref<128x128xbf16, #tpu.memory_space<vmem>>, vector<128x128xbf16>
    %cst_8 = arith.constant dense<0.000000e+00> : vector<256x128xf32>
    %10 = tpu.matmul %8, %9, %cst_8 {dimension_numbers = #tpu.dot_dimension_numbers<[1], [0], [0], [1], [0, 0, 1, 1], [], []>} : vector<256x128xbf16>, vector<128x128xbf16>, vector<256x128xf32> -> vector<256x128xf32>
    %c0_9 = arith.constant 0 : index
    %c0_10 = arith.constant 0 : index
    %11 = vector.load %arg5[%c0_9, %c0_10] : memref<1x128xf32, #tpu.memory_space<vmem>>, vector<1x128xf32>
    %12 = vector.broadcast %11 : vector<1x128xf32> to vector<256x128xf32>
    %13 = arith.addf %10, %12 : vector<256x128xf32>
    %cst_11 = arith.constant 0.000000e+00 : f32
    %14 = vector.broadcast %cst_11 : f32 to vector<256x128xf32>
    %15 = arith.maximumf %13, %14 : vector<256x128xf32>
    %16 = arith.truncf %15 : vector<256x128xf32> to vector<256x128xbf16>
    %c0_12 = arith.constant 0 : index
    %c0_13 = arith.constant 0 : index
    %17 = vector.load %arg6[%c0_12, %c0_13] : memref<128x128xbf16, #tpu.memory_space<vmem>>, vector<128x128xbf16>
    %cst_14 = arith.constant dense<0.000000e+00> : vector<256x128xf32>
    %18 = tpu.matmul %16, %17, %cst_14 {dimension_numbers = #tpu.dot_dimension_numbers<[1], [0], [0], [1], [0, 0, 1, 1], [], []>} : vector<256x128xbf16>, vector<128x128xbf16>, vector<256x128xf32> -> vector<256x128xf32>
    %c0_15 = arith.constant 0 : index
    %c0_16 = arith.constant 0 : index
    %19 = vector.load %arg7[%c0_15, %c0_16] : memref<1x128xf32, #tpu.memory_space<vmem>>, vector<1x128xf32>
    %20 = vector.broadcast %19 : vector<1x128xf32> to vector<256x128xf32>
    %21 = arith.addf %18, %20 : vector<256x128xf32>
    %cst_17 = arith.constant 0.000000e+00 : f32
    %22 = vector.broadcast %cst_17 : f32 to vector<256x128xf32>
    %23 = arith.maximumf %21, %22 : vector<256x128xf32>
    %24 = arith.truncf %23 : vector<256x128xf32> to vector<256x128xbf16>
    %c0_18 = arith.constant 0 : index
    %c0_19 = arith.constant 0 : index
    %25 = vector.load %arg8[%c0_18, %c0_19] : memref<256x128xbf16, #tpu.memory_space<vmem>>, vector<256x128xbf16>
    tpu.vector_store %arg8[%c0_18, %c0_19], %24 {strides = array<i32>} : memref<256x128xbf16, #tpu.memory_space<vmem>>, vector<256x128xbf16>,
    return
  }
  func.func @transform_0(%arg0: i32) -> (i32, i32) {
    %c0_i32 = arith.constant 0 : i32
    %c0_i32_0 = arith.constant 0 : i32
    return %arg0, %c0_i32 : i32, i32
  }
  func.func @transform_1(%arg0: i32) -> (i32, i32) {
    %c0_i32 = arith.constant 0 : i32
    %c0_i32_0 = arith.constant 0 : i32
    %c0_i32_1 = arith.constant 0 : i32
    return %c0_i32, %c0_i32_0 : i32, i32
  }
  func.func @transform_2(%arg0: i32) -> (i32, i32) {
    %c0_i32 = arith.constant 0 : i32
    %c0_i32_0 = arith.constant 0 : i32
    %c0_i32_1 = arith.constant 0 : i32
    return %c0_i32, %c0_i32_0 : i32, i32
  }
  func.func @transform_3(%arg0: i32) -> (i32, i32) {
    %c0_i32 = arith.constant 0 : i32
    %c0_i32_0 = arith.constant 0 : i32
    %c0_i32_1 = arith.constant 0 : i32
    return %c0_i32, %c0_i32_0 : i32, i32
  }
  func.func @transform_4(%arg0: i32) -> (i32, i32) {
    %c0_i32 = arith.constant 0 : i32
    %c0_i32_0 = arith.constant 0 : i32
    %c0_i32_1 = arith.constant 0 : i32
    return %c0_i32, %c0_i32_0 : i32, i32
  }
  func.func @transform_5(%arg0: i32) -> (i32, i32) {
    %c0_i32 = arith.constant 0 : i32
    %c0_i32_0 = arith.constant 0 : i32
    %c0_i32_1 = arith.constant 0 : i32
    return %c0_i32, %c0_i32_0 : i32, i32
  }
  func.func @transform_6(%arg0: i32) -> (i32, i32) {
    %c0_i32 = arith.constant 0 : i32
    %c0_i32_0 = arith.constant 0 : i32
    %c0_i32_1 = arith.constant 0 : i32
    return %c0_i32, %c0_i32_0 : i32, i32
  }
  func.func @transform_7(%arg0: i32) -> (i32, i32) {
    %c0_i32 = arith.constant 0 : i32
    %c0_i32_0 = arith.constant 0 : i32
    return %arg0, %c0_i32 : i32, i32
  }
}

module attributes {stable_mosaic.version = 11 : i64} {
  func.func @_max3_kernel(%arg0: i32, %arg1: memref<3x224x128xbf16, #tpu.memory_space<vmem>>, %arg2: memref<224x128xbf16, #tpu.memory_space<vmem>>) attributes {dimension_semantics = [#tpu.dimension_semantics<parallel>], iteration_bounds = array<i64: 1>, scalar_prefetch = 0 : i64, scratch_operands = 0 : i64, tpu.core_type = #tpu.core_type<tc>, window_params = [{transform_indices = @transform_0, window_bounds = array<i64: 3, 224, 128>}, {transform_indices = @transform_1, window_bounds = array<i64: 224, 128>}]} {
    %c0 = arith.constant 0 : index
    %c0_0 = arith.constant 0 : index
    %c0_1 = arith.constant 0 : index
    %0 = vector.load %arg1[%c0, %c0_0, %c0_1] : memref<3x224x128xbf16, #tpu.memory_space<vmem>>, vector<3x224x128xbf16>
    %cst = arith.constant dense<0xFF80> : vector<224x128xbf16>
    %1 = vector.multi_reduction <maximumf>, %0, %cst [0] : vector<3x224x128xbf16> to vector<224x128xbf16>
    %c0_2 = arith.constant 0 : index
    %c0_3 = arith.constant 0 : index
    %2 = vector.load %arg2[%c0_2, %c0_3] : memref<224x128xbf16, #tpu.memory_space<vmem>>, vector<224x128xbf16>
    tpu.vector_store %arg2[%c0_2, %c0_3], %1 {strides = array<i32>} : memref<224x128xbf16, #tpu.memory_space<vmem>>, vector<224x128xbf16>,
    return
  }
  func.func @transform_0(%arg0: i32) -> (i32, i32, i32) {
    %c0_i32 = arith.constant 0 : i32
    %c0_i32_0 = arith.constant 0 : i32
    %c0_i32_1 = arith.constant 0 : i32
    return %c0_i32, %arg0, %c0_i32_0 : i32, i32, i32
  }
  func.func @transform_1(%arg0: i32) -> (i32, i32) {
    %c0_i32 = arith.constant 0 : i32
    %c0_i32_0 = arith.constant 0 : i32
    return %arg0, %c0_i32 : i32, i32
  }
}

module attributes {stable_mosaic.version = 11 : i64} {
  func.func @_max3_kernel(%arg0: i32, %arg1: memref<3x104x128xbf16, #tpu.memory_space<vmem>>, %arg2: memref<104x128xbf16, #tpu.memory_space<vmem>>) attributes {dimension_semantics = [#tpu.dimension_semantics<parallel>], iteration_bounds = array<i64: 1>, scalar_prefetch = 0 : i64, scratch_operands = 0 : i64, tpu.core_type = #tpu.core_type<tc>, window_params = [{transform_indices = @transform_0, window_bounds = array<i64: 3, 104, 128>}, {transform_indices = @transform_1, window_bounds = array<i64: 104, 128>}]} {
    %c0 = arith.constant 0 : index
    %c0_0 = arith.constant 0 : index
    %c0_1 = arith.constant 0 : index
    %0 = vector.load %arg1[%c0, %c0_0, %c0_1] : memref<3x104x128xbf16, #tpu.memory_space<vmem>>, vector<3x104x128xbf16>
    %cst = arith.constant dense<0xFF80> : vector<104x128xbf16>
    %1 = vector.multi_reduction <maximumf>, %0, %cst [0] : vector<3x104x128xbf16> to vector<104x128xbf16>
    %c0_2 = arith.constant 0 : index
    %c0_3 = arith.constant 0 : index
    %2 = vector.load %arg2[%c0_2, %c0_3] : memref<104x128xbf16, #tpu.memory_space<vmem>>, vector<104x128xbf16>
    tpu.vector_store %arg2[%c0_2, %c0_3], %1 {strides = array<i32>} : memref<104x128xbf16, #tpu.memory_space<vmem>>, vector<104x128xbf16>,
    return
  }
  func.func @transform_0(%arg0: i32) -> (i32, i32, i32) {
    %c0_i32 = arith.constant 0 : i32
    %c0_i32_0 = arith.constant 0 : i32
    %c0_i32_1 = arith.constant 0 : i32
    return %c0_i32, %arg0, %c0_i32_0 : i32, i32, i32
  }
  func.func @transform_1(%arg0: i32) -> (i32, i32) {
    %c0_i32 = arith.constant 0 : i32
    %c0_i32_0 = arith.constant 0 : i32
    return %arg0, %c0_i32 : i32, i32
  }
}

module attributes {stable_mosaic.version = 11 : i64} {
  func.func @_final_block_gap_kernel(%arg0: i32, %arg1: memref<1x49x1152xbf16, #tpu.memory_space<vmem>>, %arg2: memref<1152x128xbf16, #tpu.memory_space<vmem>>, %arg3: memref<1x128xf32, #tpu.memory_space<vmem>>, %arg4: memref<128x128xbf16, #tpu.memory_space<vmem>>, %arg5: memref<1x128xf32, #tpu.memory_space<vmem>>, %arg6: memref<128x128xbf16, #tpu.memory_space<vmem>>, %arg7: memref<1x128xf32, #tpu.memory_space<vmem>>, %arg8: memref<1x8x128xf32, #tpu.memory_space<vmem>>) attributes {dimension_semantics = [#tpu.dimension_semantics<parallel>], iteration_bounds = array<i64: 2>, scalar_prefetch = 0 : i64, scratch_operands = 0 : i64, tpu.core_type = #tpu.core_type<tc>, window_params = [{transform_indices = @transform_0, window_bounds = array<i64: 1, 49, 1152>}, {pipeline_mode = #tpu.pipeline_mode<synchronous>, transform_indices = @transform_1, window_bounds = array<i64: 1152, 128>}, {pipeline_mode = #tpu.pipeline_mode<synchronous>, transform_indices = @transform_2, window_bounds = array<i64: 1, 128>}, {pipeline_mode = #tpu.pipeline_mode<synchronous>, transform_indices = @transform_3, window_bounds = array<i64: 128, 128>}, {pipeline_mode = #tpu.pipeline_mode<synchronous>, transform_indices = @transform_4, window_bounds = array<i64: 1, 128>}, {pipeline_mode = #tpu.pipeline_mode<synchronous>, transform_indices = @transform_5, window_bounds = array<i64: 128, 128>}, {pipeline_mode = #tpu.pipeline_mode<synchronous>, transform_indices = @transform_6, window_bounds = array<i64: 1, 128>}, {transform_indices = @transform_7, window_bounds = array<i64: 1, 8, 128>}]} {
    %c0 = arith.constant 0 : index
    %c0_0 = arith.constant 0 : index
    %c0_1 = arith.constant 0 : index
    %0 = vector.load %arg1[%c0, %c0_0, %c0_1] : memref<1x49x1152xbf16, #tpu.memory_space<vmem>>, vector<1x49x1152xbf16>
    %1 = vector.shape_cast %0 : vector<1x49x1152xbf16> to vector<49x1152xbf16>
    %c0_2 = arith.constant 0 : index
    %c0_3 = arith.constant 0 : index
    %2 = vector.load %arg2[%c0_2, %c0_3] : memref<1152x128xbf16, #tpu.memory_space<vmem>>, vector<1152x128xbf16>
    %cst = arith.constant dense<0.000000e+00> : vector<49x128xf32>
    %3 = tpu.matmul %1, %2, %cst {dimension_numbers = #tpu.dot_dimension_numbers<[1], [0], [0], [1], [0, 0, 1, 1], [], []>} : vector<49x1152xbf16>, vector<1152x128xbf16>, vector<49x128xf32> -> vector<49x128xf32>
    %c0_4 = arith.constant 0 : index
    %c0_5 = arith.constant 0 : index
    %4 = vector.load %arg3[%c0_4, %c0_5] : memref<1x128xf32, #tpu.memory_space<vmem>>, vector<1x128xf32>
    %5 = vector.broadcast %4 : vector<1x128xf32> to vector<49x128xf32>
    %6 = arith.addf %3, %5 : vector<49x128xf32>
    %cst_6 = arith.constant 0.000000e+00 : f32
    %7 = vector.broadcast %cst_6 : f32 to vector<49x128xf32>
    %8 = arith.maximumf %6, %7 : vector<49x128xf32>
    %9 = arith.truncf %8 : vector<49x128xf32> to vector<49x128xbf16>
    %c0_7 = arith.constant 0 : index
    %c0_8 = arith.constant 0 : index
    %10 = vector.load %arg4[%c0_7, %c0_8] : memref<128x128xbf16, #tpu.memory_space<vmem>>, vector<128x128xbf16>
    %cst_9 = arith.constant dense<0.000000e+00> : vector<49x128xf32>
    %11 = tpu.matmul %9, %10, %cst_9 {dimension_numbers = #tpu.dot_dimension_numbers<[1], [0], [0], [1], [0, 0, 1, 1], [], []>} : vector<49x128xbf16>, vector<128x128xbf16>, vector<49x128xf32> -> vector<49x128xf32>
    %c0_10 = arith.constant 0 : index
    %c0_11 = arith.constant 0 : index
    %12 = vector.load %arg5[%c0_10, %c0_11] : memref<1x128xf32, #tpu.memory_space<vmem>>, vector<1x128xf32>
    %13 = vector.broadcast %12 : vector<1x128xf32> to vector<49x128xf32>
    %14 = arith.addf %11, %13 : vector<49x128xf32>
    %cst_12 = arith.constant 0.000000e+00 : f32
    %15 = vector.broadcast %cst_12 : f32 to vector<49x128xf32>
    %16 = arith.maximumf %14, %15 : vector<49x128xf32>
    %17 = arith.truncf %16 : vector<49x128xf32> to vector<49x128xbf16>
    %c0_13 = arith.constant 0 : index
    %c0_14 = arith.constant 0 : index
    %18 = vector.load %arg6[%c0_13, %c0_14] : memref<128x128xbf16, #tpu.memory_space<vmem>>, vector<128x128xbf16>
    %cst_15 = arith.constant dense<0.000000e+00> : vector<49x128xf32>
    %19 = tpu.matmul %17, %18, %cst_15 {dimension_numbers = #tpu.dot_dimension_numbers<[1], [0], [0], [1], [0, 0, 1, 1], [], []>} : vector<49x128xbf16>, vector<128x128xbf16>, vector<49x128xf32> -> vector<49x128xf32>
    %c0_16 = arith.constant 0 : index
    %c0_17 = arith.constant 0 : index
    %20 = vector.load %arg7[%c0_16, %c0_17] : memref<1x128xf32, #tpu.memory_space<vmem>>, vector<1x128xf32>
    %21 = vector.broadcast %20 : vector<1x128xf32> to vector<49x128xf32>
    %22 = arith.addf %19, %21 : vector<49x128xf32>
    %cst_18 = arith.constant 0.000000e+00 : f32
    %23 = vector.broadcast %cst_18 : f32 to vector<49x128xf32>
    %24 = arith.maximumf %22, %23 : vector<49x128xf32>
    %cst_19 = arith.constant dense<0.000000e+00> : vector<128xf32>
    %25 = vector.multi_reduction <add>, %24, %cst_19 [0] : vector<49x128xf32> to vector<128xf32>
    %26 = vector.shape_cast %25 : vector<128xf32> to vector<1x128xf32>
    %cst_20 = arith.constant 4.900000e+01 : f32
    %27 = vector.broadcast %cst_20 : f32 to vector<1x128xf32>
    %28 = arith.divf %26, %27 : vector<1x128xf32>
    %29 = vector.shape_cast %28 : vector<1x128xf32> to vector<1x1x128xf32>
    %30 = vector.shape_cast %29 : vector<1x1x128xf32> to vector<1x1x128xf32>
    %31 = vector.broadcast %30 : vector<1x1x128xf32> to vector<1x8x128xf32>
    %c0_21 = arith.constant 0 : index
    %c0_22 = arith.constant 0 : index
    %c0_23 = arith.constant 0 : index
    %32 = vector.load %arg8[%c0_21, %c0_22, %c0_23] : memref<1x8x128xf32, #tpu.memory_space<vmem>>, vector<1x8x128xf32>
    tpu.vector_store %arg8[%c0_21, %c0_22, %c0_23], %31 {strides = array<i32>} : memref<1x8x128xf32, #tpu.memory_space<vmem>>, vector<1x8x128xf32>,
    return
  }
  func.func @transform_0(%arg0: i32) -> (i32, i32, i32) {
    %c0_i32 = arith.constant 0 : i32
    %c0_i32_0 = arith.constant 0 : i32
    %c0_i32_1 = arith.constant 0 : i32
    return %arg0, %c0_i32, %c0_i32_0 : i32, i32, i32
  }
  func.func @transform_1(%arg0: i32) -> (i32, i32) {
    %c0_i32 = arith.constant 0 : i32
    %c0_i32_0 = arith.constant 0 : i32
    %c0_i32_1 = arith.constant 0 : i32
    return %c0_i32, %c0_i32_0 : i32, i32
  }
  func.func @transform_2(%arg0: i32) -> (i32, i32) {
    %c0_i32 = arith.constant 0 : i32
    %c0_i32_0 = arith.constant 0 : i32
    %c0_i32_1 = arith.constant 0 : i32
    return %c0_i32, %c0_i32_0 : i32, i32
  }
  func.func @transform_3(%arg0: i32) -> (i32, i32) {
    %c0_i32 = arith.constant 0 : i32
    %c0_i32_0 = arith.constant 0 : i32
    %c0_i32_1 = arith.constant 0 : i32
    return %c0_i32, %c0_i32_0 : i32, i32
  }
  func.func @transform_4(%arg0: i32) -> (i32, i32) {
    %c0_i32 = arith.constant 0 : i32
    %c0_i32_0 = arith.constant 0 : i32
    %c0_i32_1 = arith.constant 0 : i32
    return %c0_i32, %c0_i32_0 : i32, i32
  }
  func.func @transform_5(%arg0: i32) -> (i32, i32) {
    %c0_i32 = arith.constant 0 : i32
    %c0_i32_0 = arith.constant 0 : i32
    %c0_i32_1 = arith.constant 0 : i32
    return %c0_i32, %c0_i32_0 : i32, i32
  }
  func.func @transform_6(%arg0: i32) -> (i32, i32) {
    %c0_i32 = arith.constant 0 : i32
    %c0_i32_0 = arith.constant 0 : i32
    %c0_i32_1 = arith.constant 0 : i32
    return %c0_i32, %c0_i32_0 : i32, i32
  }
  func.func @transform_7(%arg0: i32) -> (i32, i32, i32) {
    %c0_i32 = arith.constant 0 : i32
    %c0_i32_0 = arith.constant 0 : i32
    %c0_i32_1 = arith.constant 0 : i32
    return %arg0, %c0_i32, %c0_i32_0 : i32, i32, i32
  }
}

</mosaic_0001>

<llo_original>
// kernel: nin_forward.4
$region0: #{nin_forward.4}
  #allocation0 [shape = 'u32[]', space=smem, size = 0x4, offset = 0x4, fixed_abs, tag = 'smem constant byte address 0x4 - core index']
  #allocation1 [shape = 'u32[144,128]{1,0:T(1,128)}', space=vmem, size = 0x12000, scoped, tag = 'internal scratch']
  %s0 = inlined_call_operand.vmem [shape: bf16[512,128], index: 0, kind: input, shape index: {}]
  %s1 = inlined_call_operand.vmem [shape: bf16[128,128], index: 1, kind: input, shape index: {}]
  %s2 = inlined_call_operand.vmem [shape: f32[1,128], index: 2, kind: input, shape index: {}]
  %s3 = inlined_call_operand.vmem [shape: bf16[128,128], index: 3, kind: input, shape index: {}]
  %s4 = inlined_call_operand.vmem [shape: f32[1,128], index: 4, kind: input, shape index: {}]
  %s5 = inlined_call_operand.vmem [shape: bf16[128,128], index: 5, kind: input, shape index: {}]
  %s6 = inlined_call_operand.vmem [shape: f32[1,128], index: 6, kind: input, shape index: {}]
  %s7 = inlined_call_operand.vmem [shape: bf16[512,128], index: 7, kind: output, shape index: {}]
  %s8 = sld [smem:[#allocation0]]
  $region61: #{nin_forward.4} parent=0
    _
  %s10 = ssub.s32 1, %s8
  %s11 = scalar_select 0, %s10, %s8
  loop: start=0, step=1, limit=4
  $region2: #{nin_forward.4} parent=0 // loop_pre_header
    _
  $region3: #{nin_forward.4} parent=0 // loop_header
    %s13 = sphi 0, %s17
    %p14 = scmp.ge.s32.totalorder %s13, 4
    %s23 = sphi 0, %s25
    %s26 = sphi 0, %s23
    %s27 = sphi 0, %s26
    %s43 = sphi 0, %s27
    %s47 = sphi 0, %s47
    %s49 = sphi 0, %s47
    %s50 = sphi 0, %s49
    %s64 = sphi 0, %s50
    %s68 = sphi 0, %s68
    %s70 = sphi 0, %s68
    %s71 = sphi 0, %s70
    %s85 = sphi 0, %s71
    %s89 = sphi 0, %s89
    %s91 = sphi 0, %s89
    %s92 = sphi 0, %s91
    %s106 = sphi 0, %s92
    %s110 = sphi 0, %s110
    %s112 = sphi 0, %s110
    %s113 = sphi 0, %s112
    %s127 = sphi 0, %s113
    %s131 = sphi 0, %s131
    %s133 = sphi 0, %s131
    %s134 = sphi 0, %s133
    %s148 = sphi 0, %s134
    %s152 = sphi 0, %s152
    %s154 = sphi 0, %s152
    %s155 = sphi 0, %s154
    %s169 = sphi 0, %s155
    %s175 = sphi 0, %s177
    %s178 = sphi 0, %s175
    %s179 = sphi 0, %s178
    %s195 = sphi 0, %s179
  $region4: #{nin_forward.4} parent=0 // loop_header_branch
    %16 = sbr.rel (%p14) target = $region8
  $region5: #{nin_forward.4} parent=0 // loop_body
    %s18 = ssub.s32 %s13, 1
    %s19 = ssub.s32 %s13, 2
    %s20 = sadd.s32 %s13, 1
    %s21 = ssub.s32 %s13, %s20
    %p22 = scmp.eq.s32.totalorder %s21, 0
    %s24 = sadd.s32 %s23, 1
    %s25 = scalar_select %p22, %s23, %s24
    %p28 = pneg %p22
    %p29 = scmp.eq.s32.totalorder %s13, 1
    %p30 = por %p28, %p29
    %p31 = scmp.ne.s32.totalorder %s23, %s26
    %p32 = scmp.eq.s32.totalorder %s13, 0
    %p33 = por %p31, %p32
    %p34 = scmp.ne.s32.totalorder %s23, %s26
    %p35 = scmp.eq.s32.totalorder %s18, 1
    %p36 = por %p34, %p35
    %p37 = scmp.ne.s32.totalorder %s26, %s27
    %p38 = scmp.eq.s32.totalorder %s18, 0
    %p39 = por %p37, %p38
    %p40 = scmp.ne.s32.totalorder %s26, %s27
    %p41 = scmp.eq.s32.totalorder %s19, 1
    %p42 = por %p40, %p41
    %p44 = scmp.ne.s32.totalorder %s27, %s43
    %p45 = scmp.eq.s32.totalorder %s19, 0
    %p46 = por %p44, %p45
    %s48 = sadd.s32 %s47, 1
    %p51 = scmp.eq.s32.totalorder %s13, 1
    %p52 = scmp.ne.s32.totalorder %s47, %s49
    %p53 = scmp.eq.s32.totalorder %s13, 0
    %p54 = por %p52, %p53
    %p55 = scmp.ne.s32.totalorder %s47, %s49
    %p56 = scmp.eq.s32.totalorder %s18, 1
    %p57 = por %p55, %p56
    %p58 = scmp.ne.s32.totalorder %s49, %s50
    %p59 = scmp.eq.s32.totalorder %s18, 0
    %p60 = por %p58, %p59
    %p61 = scmp.ne.s32.totalorder %s49, %s50
    %p62 = scmp.eq.s32.totalorder %s19, 1
    %p63 = por %p61, %p62
    %p65 = scmp.ne.s32.totalorder %s50, %s64
    %p66 = scmp.eq.s32.totalorder %s19, 0
    %p67 = por %p65, %p66
    %s69 = sadd.s32 %s68, 1
    %p72 = scmp.eq.s32.totalorder %s13, 1
    %p73 = scmp.ne.s32.totalorder %s68, %s70
    %p74 = scmp.eq.s32.totalorder %s13, 0
    %p75 = por %p73, %p74
    %p76 = scmp.ne.s32.totalorder %s68, %s70
    %p77 = scmp.eq.s32.totalorder %s18, 1
    %p78 = por %p76, %p77
    %p79 = scmp.ne.s32.totalorder %s70, %s71
    %p80 = scmp.eq.s32.totalorder %s18, 0
    %p81 = por %p79, %p80
    %p82 = scmp.ne.s32.totalorder %s70, %s71
    %p83 = scmp.eq.s32.totalorder %s19, 1
    %p84 = por %p82, %p83
    %p86 = scmp.ne.s32.totalorder %s71, %s85
    %p87 = scmp.eq.s32.totalorder %s19, 0
    %p88 = por %p86, %p87
    %s90 = sadd.s32 %s89, 1
    %p93 = scmp.eq.s32.totalorder %s13, 1
    %p94 = scmp.ne.s32.totalorder %s89, %s91
    %p95 = scmp.eq.s32.totalorder %s13, 0
    %p96 = por %p94, %p95
    %p97 = scmp.ne.s32.totalorder %s89, %s91
    %p98 = scmp.eq.s32.totalorder %s18, 1
    %p99 = por %p97, %p98
    %p100 = scmp.ne.s32.totalorder %s91, %s92
    %p101 = scmp.eq.s32.totalorder %s18, 0
    %p102 = por %p100, %p101
    %p103 = scmp.ne.s32.totalorder %s91, %s92
    %p104 = scmp.eq.s32.totalorder %s19, 1
    %p105 = por %p103, %p104
    %p107 = scmp.ne.s32.totalorder %s92, %s106
    %p108 = scmp.eq.s32.totalorder %s19, 0
    %p109 = por %p107, %p108
    %s111 = sadd.s32 %s110, 1
    %p114 = scmp.eq.s32.totalorder %s13, 1
    %p115 = scmp.ne.s32.totalorder %s110, %s112
    %p116 = scmp.eq.s32.totalorder %s13, 0
    %p117 = por %p115, %p116
    %p118 = scmp.ne.s32.totalorder %s110, %s112
    %p119 = scmp.eq.s32.totalorder %s18, 1
    %p120 = por %p118, %p119
    %p121 = scmp.ne.s32.totalorder %s112, %s113
    %p122 = scmp.eq.s32.totalorder %s18, 0
    %p123 = por %p121, %p122
    %p124 = scmp.ne.s32.totalorder %s112, %s113
    %p125 = scmp.eq.s32.totalorder %s19, 1
    %p126 = por %p124, %p125
    %p128 = scmp.ne.s32.totalorder %s113, %s127
    %p129 = scmp.eq.s32.totalorder %s19, 0
    %p130 = por %p128, %p129
    %s132 = sadd.s32 %s131, 1
    %p135 = scmp.eq.s32.totalorder %s13, 1
    %p136 = scmp.ne.s32.totalorder %s131, %s133
    %p137 = scmp.eq.s32.totalorder %s13, 0
    %p138 = por %p136, %p137
    %p139 = scmp.ne.s32.totalorder %s131, %s133
    %p140 = scmp.eq.s32.totalorder %s18, 1
    %p141 = por %p139, %p140
    %p142 = scmp.ne.s32.totalorder %s133, %s134
    %p143 = scmp.eq.s32.totalorder %s18, 0
    %p144 = por %p142, %p143
    %p145 = scmp.ne.s32.totalorder %s133, %s134
    %p146 = scmp.eq.s32.totalorder %s19, 1
    %p147 = por %p145, %p146
    %p149 = scmp.ne.s32.totalorder %s134, %s148
    %p150 = scmp.eq.s32.totalorder %s19, 0
    %p151 = por %p149, %p150
    %s153 = sadd.s32 %s152, 1
    %p156 = scmp.eq.s32.totalorder %s13, 1
    %p157 = scmp.ne.s32.totalorder %s152, %s154
    %p158 = scmp.eq.s32.totalorder %s13, 0
    %p159 = por %p157, %p158
    %p160 = scmp.ne.s32.totalorder %s152, %s154
    %p161 = scmp.eq.s32.totalorder %s18, 1
    %p162 = por %p160, %p161
    %p163 = scmp.ne.s32.totalorder %s154, %s155
    %p164 = scmp.eq.s32.totalorder %s18, 0
    %p165 = por %p163, %p164
    %p166 = scmp.ne.s32.totalorder %s154, %s155
    %p167 = scmp.eq.s32.totalorder %s19, 1
    %p168 = por %p166, %p167
    %p170 = scmp.ne.s32.totalorder %s155, %s169
    %p171 = scmp.eq.s32.totalorder %s19, 0
    %p172 = por %p170, %p171
    %s173 = ssub.s32 %s13, %s20
    %p174 = scmp.eq.s32.totalorder %s173, 0
    %s176 = sadd.s32 %s175, 1
    %s177 = scalar_select %p174, %s175, %s176
    %p180 = pneg %p174
    %p181 = scmp.eq.s32.totalorder %s13, 1
    %p182 = por %p180, %p181
    %p183 = scmp.ne.s32.totalorder %s175, %s178
    %p184 = scmp.eq.s32.totalorder %s13, 0
    %p185 = por %p183, %p184
    %p186 = scmp.ne.s32.totalorder %s175, %s178
    %p187 = scmp.eq.s32.totalorder %s18, 1
    %p188 = por %p186, %p187
    %p189 = scmp.ne.s32.totalorder %s178, %s179
    %p190 = scmp.eq.s32.totalorder %s18, 0
    %p191 = por %p189, %p190
    %p192 = scmp.ne.s32.totalorder %s178, %s179
    %p193 = scmp.eq.s32.totalorder %s19, 1
    %p194 = por %p192, %p193
    %p196 = scmp.ne.s32.totalorder %s179, %s195
    %p197 = scmp.eq.s32.totalorder %s19, 0
    %p198 = por %p196, %p197
    %p199 = scmp.le.s32.totalorder 1, %s13
    %p200 = scmp.lt.s32.totalorder %s13, 3
    %p201 = pnand %p199, %p200
    %p202 = pneg %p201
    // Predicated region
    $region9: #{nin_forward.4} parent=5 // pred_check
      _
    $region10: #{nin_forward.4} parent=5 // pred_check_branch
      %204 = sbr.rel (%p201) target = $region12
    $region11: #{nin_forward.4} parent=5 // pred_region
      %s205 = ssub.s32 %s13, 1
      // Predicated region
      $region13: #{nin_forward.4} parent=11 // pred_check
        %p206 = pneg %p60
      $region14: #{nin_forward.4} parent=11 // pred_check_branch
        %208 = sbr.rel (%p206) target = $region16
      $region15: #{nin_forward.4} parent=11 // pred_region
        _
      $region16: #{nin_forward.4} parent=11 // pred_fallthru
        _
      // Predicated region
      $region17: #{nin_forward.4} parent=11 // pred_check
        %p209 = pneg %p81
      $region18: #{nin_forward.4} parent=11 // pred_check_branch
        %211 = sbr.rel (%p209) target = $region20
      $region19: #{nin_forward.4} parent=11 // pred_region
        _
      $region20: #{nin_forward.4} parent=11 // pred_fallthru
        _
      // Predicated region
      $region21: #{nin_forward.4} parent=11 // pred_check
        %p212 = pneg %p102
      $region22: #{nin_forward.4} parent=11 // pred_check_branch
        %214 = sbr.rel (%p212) target = $region24
      $region23: #{nin_forward.4} parent=11 // pred_region
        _
      $region24: #{nin_forward.4} parent=11 // pred_fallthru
        _
      // Predicated region
      $region25: #{nin_forward.4} parent=11 // pred_check
        %p215 = pneg %p123
      $region26: #{nin_forward.4} parent=11 // pred_check_branch
        %217 = sbr.rel (%p215) target = $region28
      $region27: #{nin_forward.4} parent=11 // pred_region
        _
      $region28: #{nin_forward.4} parent=11 // pred_fallthru
        _
      // Predicated region
      $region29: #{nin_forward.4} parent=11 // pred_check
        %p218 = pneg %p144
      $region30: #{nin_forward.4} parent=11 // pred_check_branch
        %220 = sbr.rel (%p218) target = $region32
      $region31: #{nin_forward.4} parent=11 // pred_region
        _
      $region32: #{nin_forward.4} parent=11 // pred_fallthru
        _
      // Predicated region
      $region33: #{nin_forward.4} parent=11 // pred_check
        %p221 = pneg %p165
      $region34: #{nin_forward.4} parent=11 // pred_check_branch
        %223 = sbr.rel (%p221) target = $region36
      $region35: #{nin_forward.4} parent=11 // pred_region
        _
      $region36: #{nin_forward.4} parent=11 // pred_fallthru
        _
    $region12: #{nin_forward.4} parent=5 // pred_fallthru
      _
    %p224 = scmp.lt.s32.totalorder %s13, 2
    // Predicated region
    $region37: #{nin_forward.4} parent=5 // pred_check
      %p225 = pneg %p224
    $region38: #{nin_forward.4} parent=5 // pred_check_branch
      %227 = sbr.rel (%p225) target = $region40
    $region39: #{nin_forward.4} parent=5 // pred_region
      // Predicated region
      $region41: #{nin_forward.4} parent=39 // pred_check
        %p228 = pneg %p33
      $region42: #{nin_forward.4} parent=39 // pred_check_branch
        %230 = sbr.rel (%p228) target = $region44
      $region43: #{nin_forward.4} parent=39 // pred_region
        %s231 = smul.u32 32, %s13
        %p232 = scmp.lt.s32.totalorder %s231, 63
        %s233 = scalar_select %p232, %s231, 63
        %s234 = smul.addr %s233, 4
        %s235 = scalar_lea.vmem %s0, %s234
        %s236 = smul.u32 32, %s13
      $region44: #{nin_forward.4} parent=39 // pred_fallthru
        _
    $region40: #{nin_forward.4} parent=5 // pred_fallthru
      _
    %p237 = scmp.le.s32.totalorder 1, %s13
    %p238 = scmp.lt.s32.totalorder %s13, 3
    %p239 = pnand %p237, %p238
    %p240 = pneg %p239
    // Predicated region
    $region45: #{nin_forward.4} parent=5 // pred_check
      _
    $region46: #{nin_forward.4} parent=5 // pred_check_branch
      %242 = sbr.rel (%p239) target = $region48
    $region47: #{nin_forward.4} parent=5 // pred_region
      %s243 = ssub.s32 %s13, 1
      %s244 = smul.u32 32, %s18
      %p245 = scmp.lt.s32.totalorder %s244, 63
      %s246 = scalar_select %p245, %s244, 63
      %s247 = smul.addr %s246, 4
      %s248 = scalar_lea.vmem %s0, %s247
      %p249 = pneg %p39
      %p250 = pneg %p36
      %p251 = pneg %p60
      %p252 = pneg %p57
      %p253 = pneg %p81
      %p254 = pneg %p78
      %p255 = pneg %p102
      %p256 = pneg %p99
      %p257 = pneg %p123
      %p258 = pneg %p120
      %p259 = pneg %p144
      %p260 = pneg %p141
      %p261 = pneg %p165
      %p262 = pneg %p162
      %p263 = pneg %p191
      %p264 = pneg %p188
      %s265 = smul.u32 32, %s18
      %p266 = scmp.lt.s32.totalorder %s265, 63
      %s267 = scalar_select %p266, %s265, 63
      %s268 = smul.addr %s267, 4
      %s269 = scalar_lea.vmem %s7, %s268
      %s270 = smul.u32 32, %s18
      %p271 = scmp.lt.s32.totalorder %s270, 63
      %s272 = scalar_select %p271, %s270, 63
      %s273 = smul.addr %s272, 4
      %s274 = scalar_lea.vmem %s0, %s273
      %s275 = smul.u32 32, %s18
      %s276 = smul.u32 32, %s18
      %p277 = scmp.lt.s32.totalorder %s276, 63
      %s278 = scalar_select %p277, %s276, 63
      %s279 = smul.addr %s278, 4
      %s280 = scalar_lea.vmem %s7, %s279
      %s281 = smul.u32 32, %s18
      %v283 = vld [vmem:[%s274] sm:$0xf]
      %v284 = vld [vmem:[%s274 + $0x4] sm:$0xf]
      %v285 = vld [vmem:[%s274 + $0x8] sm:$0xf]
      %v286 = vld [vmem:[%s274 + $0xc] sm:$0xf]
      %v287 = vld [vmem:[%s274 + $0x10] sm:$0xf]
      %v288 = vld [vmem:[%s274 + $0x14] sm:$0xf]
      %v289 = vld [vmem:[%s274 + $0x18] sm:$0xf]
      %v290 = vld [vmem:[%s274 + $0x1c] sm:$0xf]
      %v291 = vld [vmem:[%s274 + $0x20] sm:$0xf]
      %v292 = vld [vmem:[%s274 + $0x24] sm:$0xf]
      %v293 = vld [vmem:[%s274 + $0x28] sm:$0xf]
      %v294 = vld [vmem:[%s274 + $0x2c] sm:$0xf]
      %v295 = vld [vmem:[%s274 + $0x30] sm:$0xf]
      %v296 = vld [vmem:[%s274 + $0x34] sm:$0xf]
      %v297 = vld [vmem:[%s274 + $0x38] sm:$0xf]
      %v298 = vld [vmem:[%s274 + $0x3c] sm:$0xf]
      %v299 = vld [vmem:[%s274 + $0x40] sm:$0xf]
      %v300 = vld [vmem:[%s274 + $0x44] sm:$0xf]
      %v301 = vld [vmem:[%s274 + $0x48] sm:$0xf]
      %v302 = vld [vmem:[%s274 + $0x4c] sm:$0xf]
      %v303 = vld [vmem:[%s274 + $0x50] sm:$0xf]
      %v304 = vld [vmem:[%s274 + $0x54] sm:$0xf]
      %v305 = vld [vmem:[%s274 + $0x58] sm:$0xf]
      %v306 = vld [vmem:[%s274 + $0x5c] sm:$0xf]
      %v307 = vld [vmem:[%s274 + $0x60] sm:$0xf]
      %v308 = vld [vmem:[%s274 + $0x64] sm:$0xf]
      %v309 = vld [vmem:[%s274 + $0x68] sm:$0xf]
      %v310 = vld [vmem:[%s274 + $0x6c] sm:$0xf]
      %v311 = vld [vmem:[%s274 + $0x70] sm:$0xf]
      %v312 = vld [vmem:[%s274 + $0x74] sm:$0xf]
      %v313 = vld [vmem:[%s274 + $0x78] sm:$0xf]
      %v314 = vld [vmem:[%s274 + $0x7c] sm:$0xf]
      %v315 = vld [vmem:[%s1] sm:$0xf]
      %v316 = vld [vmem:[%s1 + $0x4] sm:$0xf]
      %v317 = vld [vmem:[%s1 + $0x8] sm:$0xf]
      %v318 = vld [vmem:[%s1 + $0xc] sm:$0xf]
      %v319 = vld [vmem:[%s1 + $0x10] sm:$0xf]
      %v320 = vld [vmem:[%s1 + $0x14] sm:$0xf]
      %v321 = vld [vmem:[%s1 + $0x18] sm:$0xf]
      %v322 = vld [vmem:[%s1 + $0x1c] sm:$0xf]
      %v323 = vld [vmem:[%s1 + $0x20] sm:$0xf]
      %v324 = vld [vmem:[%s1 + $0x24] sm:$0xf]
      %v325 = vld [vmem:[%s1 + $0x28] sm:$0xf]
      %v326 = vld [vmem:[%s1 + $0x2c] sm:$0xf]
      %v327 = vld [vmem:[%s1 + $0x30] sm:$0xf]
      %v328 = vld [vmem:[%s1 + $0x34] sm:$0xf]
      %v329 = vld [vmem:[%s1 + $0x38] sm:$0xf]
      %v330 = vld [vmem:[%s1 + $0x3c] sm:$0xf]
      %v331 = vld [vmem:[%s2] sm:$0x1]
      %v333 = vlaneseq
      %v334 = vshrl.u32 %v333, 7
      %v335 = vsub.s32 0, %v334
      %v336 = vrot.slane %v331, %v335
      %v370 = vunpack.c.l.b16 %v283
      %v371 = vunpack.c.l.b16 %v284
      %v372 = vunpack.c.l.b16 %v285
      %v373 = vunpack.c.l.b16 %v286
      %v374 = vunpack.c.l.b16 %v287
      %v375 = vunpack.c.l.b16 %v288
      %v376 = vunpack.c.l.b16 %v289
      %v377 = vunpack.c.l.b16 %v290
      %v378 = vunpack.c.l.b16 %v291
      %v379 = vunpack.c.l.b16 %v292
      %v380 = vunpack.c.l.b16 %v293
      %v381 = vunpack.c.l.b16 %v294
      %v382 = vunpack.c.l.b16 %v295
      %v383 = vunpack.c.l.b16 %v296
      %v384 = vunpack.c.l.b16 %v297
      %v385 = vunpack.c.l.b16 %v298
      %v386 = vunpack.c.l.b16 %v299
      %v387 = vunpack.c.l.b16 %v300
      %v388 = vunpack.c.l.b16 %v301
      %v389 = vunpack.c.l.b16 %v302
      %v390 = vunpack.c.l.b16 %v303
      %v391 = vunpack.c.l.b16 %v304
      %v392 = vunpack.c.l.b16 %v305
      %v393 = vunpack.c.l.b16 %v306
      %v394 = vunpack.c.l.b16 %v307
      %v395 = vunpack.c.l.b16 %v308
      %v396 = vunpack.c.l.b16 %v309
      %v397 = vunpack.c.l.b16 %v310
      %v398 = vunpack.c.l.b16 %v311
      %v399 = vunpack.c.l.b16 %v312
      %v400 = vunpack.c.l.b16 %v313
      %v401 = vunpack.c.l.b16 %v314
      %v402 = vpack.c.b16 %v371, %v370
      %v403 = vpack.c.b16 %v373, %v372
      %v404 = vpack.c.b16 %v375, %v374
      %v405 = vpack.c.b16 %v377, %v376
      %v406 = vpack.c.b16 %v379, %v378
      %v407 = vpack.c.b16 %v381, %v380
      %v408 = vpack.c.b16 %v383, %v382
      %v409 = vpack.c.b16 %v385, %v384
      %v410 = vpack.c.b16 %v387, %v386
      %v411 = vpack.c.b16 %v389, %v388
      %v412 = vpack.c.b16 %v391, %v390
      %v413 = vpack.c.b16 %v393, %v392
      %v414 = vpack.c.b16 %v395, %v394
      %v415 = vpack.c.b16 %v397, %v396
      %v416 = vpack.c.b16 %v399, %v398
      %v417 = vpack.c.b16 %v401, %v400
      %v450 = vunpack.c.l.b16 %v315
      %v451 = vunpack.c.l.b16 %v316
      %v452 = vunpack.c.l.b16 %v317
      %v453 = vunpack.c.l.b16 %v318
      %v454 = vunpack.c.l.b16 %v319
      %v455 = vunpack.c.l.b16 %v320
      %v456 = vunpack.c.l.b16 %v321
      %v457 = vunpack.c.l.b16 %v322
      %v458 = vunpack.c.l.b16 %v323
      %v459 = vunpack.c.l.b16 %v324
      %v460 = vunpack.c.l.b16 %v325
      %v461 = vunpack.c.l.b16 %v326
      %v462 = vunpack.c.l.b16 %v327
      %v463 = vunpack.c.l.b16 %v328
      %v464 = vunpack.c.l.b16 %v329
      %v465 = vunpack.c.l.b16 %v330
      %v466 = vpack.c.b16 %v451, %v450
      %v467 = vpack.c.b16 %v453, %v452
      %v468 = vpack.c.b16 %v455, %v454
      %v469 = vpack.c.b16 %v457, %v456
      %v470 = vpack.c.b16 %v459, %v458
      %v471 = vpack.c.b16 %v461, %v460
      %v472 = vpack.c.b16 %v463, %v462
      %v473 = vpack.c.b16 %v465, %v464
      %482 = vmatprep.subr.bf16.mxu0 0
      %483 = vmatpush1.bf16.msra.mxu0 %v466
      %484 = vmatprep.subr.bf16.mxu0 0
      %485 = vmatpush1.bf16.msra.mxu0 %v467
      %486 = vmatprep.subr.bf16.mxu0 0
      %487 = vmatpush1.bf16.msra.mxu0 %v468
      %488 = vmatprep.subr.bf16.mxu0 0
      %489 = vmatpush1.bf16.msra.mxu0 %v469
      %490 = vmatprep.subr.bf16.mxu0 0
      %491 = vmatpush1.bf16.msra.mxu0 %v470
      %492 = vmatprep.subr.bf16.mxu0 0
      %493 = vmatpush1.bf16.msra.mxu0 %v471
      %494 = vmatprep.subr.bf16.mxu0 0
      %495 = vmatpush1.bf16.msra.mxu0 %v472
      %496 = vmatprep.subr.bf16.mxu0 0
      %497 = vmatpush1.bf16.msra.mxu0 %v473
      %498 = vmatprep.subr.bf16.mxu0 0
      %499 = vmatpush1.bf16.msra.mxu0 0
      %500 = vmatprep.subr.bf16.mxu0 0
      %501 = vmatpush1.bf16.msra.mxu0 0
      %502 = vmatprep.subr.bf16.mxu0 0
      %503 = vmatpush1.bf16.msra.mxu0 0
      %504 = vmatprep.subr.bf16.mxu0 0
      %505 = vmatpush1.bf16.msra.mxu0 0
      %506 = vmatprep.subr.bf16.mxu0 0
      %507 = vmatpush1.bf16.msra.mxu0 0
      %508 = vmatprep.subr.bf16.mxu0 0
      %509 = vmatpush1.bf16.msra.mxu0 0
      %510 = vmatprep.subr.bf16.mxu0 0
      %511 = vmatpush1.bf16.msra.mxu0 0
      %512 = vmatprep.subr.bf16.mxu0 0
      %513 = vmatpush1.bf16.msra.mxu0 0
      %514 = vmatprep.mubr.bf16.mxu0 0
      %515 = vmatmul.mubr.bf16.gmra.mrb[0].mxu0 %v402
      %v516 = vpop.f32.mrb[0].mxu0
      %v517 = vadd.f32 %v336, %v516
      %v518 = vpop.f32.mrb[0].mxu0
      %v519 = vpop.f32.mrb[0].mxu0
      %v520 = vadd.f32 %v336, %v519
      %v521 = vpop.f32.mrb[0].mxu0
      %522 = vmatprep.mubr.bf16.mxu0 0
      %523 = vmatmul.mubr.bf16.gmra.mrb[0].mxu0 %v403
      %v524 = vpop.f32.mrb[0].mxu0
      %v525 = vadd.f32 %v336, %v524
      %v526 = vpop.f32.mrb[0].mxu0
      %v527 = vpop.f32.mrb[0].mxu0
      %v528 = vadd.f32 %v336, %v527
      %v529 = vpop.f32.mrb[0].mxu0
      %530 = vmatprep.mubr.bf16.mxu0 0
      %531 = vmatmul.mubr.bf16.gmra.mrb[0].mxu0 %v404
      %v532 = vpop.f32.mrb[0].mxu0
      %v533 = vadd.f32 %v336, %v532
      %v534 = vpop.f32.mrb[0].mxu0
      %v535 = vpop.f32.mrb[0].mxu0
      %v536 = vadd.f32 %v336, %v535
      %v537 = vpop.f32.mrb[0].mxu0
      %538 = vmatprep.mubr.bf16.mxu0 0
      %539 = vmatmul.mubr.bf16.gmra.mrb[0].mxu0 %v405
      %v540 = vpop.f32.mrb[0].mxu0
      %v541 = vadd.f32 %v336, %v540
      %v542 = vpop.f32.mrb[0].mxu0
      %v543 = vpop.f32.mrb[0].mxu0
      %v544 = vadd.f32 %v336, %v543
      %v545 = vpop.f32.mrb[0].mxu0
      %546 = vmatprep.mubr.bf16.mxu0 0
      %547 = vmatmul.mubr.bf16.gmra.mrb[0].mxu0 %v406
      %v548 = vpop.f32.mrb[0].mxu0
      %v549 = vadd.f32 %v336, %v548
      %v550 = vpop.f32.mrb[0].mxu0
      %v551 = vpop.f32.mrb[0].mxu0
      %v552 = vadd.f32 %v336, %v551
      %v553 = vpop.f32.mrb[0].mxu0
      %554 = vmatprep.mubr.bf16.mxu0 0
      %555 = vmatmul.mubr.bf16.gmra.mrb[0].mxu0 %v407
      %v556 = vpop.f32.mrb[0].mxu0
      %v557 = vadd.f32 %v336, %v556
      %v558 = vpop.f32.mrb[0].mxu0
      %v559 = vpop.f32.mrb[0].mxu0
      %v560 = vadd.f32 %v336, %v559
      %v561 = vpop.f32.mrb[0].mxu0
      %562 = vmatprep.mubr.bf16.mxu0 0
      %563 = vmatmul.mubr.bf16.gmra.mrb[0].mxu0 %v408
      %v564 = vpop.f32.mrb[0].mxu0
      %v565 = vadd.f32 %v336, %v564
      %v566 = vpop.f32.mrb[0].mxu0
      %v567 = vpop.f32.mrb[0].mxu0
      %v568 = vadd.f32 %v336, %v567
      %v569 = vpop.f32.mrb[0].mxu0
      %570 = vmatprep.mubr.bf16.mxu0 0
      %571 = vmatmul.mubr.bf16.gmra.mrb[0].mxu0 %v409
      %v572 = vpop.f32.mrb[0].mxu0
      %v573 = vadd.f32 %v336, %v572
      %v574 = vpop.f32.mrb[0].mxu0
      %v575 = vpop.f32.mrb[0].mxu0
      %v576 = vadd.f32 %v336, %v575
      %v577 = vpop.f32.mrb[0].mxu0
      %578 = vmatprep.mubr.bf16.mxu0 0
      %579 = vmatmul.mubr.bf16.gmra.mrb[0].mxu0 %v410
      %v580 = vpop.f32.mrb[0].mxu0
      %v581 = vadd.f32 %v336, %v580
      %v582 = vpop.f32.mrb[0].mxu0
      %v583 = vpop.f32.mrb[0].mxu0
      %v584 = vadd.f32 %v336, %v583
      %v585 = vpop.f32.mrb[0].mxu0
      %586 = vmatprep.mubr.bf16.mxu0 0
      %587 = vmatmul.mubr.bf16.gmra.mrb[0].mxu0 %v411
      %v588 = vpop.f32.mrb[0].mxu0
      %v589 = vadd.f32 %v336, %v588
      %v590 = vpop.f32.mrb[0].mxu0
      %v591 = vpop.f32.mrb[0].mxu0
      %v592 = vadd.f32 %v336, %v591
      %v593 = vpop.f32.mrb[0].mxu0
      %594 = vmatprep.mubr.bf16.mxu0 0
      %595 = vmatmul.mubr.bf16.gmra.mrb[0].mxu0 %v412
      %v596 = vpop.f32.mrb[0].mxu0
      %v597 = vadd.f32 %v336, %v596
      %v598 = vpop.f32.mrb[0].mxu0
      %v599 = vpop.f32.mrb[0].mxu0
      %v600 = vadd.f32 %v336, %v599
      %v601 = vpop.f32.mrb[0].mxu0
      %602 = vmatprep.mubr.bf16.mxu0 0
      %603 = vmatmul.mubr.bf16.gmra.mrb[0].mxu0 %v413
      %v604 = vpop.f32.mrb[0].mxu0
      %v605 = vadd.f32 %v336, %v604
      %v606 = vpop.f32.mrb[0].mxu0
      %v607 = vpop.f32.mrb[0].mxu0
      %v608 = vadd.f32 %v336, %v607
      %v609 = vpop.f32.mrb[0].mxu0
      %610 = vmatprep.mubr.bf16.mxu0 0
      %611 = vmatmul.mubr.bf16.gmra.mrb[0].mxu0 %v414
      %v612 = vpop.f32.mrb[0].mxu0
      %v613 = vadd.f32 %v336, %v612
      %v614 = vpop.f32.mrb[0].mxu0
      %v615 = vpop.f32.mrb[0].mxu0
      %v616 = vadd.f32 %v336, %v615
      %v617 = vpop.f32.mrb[0].mxu0
      %618 = vmatprep.mubr.bf16.mxu0 0
      %619 = vmatmul.mubr.bf16.gmra.mrb[0].mxu0 %v415
      %v620 = vpop.f32.mrb[0].mxu0
      %v621 = vadd.f32 %v336, %v620
      %v622 = vpop.f32.mrb[0].mxu0
      %v623 = vpop.f32.mrb[0].mxu0
      %v624 = vadd.f32 %v336, %v623
      %v625 = vpop.f32.mrb[0].mxu0
      %626 = vmatprep.mubr.bf16.mxu0 0
      %627 = vmatmul.mubr.bf16.gmra.mrb[0].mxu0 %v416
      %v628 = vpop.f32.mrb[0].mxu0
      %v629 = vadd.f32 %v336, %v628
      %v630 = vpop.f32.mrb[0].mxu0
      %v631 = vpop.f32.mrb[0].mxu0
      %v632 = vadd.f32 %v336, %v631
      %v633 = vpop.f32.mrb[0].mxu0
      %634 = vmatprep.mubr.bf16.mxu0 0
      %635 = vmatmul.mubr.bf16.gmra.mrb[0].mxu0 %v417
      %v636 = vpop.f32.mrb[0].mxu0
      %v637 = vadd.f32 %v336, %v636
      %v638 = vpop.f32.mrb[0].mxu0
      %v639 = vpop.f32.mrb[0].mxu0
      %v640 = vadd.f32 %v336, %v639
      %v641 = vpop.f32.mrb[0].mxu0
      %642 = vdwg.mxu0
      %v643 = vmax.f32 %v517, 0.0
      %v644 = vmax.f32 %v520, 0.0
      %v645 = vmax.f32 %v525, 0.0
      %v646 = vmax.f32 %v528, 0.0
      %v647 = vmax.f32 %v533, 0.0
      %v648 = vmax.f32 %v536, 0.0
      %v649 = vmax.f32 %v541, 0.0
      %v650 = vmax.f32 %v544, 0.0
      %v651 = vmax.f32 %v549, 0.0
      %v652 = vmax.f32 %v552, 0.0
      %v653 = vmax.f32 %v557, 0.0
      %v654 = vmax.f32 %v560, 0.0
      %v655 = vmax.f32 %v565, 0.0
      %v656 = vmax.f32 %v568, 0.0
      %v657 = vmax.f32 %v573, 0.0
      %v658 = vmax.f32 %v576, 0.0
      %v659 = vmax.f32 %v581, 0.0
      %v660 = vmax.f32 %v584, 0.0
      %v661 = vmax.f32 %v589, 0.0
      %v662 = vmax.f32 %v592, 0.0
      %v663 = vmax.f32 %v597, 0.0
      %v664 = vmax.f32 %v600, 0.0
      %v665 = vmax.f32 %v605, 0.0
      %v666 = vmax.f32 %v608, 0.0
      %v667 = vmax.f32 %v613, 0.0
      %v668 = vmax.f32 %v616, 0.0
      %v669 = vmax.f32 %v621, 0.0
      %v670 = vmax.f32 %v624, 0.0
      %v671 = vmax.f32 %v629, 0.0
      %v672 = vmax.f32 %v632, 0.0
      %v673 = vmax.f32 %v637, 0.0
      %v674 = vmax.f32 %v640, 0.0
      %v675 = vpack.c.bf16 %v644, %v643
      %v676 = vpack.c.bf16 %v646, %v645
      %v677 = vpack.c.bf16 %v648, %v647
      %v678 = vpack.c.bf16 %v650, %v649
      %v679 = vpack.c.bf16 %v652, %v651
      %v680 = vpack.c.bf16 %v654, %v653
      %v681 = vpack.c.bf16 %v656, %v655
      %v682 = vpack.c.bf16 %v658, %v657
      %v683 = vpack.c.bf16 %v660, %v659
      %v684 = vpack.c.bf16 %v662, %v661
      %v685 = vpack.c.bf16 %v664, %v663
      %v686 = vpack.c.bf16 %v666, %v665
      %v687 = vpack.c.bf16 %v668, %v667
      %v688 = vpack.c.bf16 %v670, %v669
      %v689 = vpack.c.bf16 %v672, %v671
      %v690 = vpack.c.bf16 %v674, %v673
      %v691 = vld [vmem:[%s3] sm:$0xf]
      %v692 = vld [vmem:[%s3 + $0x4] sm:$0xf]
      %v693 = vld [vmem:[%s3 + $0x8] sm:$0xf]
      %v694 = vld [vmem:[%s3 + $0xc] sm:$0xf]
      %v695 = vld [vmem:[%s3 + $0x10] sm:$0xf]
      %v696 = vld [vmem:[%s3 + $0x14] sm:$0xf]
      %v697 = vld [vmem:[%s3 + $0x18] sm:$0xf]
      %v698 = vld [vmem:[%s3 + $0x1c] sm:$0xf]
      %v699 = vld [vmem:[%s3 + $0x20] sm:$0xf]
      %v700 = vld [vmem:[%s3 + $0x24] sm:$0xf]
      %v701 = vld [vmem:[%s3 + $0x28] sm:$0xf]
      %v702 = vld [vmem:[%s3 + $0x2c] sm:$0xf]
      %v703 = vld [vmem:[%s3 + $0x30] sm:$0xf]
      %v704 = vld [vmem:[%s3 + $0x34] sm:$0xf]
      %v705 = vld [vmem:[%s3 + $0x38] sm:$0xf]
      %v706 = vld [vmem:[%s3 + $0x3c] sm:$0xf]
      %v707 = vld [vmem:[%s4] sm:$0x1]
      %v709 = vlaneseq
      %v710 = vshrl.u32 %v709, 7
      %v711 = vsub.s32 0, %v710
      %v712 = vrot.slane %v707, %v711
      %v730 = vunpack.c.l.b16 %v691
      %v731 = vunpack.c.l.b16 %v692
      %v732 = vunpack.c.l.b16 %v693
      %v733 = vunpack.c.l.b16 %v694
      %v734 = vunpack.c.l.b16 %v695
      %v735 = vunpack.c.l.b16 %v696
      %v736 = vunpack.c.l.b16 %v697
      %v737 = vunpack.c.l.b16 %v698
      %v738 = vunpack.c.l.b16 %v699
      %v739 = vunpack.c.l.b16 %v700
      %v740 = vunpack.c.l.b16 %v701
      %v741 = vunpack.c.l.b16 %v702
      %v742 = vunpack.c.l.b16 %v703
      %v743 = vunpack.c.l.b16 %v704
      %v744 = vunpack.c.l.b16 %v705
      %v745 = vunpack.c.l.b16 %v706
      %v746 = vpack.c.b16 %v731, %v730
      %v747 = vpack.c.b16 %v733, %v732
      %v748 = vpack.c.b16 %v735, %v734
      %v749 = vpack.c.b16 %v737, %v736
      %v750 = vpack.c.b16 %v739, %v738
      %v751 = vpack.c.b16 %v741, %v740
      %v752 = vpack.c.b16 %v743, %v742
      %v753 = vpack.c.b16 %v745, %v744
      %762 = vmatprep.subr.bf16.mxu0 0
      %763 = vmatpush1.bf16.msra.mxu0 %v746
      %764 = vmatprep.subr.bf16.mxu0 0
      %765 = vmatpush1.bf16.msra.mxu0 %v747
      %766 = vmatprep.subr.bf16.mxu0 0
      %767 = vmatpush1.bf16.msra.mxu0 %v748
      %768 = vmatprep.subr.bf16.mxu0 0
      %769 = vmatpush1.bf16.msra.mxu0 %v749
      %770 = vmatprep.subr.bf16.mxu0 0
      %771 = vmatpush1.bf16.msra.mxu0 %v750
      %772 = vmatprep.subr.bf16.mxu0 0
      %773 = vmatpush1.bf16.msra.mxu0 %v751
      %774 = vmatprep.subr.bf16.mxu0 0
      %775 = vmatpush1.bf16.msra.mxu0 %v752
      %776 = vmatprep.subr.bf16.mxu0 0
      %777 = vmatpush1.bf16.msra.mxu0 %v753
      %778 = vmatprep.subr.bf16.mxu0 0
      %779 = vmatpush1.bf16.msra.mxu0 0
      %780 = vmatprep.subr.bf16.mxu0 0
      %781 = vmatpush1.bf16.msra.mxu0 0
      %782 = vmatprep.subr.bf16.mxu0 0
      %783 = vmatpush1.bf16.msra.mxu0 0
      %784 = vmatprep.subr.bf16.mxu0 0
      %785 = vmatpush1.bf16.msra.mxu0 0
      %786 = vmatprep.subr.bf16.mxu0 0
      %787 = vmatpush1.bf16.msra.mxu0 0
      %788 = vmatprep.subr.bf16.mxu0 0
      %789 = vmatpush1.bf16.msra.mxu0 0
      %790 = vmatprep.subr.bf16.mxu0 0
      %791 = vmatpush1.bf16.msra.mxu0 0
      %792 = vmatprep.subr.bf16.mxu0 0
      %793 = vmatpush1.bf16.msra.mxu0 0
      %794 = vmatprep.mubr.bf16.mxu0 0
      %795 = vmatmul.mubr.bf16.gmra.mrb[0].mxu0 %v675
      %v796 = vpop.f32.mrb[0].mxu0
      %v797 = vadd.f32 %v712, %v796
      %v798 = vpop.f32.mrb[0].mxu0
      %v799 = vpop.f32.mrb[0].mxu0
      %v800 = vadd.f32 %v712, %v799
      %v801 = vpop.f32.mrb[0].mxu0
      %802 = vmatprep.mubr.bf16.mxu0 0
      %803 = vmatmul.mubr.bf16.gmra.mrb[0].mxu0 %v676
      %v804 = vpop.f32.mrb[0].mxu0
      %v805 = vadd.f32 %v712, %v804
      %v806 = vpop.f32.mrb[0].mxu0
      %v807 = vpop.f32.mrb[0].mxu0
      %v808 = vadd.f32 %v712, %v807
      %v809 = vpop.f32.mrb[0].mxu0
      %810 = vmatprep.mubr.bf16.mxu0 0
      %811 = vmatmul.mubr.bf16.gmra.mrb[0].mxu0 %v677
      %v812 = vpop.f32.mrb[0].mxu0
      %v813 = vadd.f32 %v712, %v812
      %v814 = vpop.f32.mrb[0].mxu0
      %v815 = vpop.f32.mrb[0].mxu0
      %v816 = vadd.f32 %v712, %v815
      %v817 = vpop.f32.mrb[0].mxu0
      %818 = vmatprep.mubr.bf16.mxu0 0
      %819 = vmatmul.mubr.bf16.gmra.mrb[0].mxu0 %v678
      %v820 = vpop.f32.mrb[0].mxu0
      %v821 = vadd.f32 %v712, %v820
      %v822 = vpop.f32.mrb[0].mxu0
      %v823 = vpop.f32.mrb[0].mxu0
      %v824 = vadd.f32 %v712, %v823
      %v825 = vpop.f32.mrb[0].mxu0
      %826 = vmatprep.mubr.bf16.mxu0 0
      %827 = vmatmul.mubr.bf16.gmra.mrb[0].mxu0 %v679
      %v828 = vpop.f32.mrb[0].mxu0
      %v829 = vadd.f32 %v712, %v828
      %v830 = vpop.f32.mrb[0].mxu0
      %v831 = vpop.f32.mrb[0].mxu0
      %v832 = vadd.f32 %v712, %v831
      %v833 = vpop.f32.mrb[0].mxu0
      %834 = vmatprep.mubr.bf16.mxu0 0
      %835 = vmatmul.mubr.bf16.gmra.mrb[0].mxu0 %v680
      %v836 = vpop.f32.mrb[0].mxu0
      %v837 = vadd.f32 %v712, %v836
      %v838 = vpop.f32.mrb[0].mxu0
      %v839 = vpop.f32.mrb[0].mxu0
      %v840 = vadd.f32 %v712, %v839
      %v841 = vpop.f32.mrb[0].mxu0
      %842 = vmatprep.mubr.bf16.mxu0 0
      %843 = vmatmul.mubr.bf16.gmra.mrb[0].mxu0 %v681
      %v844 = vpop.f32.mrb[0].mxu0
      %v845 = vadd.f32 %v712, %v844
      %v846 = vpop.f32.mrb[0].mxu0
      %v847 = vpop.f32.mrb[0].mxu0
      %v848 = vadd.f32 %v712, %v847
      %v849 = vpop.f32.mrb[0].mxu0
      %850 = vmatprep.mubr.bf16.mxu0 0
      %851 = vmatmul.mubr.bf16.gmra.mrb[0].mxu0 %v682
      %v852 = vpop.f32.mrb[0].mxu0
      %v853 = vadd.f32 %v712, %v852
      %v854 = vpop.f32.mrb[0].mxu0
      %v855 = vpop.f32.mrb[0].mxu0
      %v856 = vadd.f32 %v712, %v855
      %v857 = vpop.f32.mrb[0].mxu0
      %858 = vmatprep.mubr.bf16.mxu0 0
      %859 = vmatmul.mubr.bf16.gmra.mrb[0].mxu0 %v683
      %v860 = vpop.f32.mrb[0].mxu0
      %v861 = vadd.f32 %v712, %v860
      %v862 = vpop.f32.mrb[0].mxu0
      %v863 = vpop.f32.mrb[0].mxu0
      %v864 = vadd.f32 %v712, %v863
      %v865 = vpop.f32.mrb[0].mxu0
      %866 = vmatprep.mubr.bf16.mxu0 0
      %867 = vmatmul.mubr.bf16.gmra.mrb[0].mxu0 %v684
      %v868 = vpop.f32.mrb[0].mxu0
      %v869 = vadd.f32 %v712, %v868
      %v870 = vpop.f32.mrb[0].mxu0
      %v871 = vpop.f32.mrb[0].mxu0
      %v872 = vadd.f32 %v712, %v871
      %v873 = vpop.f32.mrb[0].mxu0
      %874 = vmatprep.mubr.bf16.mxu0 0
      %875 = vmatmul.mubr.bf16.gmra.mrb[0].mxu0 %v685
      %v876 = vpop.f32.mrb[0].mxu0
      %v877 = vadd.f32 %v712, %v876
      %v878 = vpop.f32.mrb[0].mxu0
      %v879 = vpop.f32.mrb[0].mxu0
      %v880 = vadd.f32 %v712, %v879
      %v881 = vpop.f32.mrb[0].mxu0
      %882 = vmatprep.mubr.bf16.mxu0 0
      %883 = vmatmul.mubr.bf16.gmra.mrb[0].mxu0 %v686
      %v884 = vpop.f32.mrb[0].mxu0
      %v885 = vadd.f32 %v712, %v884
      %v886 = vpop.f32.mrb[0].mxu0
      %v887 = vpop.f32.mrb[0].mxu0
      %v888 = vadd.f32 %v712, %v887
      %v889 = vpop.f32.mrb[0].mxu0
      %890 = vmatprep.mubr.bf16.mxu0 0
      %891 = vmatmul.mubr.bf16.gmra.mrb[0].mxu0 %v687
      %v892 = vpop.f32.mrb[0].mxu0
      %v893 = vadd.f32 %v712, %v892
      %v894 = vpop.f32.mrb[0].mxu0
      %v895 = vpop.f32.mrb[0].mxu0
      %v896 = vadd.f32 %v712, %v895
      %v897 = vpop.f32.mrb[0].mxu0
      %898 = vmatprep.mubr.bf16.mxu0 0
      %899 = vmatmul.mubr.bf16.gmra.mrb[0].mxu0 %v688
      %v900 = vpop.f32.mrb[0].mxu0
      %v901 = vadd.f32 %v712, %v900
      %v902 = vpop.f32.mrb[0].mxu0
      %v903 = vpop.f32.mrb[0].mxu0
      %v904 = vadd.f32 %v712, %v903
      %v905 = vpop.f32.mrb[0].mxu0
      %906 = vmatprep.mubr.bf16.mxu0 0
      %907 = vmatmul.mubr.bf16.gmra.mrb[0].mxu0 %v689
      %v908 = vpop.f32.mrb[0].mxu0
      %v909 = vadd.f32 %v712, %v908
      %v910 = vpop.f32.mrb[0].mxu0
      %v911 = vpop.f32.mrb[0].mxu0
      %v912 = vadd.f32 %v712, %v911
      %v913 = vpop.f32.mrb[0].mxu0
      %914 = vmatprep.mubr.bf16.mxu0 0
      %915 = vmatmul.mubr.bf16.gmra.mrb[0].mxu0 %v690
      %v916 = vpop.f32.mrb[0].mxu0
      %v917 = vadd.f32 %v712, %v916
      %v918 = vpop.f32.mrb[0].mxu0
      %v919 = vpop.f32.mrb[0].mxu0
      %v920 = vadd.f32 %v712, %v919
      %v921 = vpop.f32.mrb[0].mxu0
      %922 = vdwg.mxu0
      %v923 = vmax.f32 %v797, 0.0
      %v924 = vmax.f32 %v800, 0.0
      %v925 = vmax.f32 %v805, 0.0
      %v926 = vmax.f32 %v808, 0.0
      %v927 = vmax.f32 %v813, 0.0
      %v928 = vmax.f32 %v816, 0.0
      %v929 = vmax.f32 %v821, 0.0
      %v930 = vmax.f32 %v824, 0.0
      %v931 = vmax.f32 %v829, 0.0
      %v932 = vmax.f32 %v832, 0.0
      %v933 = vmax.f32 %v837, 0.0
      %v934 = vmax.f32 %v840, 0.0
      %v935 = vmax.f32 %v845, 0.0
      %v936 = vmax.f32 %v848, 0.0
      %v937 = vmax.f32 %v853, 0.0
      %v938 = vmax.f32 %v856, 0.0
      %v939 = vmax.f32 %v861, 0.0
      %v940 = vmax.f32 %v864, 0.0
      %v941 = vmax.f32 %v869, 0.0
      %v942 = vmax.f32 %v872, 0.0
      %v943 = vmax.f32 %v877, 0.0
      %v944 = vmax.f32 %v880, 0.0
      %v945 = vmax.f32 %v885, 0.0
      %v946 = vmax.f32 %v888, 0.0
      %v947 = vmax.f32 %v893, 0.0
      %v948 = vmax.f32 %v896, 0.0
      %v949 = vmax.f32 %v901, 0.0
      %v950 = vmax.f32 %v904, 0.0
      %v951 = vmax.f32 %v909, 0.0
      %v952 = vmax.f32 %v912, 0.0
      %v953 = vmax.f32 %v917, 0.0
      %v954 = vmax.f32 %v920, 0.0
      %v955 = vpack.c.bf16 %v924, %v923
      %v956 = vpack.c.bf16 %v926, %v925
      %v957 = vpack.c.bf16 %v928, %v927
      %v958 = vpack.c.bf16 %v930, %v929
      %v959 = vpack.c.bf16 %v932, %v931
      %v960 = vpack.c.bf16 %v934, %v933
      %v961 = vpack.c.bf16 %v936, %v935
      %v962 = vpack.c.bf16 %v938, %v937
      %v963 = vpack.c.bf16 %v940, %v939
      %v964 = vpack.c.bf16 %v942, %v941
      %v965 = vpack.c.bf16 %v944, %v943
      %v966 = vpack.c.bf16 %v946, %v945
      %v967 = vpack.c.bf16 %v948, %v947
      %v968 = vpack.c.bf16 %v950, %v949
      %v969 = vpack.c.bf16 %v952, %v951
      %v970 = vpack.c.bf16 %v954, %v953
      %v971 = vld [vmem:[%s5] sm:$0xf]
      %v972 = vld [vmem:[%s5 + $0x4] sm:$0xf]
      %v973 = vld [vmem:[%s5 + $0x8] sm:$0xf]
      %v974 = vld [vmem:[%s5 + $0xc] sm:$0xf]
      %v975 = vld [vmem:[%s5 + $0x10] sm:$0xf]
      %v976 = vld [vmem:[%s5 + $0x14] sm:$0xf]
      %v977 = vld [vmem:[%s5 + $0x18] sm:$0xf]
      %v978 = vld [vmem:[%s5 + $0x1c] sm:$0xf]
      %v979 = vld [vmem:[%s5 + $0x20] sm:$0xf]
      %v980 = vld [vmem:[%s5 + $0x24] sm:$0xf]
      %v981 = vld [vmem:[%s5 + $0x28] sm:$0xf]
      %v982 = vld [vmem:[%s5 + $0x2c] sm:$0xf]
      %v983 = vld [vmem:[%s5 + $0x30] sm:$0xf]
      %v984 = vld [vmem:[%s5 + $0x34] sm:$0xf]
      %v985 = vld [vmem:[%s5 + $0x38] sm:$0xf]
      %v986 = vld [vmem:[%s5 + $0x3c] sm:$0xf]
      %v987 = vld [vmem:[%s6] sm:$0x1]
      %v989 = vlaneseq
      %v990 = vshrl.u32 %v989, 7
      %v991 = vsub.s32 0, %v990
      %v992 = vrot.slane %v987, %v991
      %v1010 = vunpack.c.l.b16 %v971
      %v1011 = vunpack.c.l.b16 %v972
      %v1012 = vunpack.c.l.b16 %v973
      %v1013 = vunpack.c.l.b16 %v974
      %v1014 = vunpack.c.l.b16 %v975
      %v1015 = vunpack.c.l.b16 %v976
      %v1016 = vunpack.c.l.b16 %v977
      %v1017 = vunpack.c.l.b16 %v978
      %v1018 = vunpack.c.l.b16 %v979
      %v1019 = vunpack.c.l.b16 %v980
      %v1020 = vunpack.c.l.b16 %v981
      %v1021 = vunpack.c.l.b16 %v982
      %v1022 = vunpack.c.l.b16 %v983
      %v1023 = vunpack.c.l.b16 %v984
      %v1024 = vunpack.c.l.b16 %v985
      %v1025 = vunpack.c.l.b16 %v986
      %v1026 = vpack.c.b16 %v1011, %v1010
      %v1027 = vpack.c.b16 %v1013, %v1012
      %v1028 = vpack.c.b16 %v1015, %v1014
      %v1029 = vpack.c.b16 %v1017, %v1016
      %v1030 = vpack.c.b16 %v1019, %v1018
      %v1031 = vpack.c.b16 %v1021, %v1020
      %v1032 = vpack.c.b16 %v1023, %v1022
      %v1033 = vpack.c.b16 %v1025, %v1024
      %1042 = vmatprep.subr.bf16.mxu0 0
      %1043 = vmatpush1.bf16.msra.mxu0 %v1026
      %1044 = vmatprep.subr.bf16.mxu0 0
      %1045 = vmatpush1.bf16.msra.mxu0 %v1027
      %1046 = vmatprep.subr.bf16.mxu0 0
      %1047 = vmatpush1.bf16.msra.mxu0 %v1028
      %1048 = vmatprep.subr.bf16.mxu0 0
      %1049 = vmatpush1.bf16.msra.mxu0 %v1029
      %1050 = vmatprep.subr.bf16.mxu0 0
      %1051 = vmatpush1.bf16.msra.mxu0 %v1030
      %1052 = vmatprep.subr.bf16.mxu0 0
      %1053 = vmatpush1.bf16.msra.mxu0 %v1031
      %1054 = vmatprep.subr.bf16.mxu0 0
      %1055 = vmatpush1.bf16.msra.mxu0 %v1032
      %1056 = vmatprep.subr.bf16.mxu0 0
      %1057 = vmatpush1.bf16.msra.mxu0 %v1033
      %1058 = vmatprep.subr.bf16.mxu0 0
      %1059 = vmatpush1.bf16.msra.mxu0 0
      %1060 = vmatprep.subr.bf16.mxu0 0
      %1061 = vmatpush1.bf16.msra.mxu0 0
      %1062 = vmatprep.subr.bf16.mxu0 0
      %1063 = vmatpush1.bf16.msra.mxu0 0
      %1064 = vmatprep.subr.bf16.mxu0 0
      %1065 = vmatpush1.bf16.msra.mxu0 0
      %1066 = vmatprep.subr.bf16.mxu0 0
      %1067 = vmatpush1.bf16.msra.mxu0 0
      %1068 = vmatprep.subr.bf16.mxu0 0
      %1069 = vmatpush1.bf16.msra.mxu0 0
      %1070 = vmatprep.subr.bf16.mxu0 0
      %1071 = vmatpush1.bf16.msra.mxu0 0
      %1072 = vmatprep.subr.bf16.mxu0 0
      %1073 = vmatpush1.bf16.msra.mxu0 0
      %1074 = vmatprep.mubr.bf16.mxu0 0
      %1075 = vmatmul.mubr.bf16.gmra.mrb[0].mxu0 %v955
      %v1076 = vpop.f32.mrb[0].mxu0
      %v1077 = vadd.f32 %v992, %v1076
      %v1078 = vpop.f32.mrb[0].mxu0
      %v1079 = vpop.f32.mrb[0].mxu0
      %v1080 = vadd.f32 %v992, %v1079
      %v1081 = vpop.f32.mrb[0].mxu0
      %1082 = vmatprep.mubr.bf16.mxu0 0
      %1083 = vmatmul.mubr.bf16.gmra.mrb[0].mxu0 %v956
      %v1084 = vpop.f32.mrb[0].mxu0
      %v1085 = vadd.f32 %v992, %v1084
      %v1086 = vpop.f32.mrb[0].mxu0
      %v1087 = vpop.f32.mrb[0].mxu0
      %v1088 = vadd.f32 %v992, %v1087
      %v1089 = vpop.f32.mrb[0].mxu0
      %1090 = vmatprep.mubr.bf16.mxu0 0
      %1091 = vmatmul.mubr.bf16.gmra.mrb[0].mxu0 %v957
      %v1092 = vpop.f32.mrb[0].mxu0
      %v1093 = vadd.f32 %v992, %v1092
      %v1094 = vpop.f32.mrb[0].mxu0
      %v1095 = vpop.f32.mrb[0].mxu0
      %v1096 = vadd.f32 %v992, %v1095
      %v1097 = vpop.f32.mrb[0].mxu0
      %1098 = vmatprep.mubr.bf16.mxu0 0
      %1099 = vmatmul.mubr.bf16.gmra.mrb[0].mxu0 %v958
      %v1100 = vpop.f32.mrb[0].mxu0
      %v1101 = vadd.f32 %v992, %v1100
      %v1102 = vpop.f32.mrb[0].mxu0
      %v1103 = vpop.f32.mrb[0].mxu0
      %v1104 = vadd.f32 %v992, %v1103
      %v1105 = vpop.f32.mrb[0].mxu0
      %1106 = vmatprep.mubr.bf16.mxu0 0
      %1107 = vmatmul.mubr.bf16.gmra.mrb[0].mxu0 %v959
      %v1108 = vpop.f32.mrb[0].mxu0
      %v1109 = vadd.f32 %v992, %v1108
      %v1110 = vpop.f32.mrb[0].mxu0
      %v1111 = vpop.f32.mrb[0].mxu0
      %v1112 = vadd.f32 %v992, %v1111
      %v1113 = vpop.f32.mrb[0].mxu0
      %1114 = vmatprep.mubr.bf16.mxu0 0
      %1115 = vmatmul.mubr.bf16.gmra.mrb[0].mxu0 %v960
      %v1116 = vpop.f32.mrb[0].mxu0
      %v1117 = vadd.f32 %v992, %v1116
      %v1118 = vpop.f32.mrb[0].mxu0
      %v1119 = vpop.f32.mrb[0].mxu0
      %v1120 = vadd.f32 %v992, %v1119
      %v1121 = vpop.f32.mrb[0].mxu0
      %1122 = vmatprep.mubr.bf16.mxu0 0
      %1123 = vmatmul.mubr.bf16.gmra.mrb[0].mxu0 %v961
      %v1124 = vpop.f32.mrb[0].mxu0
      %v1125 = vadd.f32 %v992, %v1124
      %v1126 = vpop.f32.mrb[0].mxu0
      %v1127 = vpop.f32.mrb[0].mxu0
      %v1128 = vadd.f32 %v992, %v1127
      %v1129 = vpop.f32.mrb[0].mxu0
      %1130 = vmatprep.mubr.bf16.mxu0 0
      %1131 = vmatmul.mubr.bf16.gmra.mrb[0].mxu0 %v962
      %v1132 = vpop.f32.mrb[0].mxu0
      %v1133 = vadd.f32 %v992, %v1132
      %v1134 = vpop.f32.mrb[0].mxu0
      %v1135 = vpop.f32.mrb[0].mxu0
      %v1136 = vadd.f32 %v992, %v1135
      %v1137 = vpop.f32.mrb[0].mxu0
      %1138 = vmatprep.mubr.bf16.mxu0 0
      %1139 = vmatmul.mubr.bf16.gmra.mrb[0].mxu0 %v963
      %v1140 = vpop.f32.mrb[0].mxu0
      %v1141 = vadd.f32 %v992, %v1140
      %v1142 = vpop.f32.mrb[0].mxu0
      %v1143 = vpop.f32.mrb[0].mxu0
      %v1144 = vadd.f32 %v992, %v1143
      %v1145 = vpop.f32.mrb[0].mxu0
      %1146 = vmatprep.mubr.bf16.mxu0 0
      %1147 = vmatmul.mubr.bf16.gmra.mrb[0].mxu0 %v964
      %v1148 = vpop.f32.mrb[0].mxu0
      %v1149 = vadd.f32 %v992, %v1148
      %v1150 = vpop.f32.mrb[0].mxu0
      %v1151 = vpop.f32.mrb[0].mxu0
      %v1152 = vadd.f32 %v992, %v1151
      %v1153 = vpop.f32.mrb[0].mxu0
      %1154 = vmatprep.mubr.bf16.mxu0 0
      %1155 = vmatmul.mubr.bf16.gmra.mrb[0].mxu0 %v965
      %v1156 = vpop.f32.mrb[0].mxu0
      %v1157 = vadd.f32 %v992, %v1156
      %v1158 = vpop.f32.mrb[0].mxu0
      %v1159 = vpop.f32.mrb[0].mxu0
      %v1160 = vadd.f32 %v992, %v1159
      %v1161 = vpop.f32.mrb[0].mxu0
      %1162 = vmatprep.mubr.bf16.mxu0 0
      %1163 = vmatmul.mubr.bf16.gmra.mrb[0].mxu0 %v966
      %v1164 = vpop.f32.mrb[0].mxu0
      %v1165 = vadd.f32 %v992, %v1164
      %v1166 = vpop.f32.mrb[0].mxu0
      %v1167 = vpop.f32.mrb[0].mxu0
      %v1168 = vadd.f32 %v992, %v1167
      %v1169 = vpop.f32.mrb[0].mxu0
      %1170 = vmatprep.mubr.bf16.mxu0 0
      %1171 = vmatmul.mubr.bf16.gmra.mrb[0].mxu0 %v967
      %v1172 = vpop.f32.mrb[0].mxu0
      %v1173 = vadd.f32 %v992, %v1172
      %v1174 = vpop.f32.mrb[0].mxu0
      %v1175 = vpop.f32.mrb[0].mxu0
      %v1176 = vadd.f32 %v992, %v1175
      %v1177 = vpop.f32.mrb[0].mxu0
      %1178 = vmatprep.mubr.bf16.mxu0 0
      %1179 = vmatmul.mubr.bf16.gmra.mrb[0].mxu0 %v968
      %v1180 = vpop.f32.mrb[0].mxu0
      %v1181 = vadd.f32 %v992, %v1180
      %v1182 = vpop.f32.mrb[0].mxu0
      %v1183 = vpop.f32.mrb[0].mxu0
      %v1184 = vadd.f32 %v992, %v1183
      %v1185 = vpop.f32.mrb[0].mxu0
      %1186 = vmatprep.mubr.bf16.mxu0 0
      %1187 = vmatmul.mubr.bf16.gmra.mrb[0].mxu0 %v969
      %v1188 = vpop.f32.mrb[0].mxu0
      %v1189 = vadd.f32 %v992, %v1188
      %v1190 = vpop.f32.mrb[0].mxu0
      %v1191 = vpop.f32.mrb[0].mxu0
      %v1192 = vadd.f32 %v992, %v1191
      %v1193 = vpop.f32.mrb[0].mxu0
      %1194 = vmatprep.mubr.bf16.mxu0 0
      %1195 = vmatmul.mubr.bf16.gmra.mrb[0].mxu0 %v970
      %v1196 = vpop.f32.mrb[0].mxu0
      %v1197 = vadd.f32 %v992, %v1196
      %v1198 = vpop.f32.mrb[0].mxu0
      %v1199 = vpop.f32.mrb[0].mxu0
      %v1200 = vadd.f32 %v992, %v1199
      %v1201 = vpop.f32.mrb[0].mxu0
      %1202 = vdwg.mxu0
      %v1203 = vmax.f32 %v1077, 0.0
      %v1204 = vmax.f32 %v1080, 0.0
      %v1205 = vmax.f32 %v1085, 0.0
      %v1206 = vmax.f32 %v1088, 0.0
      %v1207 = vmax.f32 %v1093, 0.0
      %v1208 = vmax.f32 %v1096, 0.0
      %v1209 = vmax.f32 %v1101, 0.0
      %v1210 = vmax.f32 %v1104, 0.0
      %v1211 = vmax.f32 %v1109, 0.0
      %v1212 = vmax.f32 %v1112, 0.0
      %v1213 = vmax.f32 %v1117, 0.0
      %v1214 = vmax.f32 %v1120, 0.0
      %v1215 = vmax.f32 %v1125, 0.0
      %v1216 = vmax.f32 %v1128, 0.0
      %v1217 = vmax.f32 %v1133, 0.0
      %v1218 = vmax.f32 %v1136, 0.0
      %v1219 = vmax.f32 %v1141, 0.0
      %v1220 = vmax.f32 %v1144, 0.0
      %v1221 = vmax.f32 %v1149, 0.0
      %v1222 = vmax.f32 %v1152, 0.0
      %v1223 = vmax.f32 %v1157, 0.0
      %v1224 = vmax.f32 %v1160, 0.0
      %v1225 = vmax.f32 %v1165, 0.0
      %v1226 = vmax.f32 %v1168, 0.0
      %v1227 = vmax.f32 %v1173, 0.0
      %v1228 = vmax.f32 %v1176, 0.0
      %v1229 = vmax.f32 %v1181, 0.0
      %v1230 = vmax.f32 %v1184, 0.0
      %v1231 = vmax.f32 %v1189, 0.0
      %v1232 = vmax.f32 %v1192, 0.0
      %v1233 = vmax.f32 %v1197, 0.0
      %v1234 = vmax.f32 %v1200, 0.0
      %v1235 = vpack.c.bf16 %v1204, %v1203
      %v1236 = vpack.c.bf16 %v1206, %v1205
      %v1237 = vpack.c.bf16 %v1208, %v1207
      %v1238 = vpack.c.bf16 %v1210, %v1209
      %v1239 = vpack.c.bf16 %v1212, %v1211
      %v1240 = vpack.c.bf16 %v1214, %v1213
      %v1241 = vpack.c.bf16 %v1216, %v1215
      %v1242 = vpack.c.bf16 %v1218, %v1217
      %v1243 = vpack.c.bf16 %v1220, %v1219
      %v1244 = vpack.c.bf16 %v1222, %v1221
      %v1245 = vpack.c.bf16 %v1224, %v1223
      %v1246 = vpack.c.bf16 %v1226, %v1225
      %v1247 = vpack.c.bf16 %v1228, %v1227
      %v1248 = vpack.c.bf16 %v1230, %v1229
      %v1249 = vpack.c.bf16 %v1232, %v1231
      %v1250 = vpack.c.bf16 %v1234, %v1233
      %v1267 = vunpack.c.l.b16 %v1235
      %v1268 = vunpack.c.h.b16 %v1235
      %v1269 = vunpack.c.l.b16 %v1236
      %v1270 = vunpack.c.h.b16 %v1236
      %v1271 = vunpack.c.l.b16 %v1237
      %v1272 = vunpack.c.h.b16 %v1237
      %v1273 = vunpack.c.l.b16 %v1238
      %v1274 = vunpack.c.h.b16 %v1238
      %v1275 = vunpack.c.l.b16 %v1239
      %v1276 = vunpack.c.h.b16 %v1239
      %v1277 = vunpack.c.l.b16 %v1240
      %v1278 = vunpack.c.h.b16 %v1240
      %v1279 = vunpack.c.l.b16 %v1241
      %v1280 = vunpack.c.h.b16 %v1241
      %v1281 = vunpack.c.l.b16 %v1242
      %v1282 = vunpack.c.h.b16 %v1242
      %v1283 = vunpack.c.l.b16 %v1243
      %v1284 = vunpack.c.h.b16 %v1243
      %v1285 = vunpack.c.l.b16 %v1244
      %v1286 = vunpack.c.h.b16 %v1244
      %v1287 = vunpack.c.l.b16 %v1245
      %v1288 = vunpack.c.h.b16 %v1245
      %v1289 = vunpack.c.l.b16 %v1246
      %v1290 = vunpack.c.h.b16 %v1246
      %v1291 = vunpack.c.l.b16 %v1247
      %v1292 = vunpack.c.h.b16 %v1247
      %v1293 = vunpack.c.l.b16 %v1248
      %v1294 = vunpack.c.h.b16 %v1248
      %v1295 = vunpack.c.l.b16 %v1249
      %v1296 = vunpack.c.h.b16 %v1249
      %v1297 = vunpack.c.l.b16 %v1250
      %v1298 = vunpack.c.h.b16 %v1250
      %v1299 = vpack.c.b16 %v1267, %v1267
      %v1300 = vpack.c.b16 %v1268, %v1268
      %v1301 = vpack.c.b16 %v1269, %v1269
      %v1302 = vpack.c.b16 %v1270, %v1270
      %v1303 = vpack.c.b16 %v1271, %v1271
      %v1304 = vpack.c.b16 %v1272, %v1272
      %v1305 = vpack.c.b16 %v1273, %v1273
      %v1306 = vpack.c.b16 %v1274, %v1274
      %v1307 = vpack.c.b16 %v1275, %v1275
      %v1308 = vpack.c.b16 %v1276, %v1276
      %v1309 = vpack.c.b16 %v1277, %v1277
      %v1310 = vpack.c.b16 %v1278, %v1278
      %v1311 = vpack.c.b16 %v1279, %v1279
      %v1312 = vpack.c.b16 %v1280, %v1280
      %v1313 = vpack.c.b16 %v1281, %v1281
      %v1314 = vpack.c.b16 %v1282, %v1282
      %v1315 = vpack.c.b16 %v1283, %v1283
      %v1316 = vpack.c.b16 %v1284, %v1284
      %v1317 = vpack.c.b16 %v1285, %v1285
      %v1318 = vpack.c.b16 %v1286, %v1286
      %v1319 = vpack.c.b16 %v1287, %v1287
      %v1320 = vpack.c.b16 %v1288, %v1288
      %v1321 = vpack.c.b16 %v1289, %v1289
      %v1322 = vpack.c.b16 %v1290, %v1290
      %v1323 = vpack.c.b16 %v1291, %v1291
      %v1324 = vpack.c.b16 %v1292, %v1292
      %v1325 = vpack.c.b16 %v1293, %v1293
      %v1326 = vpack.c.b16 %v1294, %v1294
      %v1327 = vpack.c.b16 %v1295, %v1295
      %v1328 = vpack.c.b16 %v1296, %v1296
      %v1329 = vpack.c.b16 %v1297, %v1297
      %v1330 = vpack.c.b16 %v1298, %v1298
      %1363 = vst [vmem:[%s280] sm:$0xf] %v1299
      %1364 = vst [vmem:[%s280 + $0x4] sm:$0xf] %v1300
      %1365 = vst [vmem:[%s280 + $0x8] sm:$0xf] %v1301
      %1366 = vst [vmem:[%s280 + $0xc] sm:$0xf] %v1302
      %1367 = vst [vmem:[%s280 + $0x10] sm:$0xf] %v1303
      %1368 = vst [vmem:[%s280 + $0x14] sm:$0xf] %v1304
      %1369 = vst [vmem:[%s280 + $0x18] sm:$0xf] %v1305
      %1370 = vst [vmem:[%s280 + $0x1c] sm:$0xf] %v1306
      %1371 = vst [vmem:[%s280 + $0x20] sm:$0xf] %v1307
      %1372 = vst [vmem:[%s280 + $0x24] sm:$0xf] %v1308
      %1373 = vst [vmem:[%s280 + $0x28] sm:$0xf] %v1309
      %1374 = vst [vmem:[%s280 + $0x2c] sm:$0xf] %v1310
      %1375 = vst [vmem:[%s280 + $0x30] sm:$0xf] %v1311
      %1376 = vst [vmem:[%s280 + $0x34] sm:$0xf] %v1312
      %1377 = vst [vmem:[%s280 + $0x38] sm:$0xf] %v1313
      %1378 = vst [vmem:[%s280 + $0x3c] sm:$0xf] %v1314
      %1379 = vst [vmem:[%s280 + $0x40] sm:$0xf] %v1315
      %1380 = vst [vmem:[%s280 + $0x44] sm:$0xf] %v1316
      %1381 = vst [vmem:[%s280 + $0x48] sm:$0xf] %v1317
      %1382 = vst [vmem:[%s280 + $0x4c] sm:$0xf] %v1318
      %1383 = vst [vmem:[%s280 + $0x50] sm:$0xf] %v1319
      %1384 = vst [vmem:[%s280 + $0x54] sm:$0xf] %v1320
      %1385 = vst [vmem:[%s280 + $0x58] sm:$0xf] %v1321
      %1386 = vst [vmem:[%s280 + $0x5c] sm:$0xf] %v1322
      %1387 = vst [vmem:[%s280 + $0x60] sm:$0xf] %v1323
      %1388 = vst [vmem:[%s280 + $0x64] sm:$0xf] %v1324
      %1389 = vst [vmem:[%s280 + $0x68] sm:$0xf] %v1325
      %1390 = vst [vmem:[%s280 + $0x6c] sm:$0xf] %v1326
      %1391 = vst [vmem:[%s280 + $0x70] sm:$0xf] %v1327
      %1392 = vst [vmem:[%s280 + $0x74] sm:$0xf] %v1328
      %1393 = vst [vmem:[%s280 + $0x78] sm:$0xf] %v1329
      %1394 = vst [vmem:[%s280 + $0x7c] sm:$0xf] %v1330
      %s1395 = smul.u32 32, %s18
      %p1396 = scmp.lt.s32.totalorder %s1395, 63
      %s1397 = scalar_select %p1396, %s1395, 63
      %s1398 = smul.addr %s1397, 4
      %s1399 = scalar_lea.vmem %s7, %s1398
      // Predicated region
      $region49: #{nin_forward.4} parent=47 // pred_check
        %p1400 = pneg %p188
      $region50: #{nin_forward.4} parent=47 // pred_check_branch
        %1402 = sbr.rel (%p1400) target = $region52
      $region51: #{nin_forward.4} parent=47 // pred_region
        %s1403 = smul.u32 32, %s18
      $region52: #{nin_forward.4} parent=47 // pred_fallthru
        _
    $region48: #{nin_forward.4} parent=5 // pred_fallthru
      _
    %p1404 = scmp.le.s32.totalorder 2, %s13
    // Predicated region
    $region53: #{nin_forward.4} parent=5 // pred_check
      %p1405 = pneg %p1404
    $region54: #{nin_forward.4} parent=5 // pred_check_branch
      %1407 = sbr.rel (%p1405) target = $region56
    $region55: #{nin_forward.4} parent=5 // pred_region
      %s1408 = ssub.s32 %s13, 2
      // Predicated region
      $region57: #{nin_forward.4} parent=55 // pred_check
        %p1409 = pneg %p194
      $region58: #{nin_forward.4} parent=55 // pred_check_branch
        %1411 = sbr.rel (%p1409) target = $region60
      $region59: #{nin_forward.4} parent=55 // pred_region
        %s1412 = smul.u32 32, %s19
        %p1413 = scmp.lt.s32.totalorder %s1412, 63
        %s1414 = scalar_select %p1413, %s1412, 63
        %s1415 = smul.addr %s1414, 4
        %s1416 = scalar_lea.vmem %s7, %s1415
      $region60: #{nin_forward.4} parent=55 // pred_fallthru
        _
    $region56: #{nin_forward.4} parent=5 // pred_fallthru
      _
  $region6: #{nin_forward.4} parent=0 // loop_footer
    %s17 = sadd.s32 1, %s13
  $region7: #{nin_forward.4} parent=0 // loop_footer_branch
    %12 = sbr.rel target = $region3
  $region8: #{nin_forward.4} parent=0 // loop_exit
    _

// kernel: nin_forward.6
$region0: #{nin_forward.6}
  #allocation0 [shape = 'u32[]', space=smem, size = 0x4, offset = 0x4, fixed_abs, tag = 'smem constant byte address 0x4 - core index']
  #allocation1 [shape = 'u32[144,128]{1,0:T(1,128)}', space=vmem, size = 0x12000, scoped, tag = 'internal scratch']
  %s0 = inlined_call_operand.vmem [shape: bf16[3,104,128], index: 0, kind: input, shape index: {}]
  %s1 = inlined_call_operand.vmem [shape: bf16[104,128], index: 1, kind: output, shape index: {}]
  %s2 = sld [smem:[#allocation0]]
  $region14: #{nin_forward.6} parent=0
    _
  %s4 = ssub.s32 1, %s2
  %s5 = scalar_select 0, %s4, %s2
  // Predicated region
  $region2: #{nin_forward.6} parent=0 // pred_check
    _
  $region3: #{nin_forward.6} parent=0 // pred_check_branch
    %7 = sbr.rel (0) target = $region5
  $region4: #{nin_forward.6} parent=0 // pred_region
    _
  $region5: #{nin_forward.6} parent=0 // pred_fallthru
    _
  %v9 = vld [vmem:[%s0] sm:$0xf]
  %v10 = vld [vmem:[%s0 + $0x4] sm:$0xf]
  %v11 = vld [vmem:[%s0 + $0x8] sm:$0xf]
  %v12 = vld [vmem:[%s0 + $0xc] sm:$0xf]
  %v13 = vld [vmem:[%s0 + $0x10] sm:$0xf]
  %v14 = vld [vmem:[%s0 + $0x14] sm:$0xf]
  %v15 = vld [vmem:[%s0 + $0x18] sm:$0xf]
  %v16 = vld [vmem:[%s0 + $0x1c] sm:$0xf]
  %v17 = vld [vmem:[%s0 + $0x20] sm:$0xf]
  %v18 = vld [vmem:[%s0 + $0x24] sm:$0xf]
  %v19 = vld [vmem:[%s0 + $0x28] sm:$0xf]
  %v20 = vld [vmem:[%s0 + $0x2c] sm:$0xf]
  %v21 = vld [vmem:[%s0 + $0x30] sm:$0xf]
  %v22 = vld [vmem:[%s0 + $0x34] sm:$0xf]
  %v23 = vld [vmem:[%s0 + $0x38] sm:$0xf]
  %v24 = vld [vmem:[%s0 + $0x3c] sm:$0xf]
  %v25 = vld [vmem:[%s0 + $0x40] sm:$0xf]
  %v26 = vld [vmem:[%s0 + $0x44] sm:$0xf]
  %v27 = vld [vmem:[%s0 + $0x48] sm:$0xf]
  %v28 = vld [vmem:[%s0 + $0x4c] sm:$0xf]
  %v29 = vld [vmem:[%s0 + $0x50] sm:$0xf]
  %v30 = vld [vmem:[%s0 + $0x54] sm:$0xf]
  %v31 = vld [vmem:[%s0 + $0x58] sm:$0xf]
  %v32 = vld [vmem:[%s0 + $0x5c] sm:$0xf]
  %v33 = vld [vmem:[%s0 + $0x60] sm:$0xf]
  %v34 = vld [vmem:[%s0 + $0x64] sm:$0xf]
  %v35 = vld [vmem:[%s0 + $0x68] sm:$0xf]
  %v36 = vld [vmem:[%s0 + $0x6c] sm:$0xf]
  %v37 = vld [vmem:[%s0 + $0x70] sm:$0xf]
  %v38 = vld [vmem:[%s0 + $0x74] sm:$0xf]
  %v39 = vld [vmem:[%s0 + $0x78] sm:$0xf]
  %v40 = vld [vmem:[%s0 + $0x7c] sm:$0xf]
  %v41 = vld [vmem:[%s0 + $0x80] sm:$0xf]
  %v42 = vld [vmem:[%s0 + $0x84] sm:$0xf]
  %v43 = vld [vmem:[%s0 + $0x88] sm:$0xf]
  %v44 = vld [vmem:[%s0 + $0x8c] sm:$0xf]
  %v45 = vld [vmem:[%s0 + $0x90] sm:$0xf]
  %v46 = vld [vmem:[%s0 + $0x94] sm:$0xf]
  %v47 = vld [vmem:[%s0 + $0x98] sm:$0xf]
  %vm48 = vcmask 1043456
  %v51 = vsel %vm48, %v9, 4286644096
  %v54 = vsel %vm48, %v22, 4286644096
  %v56 = vmax.bf16 %v51, %v54
  %v58 = vsel %vm48, %v35, 4286644096
  %v60 = vmax.bf16 %v56, %v58
  %v62 = vsel %vm48, %v10, 4286644096
  %v65 = vsel %vm48, %v23, 4286644096
  %v67 = vmax.bf16 %v62, %v65
  %v69 = vsel %vm48, %v36, 4286644096
  %v71 = vmax.bf16 %v67, %v69
  %v73 = vsel %vm48, %v11, 4286644096
  %v76 = vsel %vm48, %v24, 4286644096
  %v78 = vmax.bf16 %v73, %v76
  %v80 = vsel %vm48, %v37, 4286644096
  %v82 = vmax.bf16 %v78, %v80
  %v84 = vsel %vm48, %v12, 4286644096
  %v87 = vsel %vm48, %v25, 4286644096
  %v89 = vmax.bf16 %v84, %v87
  %v91 = vsel %vm48, %v38, 4286644096
  %v93 = vmax.bf16 %v89, %v91
  %v95 = vsel %vm48, %v13, 4286644096
  %v98 = vsel %vm48, %v26, 4286644096
  %v100 = vmax.bf16 %v95, %v98
  %v102 = vsel %vm48, %v39, 4286644096
  %v104 = vmax.bf16 %v100, %v102
  %v106 = vsel %vm48, %v14, 4286644096
  %v109 = vsel %vm48, %v27, 4286644096
  %v111 = vmax.bf16 %v106, %v109
  %v113 = vsel %vm48, %v40, 4286644096
  %v115 = vmax.bf16 %v111, %v113
  %v117 = vsel %vm48, %v15, 4286644096
  %v120 = vsel %vm48, %v28, 4286644096
  %v122 = vmax.bf16 %v117, %v120
  %v124 = vsel %vm48, %v41, 4286644096
  %v126 = vmax.bf16 %v122, %v124
  %v128 = vsel %vm48, %v16, 4286644096
  %v131 = vsel %vm48, %v29, 4286644096
  %v133 = vmax.bf16 %v128, %v131
  %v135 = vsel %vm48, %v42, 4286644096
  %v137 = vmax.bf16 %v133, %v135
  %v139 = vsel %vm48, %v17, 4286644096
  %v142 = vsel %vm48, %v30, 4286644096
  %v144 = vmax.bf16 %v139, %v142
  %v146 = vsel %vm48, %v43, 4286644096
  %v148 = vmax.bf16 %v144, %v146
  %v150 = vsel %vm48, %v18, 4286644096
  %v153 = vsel %vm48, %v31, 4286644096
  %v155 = vmax.bf16 %v150, %v153
  %v157 = vsel %vm48, %v44, 4286644096
  %v159 = vmax.bf16 %v155, %v157
  %v161 = vsel %vm48, %v19, 4286644096
  %v164 = vsel %vm48, %v32, 4286644096
  %v166 = vmax.bf16 %v161, %v164
  %v168 = vsel %vm48, %v45, 4286644096
  %v170 = vmax.bf16 %v166, %v168
  %v172 = vsel %vm48, %v20, 4286644096
  %v175 = vsel %vm48, %v33, 4286644096
  %v177 = vmax.bf16 %v172, %v175
  %v179 = vsel %vm48, %v46, 4286644096
  %v181 = vmax.bf16 %v177, %v179
  %v183 = vsel %vm48, %v21, 4286644096
  %v186 = vsel %vm48, %v34, 4286644096
  %v188 = vmax.bf16 %v183, %v186
  %v190 = vsel %vm48, %v47, 4286644096
  %v192 = vmax.bf16 %v188, %v190
  %193 = vst [vmem:[%s1] sm:$0xf] %v60
  %194 = vst [vmem:[%s1 + $0x4] sm:$0xf] %v71
  %195 = vst [vmem:[%s1 + $0x8] sm:$0xf] %v82
  %196 = vst [vmem:[%s1 + $0xc] sm:$0xf] %v93
  %197 = vst [vmem:[%s1 + $0x10] sm:$0xf] %v104
  %198 = vst [vmem:[%s1 + $0x14] sm:$0xf] %v115
  %199 = vst [vmem:[%s1 + $0x18] sm:$0xf] %v126
  %200 = vst [vmem:[%s1 + $0x1c] sm:$0xf] %v137
  %201 = vst [vmem:[%s1 + $0x20] sm:$0xf] %v148
  %202 = vst [vmem:[%s1 + $0x24] sm:$0xf] %v159
  %203 = vst [vmem:[%s1 + $0x28] sm:$0xf] %v170
  %204 = vst [vmem:[%s1 + $0x2c] sm:$0xf] %v181
  %205 = vst [vmem:[%s1 + $0x30] sm:$0xf] %v192
  // Predicated region
  $region6: #{nin_forward.6} parent=0 // pred_check
    _
  $region7: #{nin_forward.6} parent=0 // pred_check_branch
    %207 = sbr.rel (0) target = $region9
  $region8: #{nin_forward.6} parent=0 // pred_region
    _
  $region9: #{nin_forward.6} parent=0 // pred_fallthru
    _
  // Predicated region
  $region10: #{nin_forward.6} parent=0 // pred_check
    _
  $region11: #{nin_forward.6} parent=0 // pred_check_branch
    %209 = sbr.rel (0) target = $region13
  $region12: #{nin_forward.6} parent=0 // pred_region
    _
  $region13: #{nin_forward.6} parent=0 // pred_fallthru
    _

// kernel: nin_forward.5
$region0: #{nin_forward.5}
  #allocation0 [shape = 'u32[]', space=smem, size = 0x4, offset = 0x4, fixed_abs, tag = 'smem constant byte address 0x4 - core index']
  #allocation1 [shape = 'u32[144,128]{1,0:T(1,128)}', space=vmem, size = 0x12000, scoped, tag = 'internal scratch']
  %s0 = inlined_call_operand.vmem [shape: bf16[3,224,128], index: 0, kind: input, shape index: {}]
  %s1 = inlined_call_operand.vmem [shape: bf16[224,128], index: 1, kind: output, shape index: {}]
  %s2 = sld [smem:[#allocation0]]
  $region14: #{nin_forward.5} parent=0
    _
  %s4 = ssub.s32 1, %s2
  %s5 = scalar_select 0, %s4, %s2
  // Predicated region
  $region2: #{nin_forward.5} parent=0 // pred_check
    _
  $region3: #{nin_forward.5} parent=0 // pred_check_branch
    %7 = sbr.rel (0) target = $region5
  $region4: #{nin_forward.5} parent=0 // pred_region
    _
  $region5: #{nin_forward.5} parent=0 // pred_fallthru
    _
  %v9 = vld [vmem:[%s0] sm:$0xf]
  %v10 = vld [vmem:[%s0 + $0x4] sm:$0xf]
  %v11 = vld [vmem:[%s0 + $0x8] sm:$0xf]
  %v12 = vld [vmem:[%s0 + $0xc] sm:$0xf]
  %v13 = vld [vmem:[%s0 + $0x10] sm:$0xf]
  %v14 = vld [vmem:[%s0 + $0x14] sm:$0xf]
  %v15 = vld [vmem:[%s0 + $0x18] sm:$0xf]
  %v16 = vld [vmem:[%s0 + $0x1c] sm:$0xf]
  %v17 = vld [vmem:[%s0 + $0x20] sm:$0xf]
  %v18 = vld [vmem:[%s0 + $0x24] sm:$0xf]
  %v19 = vld [vmem:[%s0 + $0x28] sm:$0xf]
  %v20 = vld [vmem:[%s0 + $0x2c] sm:$0xf]
  %v21 = vld [vmem:[%s0 + $0x30] sm:$0xf]
  %v22 = vld [vmem:[%s0 + $0x34] sm:$0xf]
  %v23 = vld [vmem:[%s0 + $0x38] sm:$0xf]
  %v24 = vld [vmem:[%s0 + $0x3c] sm:$0xf]
  %v25 = vld [vmem:[%s0 + $0x40] sm:$0xf]
  %v26 = vld [vmem:[%s0 + $0x44] sm:$0xf]
  %v27 = vld [vmem:[%s0 + $0x48] sm:$0xf]
  %v28 = vld [vmem:[%s0 + $0x4c] sm:$0xf]
  %v29 = vld [vmem:[%s0 + $0x50] sm:$0xf]
  %v30 = vld [vmem:[%s0 + $0x54] sm:$0xf]
  %v31 = vld [vmem:[%s0 + $0x58] sm:$0xf]
  %v32 = vld [vmem:[%s0 + $0x5c] sm:$0xf]
  %v33 = vld [vmem:[%s0 + $0x60] sm:$0xf]
  %v34 = vld [vmem:[%s0 + $0x64] sm:$0xf]
  %v35 = vld [vmem:[%s0 + $0x68] sm:$0xf]
  %v36 = vld [vmem:[%s0 + $0x6c] sm:$0xf]
  %v37 = vld [vmem:[%s0 + $0x70] sm:$0xf]
  %v38 = vld [vmem:[%s0 + $0x74] sm:$0xf]
  %v39 = vld [vmem:[%s0 + $0x78] sm:$0xf]
  %v40 = vld [vmem:[%s0 + $0x7c] sm:$0xf]
  %v41 = vld [vmem:[%s0 + $0x80] sm:$0xf]
  %v42 = vld [vmem:[%s0 + $0x84] sm:$0xf]
  %v43 = vld [vmem:[%s0 + $0x88] sm:$0xf]
  %v44 = vld [vmem:[%s0 + $0x8c] sm:$0xf]
  %v45 = vld [vmem:[%s0 + $0x90] sm:$0xf]
  %v46 = vld [vmem:[%s0 + $0x94] sm:$0xf]
  %v47 = vld [vmem:[%s0 + $0x98] sm:$0xf]
  %v48 = vld [vmem:[%s0 + $0x9c] sm:$0xf]
  %v49 = vld [vmem:[%s0 + $0xa0] sm:$0xf]
  %v50 = vld [vmem:[%s0 + $0xa4] sm:$0xf]
  %v51 = vld [vmem:[%s0 + $0xa8] sm:$0xf]
  %v52 = vld [vmem:[%s0 + $0xac] sm:$0xf]
  %v53 = vld [vmem:[%s0 + $0xb0] sm:$0xf]
  %v54 = vld [vmem:[%s0 + $0xb4] sm:$0xf]
  %v55 = vld [vmem:[%s0 + $0xb8] sm:$0xf]
  %v56 = vld [vmem:[%s0 + $0xbc] sm:$0xf]
  %v57 = vld [vmem:[%s0 + $0xc0] sm:$0xf]
  %v58 = vld [vmem:[%s0 + $0xc4] sm:$0xf]
  %v59 = vld [vmem:[%s0 + $0xc8] sm:$0xf]
  %v60 = vld [vmem:[%s0 + $0xcc] sm:$0xf]
  %v61 = vld [vmem:[%s0 + $0xd0] sm:$0xf]
  %v62 = vld [vmem:[%s0 + $0xd4] sm:$0xf]
  %v63 = vld [vmem:[%s0 + $0xd8] sm:$0xf]
  %v64 = vld [vmem:[%s0 + $0xdc] sm:$0xf]
  %v65 = vld [vmem:[%s0 + $0xe0] sm:$0xf]
  %v66 = vld [vmem:[%s0 + $0xe4] sm:$0xf]
  %v67 = vld [vmem:[%s0 + $0xe8] sm:$0xf]
  %v68 = vld [vmem:[%s0 + $0xec] sm:$0xf]
  %v69 = vld [vmem:[%s0 + $0xf0] sm:$0xf]
  %v70 = vld [vmem:[%s0 + $0xf4] sm:$0xf]
  %v71 = vld [vmem:[%s0 + $0xf8] sm:$0xf]
  %v72 = vld [vmem:[%s0 + $0xfc] sm:$0xf]
  %v73 = vld [vmem:[%s0 + $0x100] sm:$0xf]
  %v74 = vld [vmem:[%s0 + $0x104] sm:$0xf]
  %v75 = vld [vmem:[%s0 + $0x108] sm:$0xf]
  %v76 = vld [vmem:[%s0 + $0x10c] sm:$0xf]
  %v77 = vld [vmem:[%s0 + $0x110] sm:$0xf]
  %v78 = vld [vmem:[%s0 + $0x114] sm:$0xf]
  %v79 = vld [vmem:[%s0 + $0x118] sm:$0xf]
  %v80 = vld [vmem:[%s0 + $0x11c] sm:$0xf]
  %v81 = vld [vmem:[%s0 + $0x120] sm:$0xf]
  %v82 = vld [vmem:[%s0 + $0x124] sm:$0xf]
  %v83 = vld [vmem:[%s0 + $0x128] sm:$0xf]
  %v84 = vld [vmem:[%s0 + $0x12c] sm:$0xf]
  %v85 = vld [vmem:[%s0 + $0x130] sm:$0xf]
  %v86 = vld [vmem:[%s0 + $0x134] sm:$0xf]
  %v87 = vld [vmem:[%s0 + $0x138] sm:$0xf]
  %v88 = vld [vmem:[%s0 + $0x13c] sm:$0xf]
  %v89 = vld [vmem:[%s0 + $0x140] sm:$0xf]
  %v90 = vld [vmem:[%s0 + $0x144] sm:$0xf]
  %v91 = vld [vmem:[%s0 + $0x148] sm:$0xf]
  %v92 = vld [vmem:[%s0 + $0x14c] sm:$0xf]
  %vm93 = vcmask 1043456
  %v96 = vsel %vm93, %v9, 4286644096
  %v99 = vsel %vm93, %v37, 4286644096
  %v101 = vmax.bf16 %v96, %v99
  %v103 = vsel %vm93, %v65, 4286644096
  %v105 = vmax.bf16 %v101, %v103
  %v107 = vsel %vm93, %v10, 4286644096
  %v110 = vsel %vm93, %v38, 4286644096
  %v112 = vmax.bf16 %v107, %v110
  %v114 = vsel %vm93, %v66, 4286644096
  %v116 = vmax.bf16 %v112, %v114
  %v118 = vsel %vm93, %v11, 4286644096
  %v121 = vsel %vm93, %v39, 4286644096
  %v123 = vmax.bf16 %v118, %v121
  %v125 = vsel %vm93, %v67, 4286644096
  %v127 = vmax.bf16 %v123, %v125
  %v129 = vsel %vm93, %v12, 4286644096
  %v132 = vsel %vm93, %v40, 4286644096
  %v134 = vmax.bf16 %v129, %v132
  %v136 = vsel %vm93, %v68, 4286644096
  %v138 = vmax.bf16 %v134, %v136
  %v140 = vsel %vm93, %v13, 4286644096
  %v143 = vsel %vm93, %v41, 4286644096
  %v145 = vmax.bf16 %v140, %v143
  %v147 = vsel %vm93, %v69, 4286644096
  %v149 = vmax.bf16 %v145, %v147
  %v151 = vsel %vm93, %v14, 4286644096
  %v154 = vsel %vm93, %v42, 4286644096
  %v156 = vmax.bf16 %v151, %v154
  %v158 = vsel %vm93, %v70, 4286644096
  %v160 = vmax.bf16 %v156, %v158
  %v162 = vsel %vm93, %v15, 4286644096
  %v165 = vsel %vm93, %v43, 4286644096
  %v167 = vmax.bf16 %v162, %v165
  %v169 = vsel %vm93, %v71, 4286644096
  %v171 = vmax.bf16 %v167, %v169
  %v173 = vsel %vm93, %v16, 4286644096
  %v176 = vsel %vm93, %v44, 4286644096
  %v178 = vmax.bf16 %v173, %v176
  %v180 = vsel %vm93, %v72, 4286644096
  %v182 = vmax.bf16 %v178, %v180
  %v184 = vsel %vm93, %v17, 4286644096
  %v187 = vsel %vm93, %v45, 4286644096
  %v189 = vmax.bf16 %v184, %v187
  %v191 = vsel %vm93, %v73, 4286644096
  %v193 = vmax.bf16 %v189, %v191
  %v195 = vsel %vm93, %v18, 4286644096
  %v198 = vsel %vm93, %v46, 4286644096
  %v200 = vmax.bf16 %v195, %v198
  %v202 = vsel %vm93, %v74, 4286644096
  %v204 = vmax.bf16 %v200, %v202
  %v206 = vsel %vm93, %v19, 4286644096
  %v209 = vsel %vm93, %v47, 4286644096
  %v211 = vmax.bf16 %v206, %v209
  %v213 = vsel %vm93, %v75, 4286644096
  %v215 = vmax.bf16 %v211, %v213
  %v217 = vsel %vm93, %v20, 4286644096
  %v220 = vsel %vm93, %v48, 4286644096
  %v222 = vmax.bf16 %v217, %v220
  %v224 = vsel %vm93, %v76, 4286644096
  %v226 = vmax.bf16 %v222, %v224
  %v228 = vsel %vm93, %v21, 4286644096
  %v231 = vsel %vm93, %v49, 4286644096
  %v233 = vmax.bf16 %v228, %v231
  %v235 = vsel %vm93, %v77, 4286644096
  %v237 = vmax.bf16 %v233, %v235
  %v239 = vsel %vm93, %v22, 4286644096
  %v242 = vsel %vm93, %v50, 4286644096
  %v244 = vmax.bf16 %v239, %v242
  %v246 = vsel %vm93, %v78, 4286644096
  %v248 = vmax.bf16 %v244, %v246
  %v250 = vsel %vm93, %v23, 4286644096
  %v253 = vsel %vm93, %v51, 4286644096
  %v255 = vmax.bf16 %v250, %v253
  %v257 = vsel %vm93, %v79, 4286644096
  %v259 = vmax.bf16 %v255, %v257
  %v261 = vsel %vm93, %v24, 4286644096
  %v264 = vsel %vm93, %v52, 4286644096
  %v266 = vmax.bf16 %v261, %v264
  %v268 = vsel %vm93, %v80, 4286644096
  %v270 = vmax.bf16 %v266, %v268
  %v272 = vsel %vm93, %v25, 4286644096
  %v275 = vsel %vm93, %v53, 4286644096
  %v277 = vmax.bf16 %v272, %v275
  %v279 = vsel %vm93, %v81, 4286644096
  %v281 = vmax.bf16 %v277, %v279
  %v283 = vsel %vm93, %v26, 4286644096
  %v286 = vsel %vm93, %v54, 4286644096
  %v288 = vmax.bf16 %v283, %v286
  %v290 = vsel %vm93, %v82, 4286644096
  %v292 = vmax.bf16 %v288, %v290
  %v294 = vsel %vm93, %v27, 4286644096
  %v297 = vsel %vm93, %v55, 4286644096
  %v299 = vmax.bf16 %v294, %v297
  %v301 = vsel %vm93, %v83, 4286644096
  %v303 = vmax.bf16 %v299, %v301
  %v305 = vsel %vm93, %v28, 4286644096
  %v308 = vsel %vm93, %v56, 4286644096
  %v310 = vmax.bf16 %v305, %v308
  %v312 = vsel %vm93, %v84, 4286644096
  %v314 = vmax.bf16 %v310, %v312
  %v316 = vsel %vm93, %v29, 4286644096
  %v319 = vsel %vm93, %v57, 4286644096
  %v321 = vmax.bf16 %v316, %v319
  %v323 = vsel %vm93, %v85, 4286644096
  %v325 = vmax.bf16 %v321, %v323
  %v327 = vsel %vm93, %v30, 4286644096
  %v330 = vsel %vm93, %v58, 4286644096
  %v332 = vmax.bf16 %v327, %v330
  %v334 = vsel %vm93, %v86, 4286644096
  %v336 = vmax.bf16 %v332, %v334
  %v338 = vsel %vm93, %v31, 4286644096
  %v341 = vsel %vm93, %v59, 4286644096
  %v343 = vmax.bf16 %v338, %v341
  %v345 = vsel %vm93, %v87, 4286644096
  %v347 = vmax.bf16 %v343, %v345
  %v349 = vsel %vm93, %v32, 4286644096
  %v352 = vsel %vm93, %v60, 4286644096
  %v354 = vmax.bf16 %v349, %v352
  %v356 = vsel %vm93, %v88, 4286644096
  %v358 = vmax.bf16 %v354, %v356
  %v360 = vsel %vm93, %v33, 4286644096
  %v363 = vsel %vm93, %v61, 4286644096
  %v365 = vmax.bf16 %v360, %v363
  %v367 = vsel %vm93, %v89, 4286644096
  %v369 = vmax.bf16 %v365, %v367
  %v371 = vsel %vm93, %v34, 4286644096
  %v374 = vsel %vm93, %v62, 4286644096
  %v376 = vmax.bf16 %v371, %v374
  %v378 = vsel %vm93, %v90, 4286644096
  %v380 = vmax.bf16 %v376, %v378
  %v382 = vsel %vm93, %v35, 4286644096
  %v385 = vsel %vm93, %v63, 4286644096
  %v387 = vmax.bf16 %v382, %v385
  %v389 = vsel %vm93, %v91, 4286644096
  %v391 = vmax.bf16 %v387, %v389
  %v393 = vsel %vm93, %v36, 4286644096
  %v396 = vsel %vm93, %v64, 4286644096
  %v398 = vmax.bf16 %v393, %v396
  %v400 = vsel %vm93, %v92, 4286644096
  %v402 = vmax.bf16 %v398, %v400
  %403 = vst [vmem:[%s1] sm:$0xf] %v105
  %404 = vst [vmem:[%s1 + $0x4] sm:$0xf] %v116
  %405 = vst [vmem:[%s1 + $0x8] sm:$0xf] %v127
  %406 = vst [vmem:[%s1 + $0xc] sm:$0xf] %v138
  %407 = vst [vmem:[%s1 + $0x10] sm:$0xf] %v149
  %408 = vst [vmem:[%s1 + $0x14] sm:$0xf] %v160
  %409 = vst [vmem:[%s1 + $0x18] sm:$0xf] %v171
  %410 = vst [vmem:[%s1 + $0x1c] sm:$0xf] %v182
  %411 = vst [vmem:[%s1 + $0x20] sm:$0xf] %v193
  %412 = vst [vmem:[%s1 + $0x24] sm:$0xf] %v204
  %413 = vst [vmem:[%s1 + $0x28] sm:$0xf] %v215
  %414 = vst [vmem:[%s1 + $0x2c] sm:$0xf] %v226
  %415 = vst [vmem:[%s1 + $0x30] sm:$0xf] %v237
  %416 = vst [vmem:[%s1 + $0x34] sm:$0xf] %v248
  %417 = vst [vmem:[%s1 + $0x38] sm:$0xf] %v259
  %418 = vst [vmem:[%s1 + $0x3c] sm:$0xf] %v270
  %419 = vst [vmem:[%s1 + $0x40] sm:$0xf] %v281
  %420 = vst [vmem:[%s1 + $0x44] sm:$0xf] %v292
  %421 = vst [vmem:[%s1 + $0x48] sm:$0xf] %v303
  %422 = vst [vmem:[%s1 + $0x4c] sm:$0xf] %v314
  %423 = vst [vmem:[%s1 + $0x50] sm:$0xf] %v325
  %424 = vst [vmem:[%s1 + $0x54] sm:$0xf] %v336
  %425 = vst [vmem:[%s1 + $0x58] sm:$0xf] %v347
  %426 = vst [vmem:[%s1 + $0x5c] sm:$0xf] %v358
  %427 = vst [vmem:[%s1 + $0x60] sm:$0xf] %v369
  %428 = vst [vmem:[%s1 + $0x64] sm:$0xf] %v380
  %429 = vst [vmem:[%s1 + $0x68] sm:$0xf] %v391
  %430 = vst [vmem:[%s1 + $0x6c] sm:$0xf] %v402
  // Predicated region
  $region6: #{nin_forward.5} parent=0 // pred_check
    _
  $region7: #{nin_forward.5} parent=0 // pred_check_branch
    %432 = sbr.rel (0) target = $region9
  $region8: #{nin_forward.5} parent=0 // pred_region
    _
  $region9: #{nin_forward.5} parent=0 // pred_fallthru
    _
  // Predicated region
  $region10: #{nin_forward.5} parent=0 // pred_check
    _
  $region11: #{nin_forward.5} parent=0 // pred_check_branch
    %434 = sbr.rel (0) target = $region13
  $region12: #{nin_forward.5} parent=0 // pred_region
    _
  $region13: #{nin_forward.5} parent=0 // pred_fallthru
    _

// kernel: nin_forward.7
$region0: #{nin_forward.7}
  #allocation0 [shape = 'u32[]', space=smem, size = 0x4, offset = 0x4, fixed_abs, tag = 'smem constant byte address 0x4 - core index']
  #allocation1 [shape = 'u32[144,128]{1,0:T(1,128)}', space=vmem, size = 0x12000, scoped, tag = 'internal scratch']
  %s0 = inlined_call_operand.vmem [shape: bf16[2,49,1152], index: 0, kind: input, shape index: {}]
  %s1 = inlined_call_operand.vmem [shape: bf16[1152,128], index: 1, kind: input, shape index: {}]
  %s2 = inlined_call_operand.vmem [shape: f32[1,128], index: 2, kind: input, shape index: {}]
  %s3 = inlined_call_operand.vmem [shape: bf16[128,128], index: 3, kind: input, shape index: {}]
  %s4 = inlined_call_operand.vmem [shape: f32[1,128], index: 4, kind: input, shape index: {}]
  %s5 = inlined_call_operand.vmem [shape: bf16[128,128], index: 5, kind: input, shape index: {}]
  %s6 = inlined_call_operand.vmem [shape: f32[1,128], index: 6, kind: input, shape index: {}]
  %s7 = inlined_call_operand.vmem [shape: f32[2,8,128], index: 7, kind: output, shape index: {}]
  %s8 = sld [smem:[#allocation0]]
  $region61: #{nin_forward.7} parent=0
    _
  %s10 = ssub.s32 1, %s8
  %s11 = scalar_select 0, %s10, %s8
  loop: start=0, step=1, limit=4
  $region2: #{nin_forward.7} parent=0 // loop_pre_header
    _
  $region3: #{nin_forward.7} parent=0 // loop_header
    %s13 = sphi 0, %s17
    %p14 = scmp.ge.s32.totalorder %s13, 4
    %s23 = sphi 0, %s25
    %s26 = sphi 0, %s23
    %s27 = sphi 0, %s26
    %s43 = sphi 0, %s27
    %s47 = sphi 0, %s47
    %s49 = sphi 0, %s47
    %s50 = sphi 0, %s49
    %s64 = sphi 0, %s50
    %s68 = sphi 0, %s68
    %s70 = sphi 0, %s68
    %s71 = sphi 0, %s70
    %s85 = sphi 0, %s71
    %s89 = sphi 0, %s89
    %s91 = sphi 0, %s89
    %s92 = sphi 0, %s91
    %s106 = sphi 0, %s92
    %s110 = sphi 0, %s110
    %s112 = sphi 0, %s110
    %s113 = sphi 0, %s112
    %s127 = sphi 0, %s113
    %s131 = sphi 0, %s131
    %s133 = sphi 0, %s131
    %s134 = sphi 0, %s133
    %s148 = sphi 0, %s134
    %s152 = sphi 0, %s152
    %s154 = sphi 0, %s152
    %s155 = sphi 0, %s154
    %s169 = sphi 0, %s155
    %s175 = sphi 0, %s177
    %s178 = sphi 0, %s175
    %s179 = sphi 0, %s178
    %s195 = sphi 0, %s179
  $region4: #{nin_forward.7} parent=0 // loop_header_branch
    %16 = sbr.rel (%p14) target = $region8
  $region5: #{nin_forward.7} parent=0 // loop_body
    %s18 = ssub.s32 %s13, 1
    %s19 = ssub.s32 %s13, 2
    %s20 = sadd.s32 %s13, 1
    %s21 = ssub.s32 %s13, %s20
    %p22 = scmp.eq.s32.totalorder %s21, 0
    %s24 = sadd.s32 %s23, 1
    %s25 = scalar_select %p22, %s23, %s24
    %p28 = pneg %p22
    %p29 = scmp.eq.s32.totalorder %s13, 1
    %p30 = por %p28, %p29
    %p31 = scmp.ne.s32.totalorder %s23, %s26
    %p32 = scmp.eq.s32.totalorder %s13, 0
    %p33 = por %p31, %p32
    %p34 = scmp.ne.s32.totalorder %s23, %s26
    %p35 = scmp.eq.s32.totalorder %s18, 1
    %p36 = por %p34, %p35
    %p37 = scmp.ne.s32.totalorder %s26, %s27
    %p38 = scmp.eq.s32.totalorder %s18, 0
    %p39 = por %p37, %p38
    %p40 = scmp.ne.s32.totalorder %s26, %s27
    %p41 = scmp.eq.s32.totalorder %s19, 1
    %p42 = por %p40, %p41
    %p44 = scmp.ne.s32.totalorder %s27, %s43
    %p45 = scmp.eq.s32.totalorder %s19, 0
    %p46 = por %p44, %p45
    %s48 = sadd.s32 %s47, 1
    %p51 = scmp.eq.s32.totalorder %s13, 1
    %p52 = scmp.ne.s32.totalorder %s47, %s49
    %p53 = scmp.eq.s32.totalorder %s13, 0
    %p54 = por %p52, %p53
    %p55 = scmp.ne.s32.totalorder %s47, %s49
    %p56 = scmp.eq.s32.totalorder %s18, 1
    %p57 = por %p55, %p56
    %p58 = scmp.ne.s32.totalorder %s49, %s50
    %p59 = scmp.eq.s32.totalorder %s18, 0
    %p60 = por %p58, %p59
    %p61 = scmp.ne.s32.totalorder %s49, %s50
    %p62 = scmp.eq.s32.totalorder %s19, 1
    %p63 = por %p61, %p62
    %p65 = scmp.ne.s32.totalorder %s50, %s64
    %p66 = scmp.eq.s32.totalorder %s19, 0
    %p67 = por %p65, %p66
    %s69 = sadd.s32 %s68, 1
    %p72 = scmp.eq.s32.totalorder %s13, 1
    %p73 = scmp.ne.s32.totalorder %s68, %s70
    %p74 = scmp.eq.s32.totalorder %s13, 0
    %p75 = por %p73, %p74
    %p76 = scmp.ne.s32.totalorder %s68, %s70
    %p77 = scmp.eq.s32.totalorder %s18, 1
    %p78 = por %p76, %p77
    %p79 = scmp.ne.s32.totalorder %s70, %s71
    %p80 = scmp.eq.s32.totalorder %s18, 0
    %p81 = por %p79, %p80
    %p82 = scmp.ne.s32.totalorder %s70, %s71
    %p83 = scmp.eq.s32.totalorder %s19, 1
    %p84 = por %p82, %p83
    %p86 = scmp.ne.s32.totalorder %s71, %s85
    %p87 = scmp.eq.s32.totalorder %s19, 0
    %p88 = por %p86, %p87
    %s90 = sadd.s32 %s89, 1
    %p93 = scmp.eq.s32.totalorder %s13, 1
    %p94 = scmp.ne.s32.totalorder %s89, %s91
    %p95 = scmp.eq.s32.totalorder %s13, 0
    %p96 = por %p94, %p95
    %p97 = scmp.ne.s32.totalorder %s89, %s91
    %p98 = scmp.eq.s32.totalorder %s18, 1
    %p99 = por %p97, %p98
    %p100 = scmp.ne.s32.totalorder %s91, %s92
    %p101 = scmp.eq.s32.totalorder %s18, 0
    %p102 = por %p100, %p101
    %p103 = scmp.ne.s32.totalorder %s91, %s92
    %p104 = scmp.eq.s32.totalorder %s19, 1
    %p105 = por %p103, %p104
    %p107 = scmp.ne.s32.totalorder %s92, %s106
    %p108 = scmp.eq.s32.totalorder %s19, 0
    %p109 = por %p107, %p108
    %s111 = sadd.s32 %s110, 1
    %p114 = scmp.eq.s32.totalorder %s13, 1
    %p115 = scmp.ne.s32.totalorder %s110, %s112
    %p116 = scmp.eq.s32.totalorder %s13, 0
    %p117 = por %p115, %p116
    %p118 = scmp.ne.s32.totalorder %s110, %s112
    %p119 = scmp.eq.s32.totalorder %s18, 1
    %p120 = por %p118, %p119
    %p121 = scmp.ne.s32.totalorder %s112, %s113
    %p122 = scmp.eq.s32.totalorder %s18, 0
    %p123 = por %p121, %p122
    %p124 = scmp.ne.s32.totalorder %s112, %s113
    %p125 = scmp.eq.s32.totalorder %s19, 1
    %p126 = por %p124, %p125
    %p128 = scmp.ne.s32.totalorder %s113, %s127
    %p129 = scmp.eq.s32.totalorder %s19, 0
    %p130 = por %p128, %p129
    %s132 = sadd.s32 %s131, 1
    %p135 = scmp.eq.s32.totalorder %s13, 1
    %p136 = scmp.ne.s32.totalorder %s131, %s133
    %p137 = scmp.eq.s32.totalorder %s13, 0
    %p138 = por %p136, %p137
    %p139 = scmp.ne.s32.totalorder %s131, %s133
    %p140 = scmp.eq.s32.totalorder %s18, 1
    %p141 = por %p139, %p140
    %p142 = scmp.ne.s32.totalorder %s133, %s134
    %p143 = scmp.eq.s32.totalorder %s18, 0
    %p144 = por %p142, %p143
    %p145 = scmp.ne.s32.totalorder %s133, %s134
    %p146 = scmp.eq.s32.totalorder %s19, 1
    %p147 = por %p145, %p146
    %p149 = scmp.ne.s32.totalorder %s134, %s148
    %p150 = scmp.eq.s32.totalorder %s19, 0
    %p151 = por %p149, %p150
    %s153 = sadd.s32 %s152, 1
    %p156 = scmp.eq.s32.totalorder %s13, 1
    %p157 = scmp.ne.s32.totalorder %s152, %s154
    %p158 = scmp.eq.s32.totalorder %s13, 0
    %p159 = por %p157, %p158
    %p160 = scmp.ne.s32.totalorder %s152, %s154
    %p161 = scmp.eq.s32.totalorder %s18, 1
    %p162 = por %p160, %p161
    %p163 = scmp.ne.s32.totalorder %s154, %s155
    %p164 = scmp.eq.s32.totalorder %s18, 0
    %p165 = por %p163, %p164
    %p166 = scmp.ne.s32.totalorder %s154, %s155
    %p167 = scmp.eq.s32.totalorder %s19, 1
    %p168 = por %p166, %p167
    %p170 = scmp.ne.s32.totalorder %s155, %s169
    %p171 = scmp.eq.s32.totalorder %s19, 0
    %p172 = por %p170, %p171
    %s173 = ssub.s32 %s13, %s20
    %p174 = scmp.eq.s32.totalorder %s173, 0
    %s176 = sadd.s32 %s175, 1
    %s177 = scalar_select %p174, %s175, %s176
    %p180 = pneg %p174
    %p181 = scmp.eq.s32.totalorder %s13, 1
    %p182 = por %p180, %p181
    %p183 = scmp.ne.s32.totalorder %s175, %s178
    %p184 = scmp.eq.s32.totalorder %s13, 0
    %p185 = por %p183, %p184
    %p186 = scmp.ne.s32.totalorder %s175, %s178
    %p187 = scmp.eq.s32.totalorder %s18, 1
    %p188 = por %p186, %p187
    %p189 = scmp.ne.s32.totalorder %s178, %s179
    %p190 = scmp.eq.s32.totalorder %s18, 0
    %p191 = por %p189, %p190
    %p192 = scmp.ne.s32.totalorder %s178, %s179
    %p193 = scmp.eq.s32.totalorder %s19, 1
    %p194 = por %p192, %p193
    %p196 = scmp.ne.s32.totalorder %s179, %s195
    %p197 = scmp.eq.s32.totalorder %s19, 0
    %p198 = por %p196, %p197
    %p199 = scmp.le.s32.totalorder 1, %s13
    %p200 = scmp.lt.s32.totalorder %s13, 3
    %p201 = pnand %p199, %p200
    %p202 = pneg %p201
    // Predicated region
    $region9: #{nin_forward.7} parent=5 // pred_check
      _
    $region10: #{nin_forward.7} parent=5 // pred_check_branch
      %204 = sbr.rel (%p201) target = $region12
    $region11: #{nin_forward.7} parent=5 // pred_region
      %s205 = ssub.s32 %s13, 1
      // Predicated region
      $region13: #{nin_forward.7} parent=11 // pred_check
        %p206 = pneg %p60
      $region14: #{nin_forward.7} parent=11 // pred_check_branch
        %208 = sbr.rel (%p206) target = $region16
      $region15: #{nin_forward.7} parent=11 // pred_region
        _
      $region16: #{nin_forward.7} parent=11 // pred_fallthru
        _
      // Predicated region
      $region17: #{nin_forward.7} parent=11 // pred_check
        %p209 = pneg %p81
      $region18: #{nin_forward.7} parent=11 // pred_check_branch
        %211 = sbr.rel (%p209) target = $region20
      $region19: #{nin_forward.7} parent=11 // pred_region
        _
      $region20: #{nin_forward.7} parent=11 // pred_fallthru
        _
      // Predicated region
      $region21: #{nin_forward.7} parent=11 // pred_check
        %p212 = pneg %p102
      $region22: #{nin_forward.7} parent=11 // pred_check_branch
        %214 = sbr.rel (%p212) target = $region24
      $region23: #{nin_forward.7} parent=11 // pred_region
        _
      $region24: #{nin_forward.7} parent=11 // pred_fallthru
        _
      // Predicated region
      $region25: #{nin_forward.7} parent=11 // pred_check
        %p215 = pneg %p123
      $region26: #{nin_forward.7} parent=11 // pred_check_branch
        %217 = sbr.rel (%p215) target = $region28
      $region27: #{nin_forward.7} parent=11 // pred_region
        _
      $region28: #{nin_forward.7} parent=11 // pred_fallthru
        _
      // Predicated region
      $region29: #{nin_forward.7} parent=11 // pred_check
        %p218 = pneg %p144
      $region30: #{nin_forward.7} parent=11 // pred_check_branch
        %220 = sbr.rel (%p218) target = $region32
      $region31: #{nin_forward.7} parent=11 // pred_region
        _
      $region32: #{nin_forward.7} parent=11 // pred_fallthru
        _
      // Predicated region
      $region33: #{nin_forward.7} parent=11 // pred_check
        %p221 = pneg %p165
      $region34: #{nin_forward.7} parent=11 // pred_check_branch
        %223 = sbr.rel (%p221) target = $region36
      $region35: #{nin_forward.7} parent=11 // pred_region
        _
      $region36: #{nin_forward.7} parent=11 // pred_fallthru
        _
    $region12: #{nin_forward.7} parent=5 // pred_fallthru
      _
    %p224 = scmp.lt.s32.totalorder %s13, 2
    // Predicated region
    $region37: #{nin_forward.7} parent=5 // pred_check
      %p225 = pneg %p224
    $region38: #{nin_forward.7} parent=5 // pred_check_branch
      %227 = sbr.rel (%p225) target = $region40
    $region39: #{nin_forward.7} parent=5 // pred_region
      // Predicated region
      $region41: #{nin_forward.7} parent=39 // pred_check
        %p228 = pneg %p33
      $region42: #{nin_forward.7} parent=39 // pred_check_branch
        %230 = sbr.rel (%p228) target = $region44
      $region43: #{nin_forward.7} parent=39 // pred_region
        %p231 = scmp.lt.s32.totalorder %s13, 1
        %s232 = scalar_select %p231, %s13, 1
        %s233 = smul.addr %s232, 63
        %s234 = smul.addr %s233, 4
        %s235 = scalar_lea.vmem %s0, %s234
      $region44: #{nin_forward.7} parent=39 // pred_fallthru
        _
    $region40: #{nin_forward.7} parent=5 // pred_fallthru
      _
    %p236 = scmp.le.s32.totalorder 1, %s13
    %p237 = scmp.lt.s32.totalorder %s13, 3
    %p238 = pnand %p236, %p237
    %p239 = pneg %p238
    // Predicated region
    $region45: #{nin_forward.7} parent=5 // pred_check
      _
    $region46: #{nin_forward.7} parent=5 // pred_check_branch
      %241 = sbr.rel (%p238) target = $region48
    $region47: #{nin_forward.7} parent=5 // pred_region
      %s242 = ssub.s32 %s13, 1
      %p243 = scmp.lt.s32.totalorder %s18, 1
      %s244 = scalar_select %p243, %s18, 1
      %s245 = smul.addr %s244, 63
      %s246 = smul.addr %s245, 4
      %s247 = scalar_lea.vmem %s0, %s246
      %p248 = pneg %p39
      %p249 = pneg %p36
      %p250 = pneg %p60
      %p251 = pneg %p57
      %p252 = pneg %p81
      %p253 = pneg %p78
      %p254 = pneg %p102
      %p255 = pneg %p99
      %p256 = pneg %p123
      %p257 = pneg %p120
      %p258 = pneg %p144
      %p259 = pneg %p141
      %p260 = pneg %p165
      %p261 = pneg %p162
      %p262 = pneg %p191
      %p263 = pneg %p188
      %p264 = scmp.lt.s32.totalorder %s18, 1
      %s265 = scalar_select %p264, %s18, 1
      %s266 = smul.addr %s265, 8
      %s267 = scalar_lea.vmem %s7, %s266
      %p268 = scmp.lt.s32.totalorder %s18, 1
      %s269 = scalar_select %p268, %s18, 1
      %s270 = smul.addr %s269, 63
      %s271 = smul.addr %s270, 4
      %s272 = scalar_lea.vmem %s0, %s271
      %p273 = scmp.lt.s32.totalorder %s18, 1
      %s274 = scalar_select %p273, %s18, 1
      %s275 = smul.addr %s274, 8
      %s276 = scalar_lea.vmem %s7, %s275
      %v278 = vld [vmem:[%s272] sm:$0xff]
      %v279 = vld [vmem:[%s272 + $0x8] sm:$0xff]
      %v280 = vld [vmem:[%s272 + $0x10] sm:$0xff]
      %v281 = vld [vmem:[%s272 + $0x18] sm:$0xff]
      %v282 = vld [vmem:[%s272 + $0x20] sm:$0xf]
      %v283 = vld [vmem:[%s272 + $0x24] sm:$0xff]
      %v284 = vld [vmem:[%s272 + $0x2c] sm:$0xff]
      %v285 = vld [vmem:[%s272 + $0x34] sm:$0xff]
      %v286 = vld [vmem:[%s272 + $0x3c] sm:$0xff]
      %v287 = vld [vmem:[%s272 + $0x44] sm:$0xf]
      %v288 = vld [vmem:[%s272 + $0x48] sm:$0xff]
      %v289 = vld [vmem:[%s272 + $0x50] sm:$0xff]
      %v290 = vld [vmem:[%s272 + $0x58] sm:$0xff]
      %v291 = vld [vmem:[%s272 + $0x60] sm:$0xff]
      %v292 = vld [vmem:[%s272 + $0x68] sm:$0xf]
      %v293 = vld [vmem:[%s272 + $0x6c] sm:$0xff]
      %v294 = vld [vmem:[%s272 + $0x74] sm:$0xff]
      %v295 = vld [vmem:[%s272 + $0x7c] sm:$0xff]
      %v296 = vld [vmem:[%s272 + $0x84] sm:$0xff]
      %v297 = vld [vmem:[%s272 + $0x8c] sm:$0xf]
      %v298 = vld [vmem:[%s272 + $0x90] sm:$0xff]
      %v299 = vld [vmem:[%s272 + $0x98] sm:$0xff]
      %v300 = vld [vmem:[%s272 + $0xa0] sm:$0xff]
      %v301 = vld [vmem:[%s272 + $0xa8] sm:$0xff]
      %v302 = vld [vmem:[%s272 + $0xb0] sm:$0xf]
      %v303 = vld [vmem:[%s272 + $0xb4] sm:$0xff]
      %v304 = vld [vmem:[%s272 + $0xbc] sm:$0xff]
      %v305 = vld [vmem:[%s272 + $0xc4] sm:$0xff]
      %v306 = vld [vmem:[%s272 + $0xcc] sm:$0xff]
      %v307 = vld [vmem:[%s272 + $0xd4] sm:$0xf]
      %v308 = vld [vmem:[%s272 + $0xd8] sm:$0x11]
      %v309 = vld [vmem:[%s272 + $0xe0] sm:$0x11]
      %v310 = vld [vmem:[%s272 + $0xe8] sm:$0x11]
      %v311 = vld [vmem:[%s272 + $0xf0] sm:$0x11]
      %v312 = vld [vmem:[%s272 + $0xf8] sm:$0x1]
      %v313 = vld [vmem:[%s1] sm:$0xf]
      %v314 = vld [vmem:[%s1 + $0x4] sm:$0xf]
      %v315 = vld [vmem:[%s1 + $0x8] sm:$0xf]
      %v316 = vld [vmem:[%s1 + $0xc] sm:$0xf]
      %v317 = vld [vmem:[%s1 + $0x10] sm:$0xf]
      %v318 = vld [vmem:[%s1 + $0x14] sm:$0xf]
      %v319 = vld [vmem:[%s1 + $0x18] sm:$0xf]
      %v320 = vld [vmem:[%s1 + $0x1c] sm:$0xf]
      %v321 = vld [vmem:[%s1 + $0x20] sm:$0xf]
      %v322 = vld [vmem:[%s1 + $0x24] sm:$0xf]
      %v323 = vld [vmem:[%s1 + $0x28] sm:$0xf]
      %v324 = vld [vmem:[%s1 + $0x2c] sm:$0xf]
      %v325 = vld [vmem:[%s1 + $0x30] sm:$0xf]
      %v326 = vld [vmem:[%s1 + $0x34] sm:$0xf]
      %v327 = vld [vmem:[%s1 + $0x38] sm:$0xf]
      %v328 = vld [vmem:[%s1 + $0x3c] sm:$0xf]
      %v329 = vld [vmem:[%s1 + $0x40] sm:$0xf]
      %v330 = vld [vmem:[%s1 + $0x44] sm:$0xf]
      %v331 = vld [vmem:[%s1 + $0x48] sm:$0xf]
      %v332 = vld [vmem:[%s1 + $0x4c] sm:$0xf]
      %v333 = vld [vmem:[%s1 + $0x50] sm:$0xf]
      %v334 = vld [vmem:[%s1 + $0x54] sm:$0xf]
      %v335 = vld [vmem:[%s1 + $0x58] sm:$0xf]
      %v336 = vld [vmem:[%s1 + $0x5c] sm:$0xf]
      %v337 = vld [vmem:[%s1 + $0x60] sm:$0xf]
      %v338 = vld [vmem:[%s1 + $0x64] sm:$0xf]
      %v339 = vld [vmem:[%s1 + $0x68] sm:$0xf]
      %v340 = vld [vmem:[%s1 + $0x6c] sm:$0xf]
      %v341 = vld [vmem:[%s1 + $0x70] sm:$0xf]
      %v342 = vld [vmem:[%s1 + $0x74] sm:$0xf]
      %v343 = vld [vmem:[%s1 + $0x78] sm:$0xf]
      %v344 = vld [vmem:[%s1 + $0x7c] sm:$0xf]
      %v345 = vld [vmem:[%s1 + $0x80] sm:$0xf]
      %v346 = vld [vmem:[%s1 + $0x84] sm:$0xf]
      %v347 = vld [vmem:[%s1 + $0x88] sm:$0xf]
      %v348 = vld [vmem:[%s1 + $0x8c] sm:$0xf]
      %v349 = vld [vmem:[%s1 + $0x90] sm:$0xf]
      %v350 = vld [vmem:[%s1 + $0x94] sm:$0xf]
      %v351 = vld [vmem:[%s1 + $0x98] sm:$0xf]
      %v352 = vld [vmem:[%s1 + $0x9c] sm:$0xf]
      %v353 = vld [vmem:[%s1 + $0xa0] sm:$0xf]
      %v354 = vld [vmem:[%s1 + $0xa4] sm:$0xf]
      %v355 = vld [vmem:[%s1 + $0xa8] sm:$0xf]
      %v356 = vld [vmem:[%s1 + $0xac] sm:$0xf]
      %v357 = vld [vmem:[%s1 + $0xb0] sm:$0xf]
      %v358 = vld [vmem:[%s1 + $0xb4] sm:$0xf]
      %v359 = vld [vmem:[%s1 + $0xb8] sm:$0xf]
      %v360 = vld [vmem:[%s1 + $0xbc] sm:$0xf]
      %v361 = vld [vmem:[%s1 + $0xc0] sm:$0xf]
      %v362 = vld [vmem:[%s1 + $0xc4] sm:$0xf]
      %v363 = vld [vmem:[%s1 + $0xc8] sm:$0xf]
      %v364 = vld [vmem:[%s1 + $0xcc] sm:$0xf]
      %v365 = vld [vmem:[%s1 + $0xd0] sm:$0xf]
      %v366 = vld [vmem:[%s1 + $0xd4] sm:$0xf]
      %v367 = vld [vmem:[%s1 + $0xd8] sm:$0xf]
      %v368 = vld [vmem:[%s1 + $0xdc] sm:$0xf]
      %v369 = vld [vmem:[%s1 + $0xe0] sm:$0xf]
      %v370 = vld [vmem:[%s1 + $0xe4] sm:$0xf]
      %v371 = vld [vmem:[%s1 + $0xe8] sm:$0xf]
      %v372 = vld [vmem:[%s1 + $0xec] sm:$0xf]
      %v373 = vld [vmem:[%s1 + $0xf0] sm:$0xf]
      %v374 = vld [vmem:[%s1 + $0xf4] sm:$0xf]
      %v375 = vld [vmem:[%s1 + $0xf8] sm:$0xf]
      %v376 = vld [vmem:[%s1 + $0xfc] sm:$0xf]
      %v377 = vld [vmem:[%s1 + $0x100] sm:$0xf]
      %v378 = vld [vmem:[%s1 + $0x104] sm:$0xf]
      %v379 = vld [vmem:[%s1 + $0x108] sm:$0xf]
      %v380 = vld [vmem:[%s1 + $0x10c] sm:$0xf]
      %v381 = vld [vmem:[%s1 + $0x110] sm:$0xf]
      %v382 = vld [vmem:[%s1 + $0x114] sm:$0xf]
      %v383 = vld [vmem:[%s1 + $0x118] sm:$0xf]
      %v384 = vld [vmem:[%s1 + $0x11c] sm:$0xf]
      %v385 = vld [vmem:[%s1 + $0x120] sm:$0xf]
      %v386 = vld [vmem:[%s1 + $0x124] sm:$0xf]
      %v387 = vld [vmem:[%s1 + $0x128] sm:$0xf]
      %v388 = vld [vmem:[%s1 + $0x12c] sm:$0xf]
      %v389 = vld [vmem:[%s1 + $0x130] sm:$0xf]
      %v390 = vld [vmem:[%s1 + $0x134] sm:$0xf]
      %v391 = vld [vmem:[%s1 + $0x138] sm:$0xf]
      %v392 = vld [vmem:[%s1 + $0x13c] sm:$0xf]
      %v393 = vld [vmem:[%s1 + $0x140] sm:$0xf]
      %v394 = vld [vmem:[%s1 + $0x144] sm:$0xf]
      %v395 = vld [vmem:[%s1 + $0x148] sm:$0xf]
      %v396 = vld [vmem:[%s1 + $0x14c] sm:$0xf]
      %v397 = vld [vmem:[%s1 + $0x150] sm:$0xf]
      %v398 = vld [vmem:[%s1 + $0x154] sm:$0xf]
      %v399 = vld [vmem:[%s1 + $0x158] sm:$0xf]
      %v400 = vld [vmem:[%s1 + $0x15c] sm:$0xf]
      %v401 = vld [vmem:[%s1 + $0x160] sm:$0xf]
      %v402 = vld [vmem:[%s1 + $0x164] sm:$0xf]
      %v403 = vld [vmem:[%s1 + $0x168] sm:$0xf]
      %v404 = vld [vmem:[%s1 + $0x16c] sm:$0xf]
      %v405 = vld [vmem:[%s1 + $0x170] sm:$0xf]
      %v406 = vld [vmem:[%s1 + $0x174] sm:$0xf]
      %v407 = vld [vmem:[%s1 + $0x178] sm:$0xf]
      %v408 = vld [vmem:[%s1 + $0x17c] sm:$0xf]
      %v409 = vld [vmem:[%s1 + $0x180] sm:$0xf]
      %v410 = vld [vmem:[%s1 + $0x184] sm:$0xf]
      %v411 = vld [vmem:[%s1 + $0x188] sm:$0xf]
      %v412 = vld [vmem:[%s1 + $0x18c] sm:$0xf]
      %v413 = vld [vmem:[%s1 + $0x190] sm:$0xf]
      %v414 = vld [vmem:[%s1 + $0x194] sm:$0xf]
      %v415 = vld [vmem:[%s1 + $0x198] sm:$0xf]
      %v416 = vld [vmem:[%s1 + $0x19c] sm:$0xf]
      %v417 = vld [vmem:[%s1 + $0x1a0] sm:$0xf]
      %v418 = vld [vmem:[%s1 + $0x1a4] sm:$0xf]
      %v419 = vld [vmem:[%s1 + $0x1a8] sm:$0xf]
      %v420 = vld [vmem:[%s1 + $0x1ac] sm:$0xf]
      %v421 = vld [vmem:[%s1 + $0x1b0] sm:$0xf]
      %v422 = vld [vmem:[%s1 + $0x1b4] sm:$0xf]
      %v423 = vld [vmem:[%s1 + $0x1b8] sm:$0xf]
      %v424 = vld [vmem:[%s1 + $0x1bc] sm:$0xf]
      %v425 = vld [vmem:[%s1 + $0x1c0] sm:$0xf]
      %v426 = vld [vmem:[%s1 + $0x1c4] sm:$0xf]
      %v427 = vld [vmem:[%s1 + $0x1c8] sm:$0xf]
      %v428 = vld [vmem:[%s1 + $0x1cc] sm:$0xf]
      %v429 = vld [vmem:[%s1 + $0x1d0] sm:$0xf]
      %v430 = vld [vmem:[%s1 + $0x1d4] sm:$0xf]
      %v431 = vld [vmem:[%s1 + $0x1d8] sm:$0xf]
      %v432 = vld [vmem:[%s1 + $0x1dc] sm:$0xf]
      %v433 = vld [vmem:[%s1 + $0x1e0] sm:$0xf]
      %v434 = vld [vmem:[%s1 + $0x1e4] sm:$0xf]
      %v435 = vld [vmem:[%s1 + $0x1e8] sm:$0xf]
      %v436 = vld [vmem:[%s1 + $0x1ec] sm:$0xf]
      %v437 = vld [vmem:[%s1 + $0x1f0] sm:$0xf]
      %v438 = vld [vmem:[%s1 + $0x1f4] sm:$0xf]
      %v439 = vld [vmem:[%s1 + $0x1f8] sm:$0xf]
      %v440 = vld [vmem:[%s1 + $0x1fc] sm:$0xf]
      %v441 = vld [vmem:[%s1 + $0x200] sm:$0xf]
      %v442 = vld [vmem:[%s1 + $0x204] sm:$0xf]
      %v443 = vld [vmem:[%s1 + $0x208] sm:$0xf]
      %v444 = vld [vmem:[%s1 + $0x20c] sm:$0xf]
      %v445 = vld [vmem:[%s1 + $0x210] sm:$0xf]
      %v446 = vld [vmem:[%s1 + $0x214] sm:$0xf]
      %v447 = vld [vmem:[%s1 + $0x218] sm:$0xf]
      %v448 = vld [vmem:[%s1 + $0x21c] sm:$0xf]
      %v449 = vld [vmem:[%s1 + $0x220] sm:$0xf]
      %v450 = vld [vmem:[%s1 + $0x224] sm:$0xf]
      %v451 = vld [vmem:[%s1 + $0x228] sm:$0xf]
      %v452 = vld [vmem:[%s1 + $0x22c] sm:$0xf]
      %v453 = vld [vmem:[%s1 + $0x230] sm:$0xf]
      %v454 = vld [vmem:[%s1 + $0x234] sm:$0xf]
      %v455 = vld [vmem:[%s1 + $0x238] sm:$0xf]
      %v456 = vld [vmem:[%s1 + $0x23c] sm:$0xf]
      %v457 = vld [vmem:[%s2] sm:$0x1]
      %v459 = vlaneseq
      %v460 = vshrl.u32 %v459, 7
      %v461 = vsub.s32 0, %v460
      %v462 = vrot.slane %v457, %v461
      %v499 = vunpack.c.l.b16 %v278
      %v500 = vunpack.c.h.b16 %v278
      %v501 = vunpack.c.l.b16 %v279
      %v502 = vunpack.c.h.b16 %v279
      %v503 = vunpack.c.l.b16 %v280
      %v504 = vunpack.c.h.b16 %v280
      %v505 = vunpack.c.l.b16 %v281
      %v506 = vunpack.c.h.b16 %v281
      %v507 = vunpack.c.l.b16 %v282
      %v508 = vunpack.c.l.b16 %v283
      %v509 = vunpack.c.h.b16 %v283
      %v510 = vunpack.c.l.b16 %v284
      %v511 = vunpack.c.h.b16 %v284
      %v512 = vunpack.c.l.b16 %v285
      %v513 = vunpack.c.h.b16 %v285
      %v514 = vunpack.c.l.b16 %v286
      %v515 = vunpack.c.h.b16 %v286
      %v516 = vunpack.c.l.b16 %v287
      %v517 = vunpack.c.l.b16 %v288
      %v518 = vunpack.c.h.b16 %v288
      %v519 = vunpack.c.l.b16 %v289
      %v520 = vunpack.c.h.b16 %v289
      %v521 = vunpack.c.l.b16 %v290
      %v522 = vunpack.c.h.b16 %v290
      %v523 = vunpack.c.l.b16 %v291
      %v524 = vunpack.c.h.b16 %v291
      %v525 = vunpack.c.l.b16 %v292
      %v526 = vunpack.c.l.b16 %v293
      %v527 = vunpack.c.h.b16 %v293
      %v528 = vunpack.c.l.b16 %v294
      %v529 = vunpack.c.h.b16 %v294
      %v530 = vunpack.c.l.b16 %v295
      %v531 = vunpack.c.h.b16 %v295
      %v532 = vunpack.c.l.b16 %v296
      %v533 = vunpack.c.h.b16 %v296
      %v534 = vunpack.c.l.b16 %v297
      %v535 = vunpack.c.l.b16 %v298
      %v536 = vunpack.c.h.b16 %v298
      %v537 = vunpack.c.l.b16 %v299
      %v538 = vunpack.c.h.b16 %v299
      %v539 = vunpack.c.l.b16 %v300
      %v540 = vunpack.c.h.b16 %v300
      %v541 = vunpack.c.l.b16 %v301
      %v542 = vunpack.c.h.b16 %v301
      %v543 = vunpack.c.l.b16 %v302
      %v544 = vunpack.c.l.b16 %v303
      %v545 = vunpack.c.h.b16 %v303
      %v546 = vunpack.c.l.b16 %v304
      %v547 = vunpack.c.h.b16 %v304
      %v548 = vunpack.c.l.b16 %v305
      %v549 = vunpack.c.h.b16 %v305
      %v550 = vunpack.c.l.b16 %v306
      %v551 = vunpack.c.h.b16 %v306
      %v552 = vunpack.c.l.b16 %v307
      %v553 = vunpack.c.l.b16 %v308
      %v554 = vunpack.c.h.b16 %v308
      %v555 = vunpack.c.l.b16 %v309
      %v556 = vunpack.c.h.b16 %v309
      %v557 = vunpack.c.l.b16 %v310
      %v558 = vunpack.c.h.b16 %v310
      %v559 = vunpack.c.l.b16 %v311
      %v560 = vunpack.c.h.b16 %v311
      %v561 = vunpack.c.l.b16 %v312
      %v562 = vpack.c.b16 %v508, %v499
      %v563 = vpack.c.b16 %v509, %v500
      %v564 = vpack.c.b16 %v510, %v501
      %v565 = vpack.c.b16 %v511, %v502
      %v566 = vpack.c.b16 %v512, %v503
      %v567 = vpack.c.b16 %v513, %v504
      %v568 = vpack.c.b16 %v514, %v505
      %v569 = vpack.c.b16 %v515, %v506
      %v570 = vpack.c.b16 %v516, %v507
      %v571 = vpack.c.b16 %v526, %v517
      %v572 = vpack.c.b16 %v527, %v518
      %v573 = vpack.c.b16 %v528, %v519
      %v574 = vpack.c.b16 %v529, %v520
      %v575 = vpack.c.b16 %v530, %v521
      %v576 = vpack.c.b16 %v531, %v522
      %v577 = vpack.c.b16 %v532, %v523
      %v578 = vpack.c.b16 %v533, %v524
      %v579 = vpack.c.b16 %v534, %v525
      %v580 = vpack.c.b16 %v544, %v535
      %v581 = vpack.c.b16 %v545, %v536
      %v582 = vpack.c.b16 %v546, %v537
      %v583 = vpack.c.b16 %v547, %v538
      %v584 = vpack.c.b16 %v548, %v539
      %v585 = vpack.c.b16 %v549, %v540
      %v586 = vpack.c.b16 %v550, %v541
      %v587 = vpack.c.b16 %v551, %v542
      %v588 = vpack.c.b16 %v552, %v543
      %v589 = vpack.c.b16 %v553, %v553
      %v590 = vpack.c.b16 %v554, %v554
      %v591 = vpack.c.b16 %v555, %v555
      %v592 = vpack.c.b16 %v556, %v556
      %v593 = vpack.c.b16 %v557, %v557
      %v594 = vpack.c.b16 %v558, %v558
      %v595 = vpack.c.b16 %v559, %v559
      %v596 = vpack.c.b16 %v560, %v560
      %v597 = vpack.c.b16 %v561, %v561
      %v778 = vunpack.c.l.b16 %v313
      %v779 = vunpack.c.l.b16 %v314
      %v780 = vunpack.c.l.b16 %v315
      %v781 = vunpack.c.l.b16 %v316
      %v782 = vunpack.c.l.b16 %v317
      %v783 = vunpack.c.l.b16 %v318
      %v784 = vunpack.c.l.b16 %v319
      %v785 = vunpack.c.l.b16 %v320
      %v786 = vunpack.c.l.b16 %v321
      %v787 = vunpack.c.l.b16 %v322
      %v788 = vunpack.c.l.b16 %v323
      %v789 = vunpack.c.l.b16 %v324
      %v790 = vunpack.c.l.b16 %v325
      %v791 = vunpack.c.l.b16 %v326
      %v792 = vunpack.c.l.b16 %v327
      %v793 = vunpack.c.l.b16 %v328
      %v794 = vunpack.c.l.b16 %v329
      %v795 = vunpack.c.l.b16 %v330
      %v796 = vunpack.c.l.b16 %v331
      %v797 = vunpack.c.l.b16 %v332
      %v798 = vunpack.c.l.b16 %v333
      %v799 = vunpack.c.l.b16 %v334
      %v800 = vunpack.c.l.b16 %v335
      %v801 = vunpack.c.l.b16 %v336
      %v802 = vunpack.c.l.b16 %v337
      %v803 = vunpack.c.l.b16 %v338
      %v804 = vunpack.c.l.b16 %v339
      %v805 = vunpack.c.l.b16 %v340
      %v806 = vunpack.c.l.b16 %v341
      %v807 = vunpack.c.l.b16 %v342
      %v808 = vunpack.c.l.b16 %v343
      %v809 = vunpack.c.l.b16 %v344
      %v810 = vunpack.c.l.b16 %v345
      %v811 = vunpack.c.l.b16 %v346
      %v812 = vunpack.c.l.b16 %v347
      %v813 = vunpack.c.l.b16 %v348
      %v814 = vunpack.c.l.b16 %v349
      %v815 = vunpack.c.l.b16 %v350
      %v816 = vunpack.c.l.b16 %v351
      %v817 = vunpack.c.l.b16 %v352
      %v818 = vunpack.c.l.b16 %v353
      %v819 = vunpack.c.l.b16 %v354
      %v820 = vunpack.c.l.b16 %v355
      %v821 = vunpack.c.l.b16 %v356
      %v822 = vunpack.c.l.b16 %v357
      %v823 = vunpack.c.l.b16 %v358
      %v824 = vunpack.c.l.b16 %v359
      %v825 = vunpack.c.l.b16 %v360
      %v826 = vunpack.c.l.b16 %v361
      %v827 = vunpack.c.l.b16 %v362
      %v828 = vunpack.c.l.b16 %v363
      %v829 = vunpack.c.l.b16 %v364
      %v830 = vunpack.c.l.b16 %v365
      %v831 = vunpack.c.l.b16 %v366
      %v832 = vunpack.c.l.b16 %v367
      %v833 = vunpack.c.l.b16 %v368
      %v834 = vunpack.c.l.b16 %v369
      %v835 = vunpack.c.l.b16 %v370
      %v836 = vunpack.c.l.b16 %v371
      %v837 = vunpack.c.l.b16 %v372
      %v838 = vunpack.c.l.b16 %v373
      %v839 = vunpack.c.l.b16 %v374
      %v840 = vunpack.c.l.b16 %v375
      %v841 = vunpack.c.l.b16 %v376
      %v842 = vunpack.c.l.b16 %v377
      %v843 = vunpack.c.l.b16 %v378
      %v844 = vunpack.c.l.b16 %v379
      %v845 = vunpack.c.l.b16 %v380
      %v846 = vunpack.c.l.b16 %v381
      %v847 = vunpack.c.l.b16 %v382
      %v848 = vunpack.c.l.b16 %v383
      %v849 = vunpack.c.l.b16 %v384
      %v850 = vunpack.c.l.b16 %v385
      %v851 = vunpack.c.l.b16 %v386
      %v852 = vunpack.c.l.b16 %v387
      %v853 = vunpack.c.l.b16 %v388
      %v854 = vunpack.c.l.b16 %v389
      %v855 = vunpack.c.l.b16 %v390
      %v856 = vunpack.c.l.b16 %v391
      %v857 = vunpack.c.l.b16 %v392
      %v858 = vunpack.c.l.b16 %v393
      %v859 = vunpack.c.l.b16 %v394
      %v860 = vunpack.c.l.b16 %v395
      %v861 = vunpack.c.l.b16 %v396
      %v862 = vunpack.c.l.b16 %v397
      %v863 = vunpack.c.l.b16 %v398
      %v864 = vunpack.c.l.b16 %v399
      %v865 = vunpack.c.l.b16 %v400
      %v866 = vunpack.c.l.b16 %v401
      %v867 = vunpack.c.l.b16 %v402
      %v868 = vunpack.c.l.b16 %v403
      %v869 = vunpack.c.l.b16 %v404
      %v870 = vunpack.c.l.b16 %v405
      %v871 = vunpack.c.l.b16 %v406
      %v872 = vunpack.c.l.b16 %v407
      %v873 = vunpack.c.l.b16 %v408
      %v874 = vunpack.c.l.b16 %v409
      %v875 = vunpack.c.l.b16 %v410
      %v876 = vunpack.c.l.b16 %v411
      %v877 = vunpack.c.l.b16 %v412
      %v878 = vunpack.c.l.b16 %v413
      %v879 = vunpack.c.l.b16 %v414
      %v880 = vunpack.c.l.b16 %v415
      %v881 = vunpack.c.l.b16 %v416
      %v882 = vunpack.c.l.b16 %v417
      %v883 = vunpack.c.l.b16 %v418
      %v884 = vunpack.c.l.b16 %v419
      %v885 = vunpack.c.l.b16 %v420
      %v886 = vunpack.c.l.b16 %v421
      %v887 = vunpack.c.l.b16 %v422
      %v888 = vunpack.c.l.b16 %v423
      %v889 = vunpack.c.l.b16 %v424
      %v890 = vunpack.c.l.b16 %v425
      %v891 = vunpack.c.l.b16 %v426
      %v892 = vunpack.c.l.b16 %v427
      %v893 = vunpack.c.l.b16 %v428
      %v894 = vunpack.c.l.b16 %v429
      %v895 = vunpack.c.l.b16 %v430
      %v896 = vunpack.c.l.b16 %v431
      %v897 = vunpack.c.l.b16 %v432
      %v898 = vunpack.c.l.b16 %v433
      %v899 = vunpack.c.l.b16 %v434
      %v900 = vunpack.c.l.b16 %v435
      %v901 = vunpack.c.l.b16 %v436
      %v902 = vunpack.c.l.b16 %v437
      %v903 = vunpack.c.l.b16 %v438
      %v904 = vunpack.c.l.b16 %v439
      %v905 = vunpack.c.l.b16 %v440
      %v906 = vunpack.c.l.b16 %v441
      %v907 = vunpack.c.l.b16 %v442
      %v908 = vunpack.c.l.b16 %v443
      %v909 = vunpack.c.l.b16 %v444
      %v910 = vunpack.c.l.b16 %v445
      %v911 = vunpack.c.l.b16 %v446
      %v912 = vunpack.c.l.b16 %v447
      %v913 = vunpack.c.l.b16 %v448
      %v914 = vunpack.c.l.b16 %v449
      %v915 = vunpack.c.l.b16 %v450
      %v916 = vunpack.c.l.b16 %v451
      %v917 = vunpack.c.l.b16 %v452
      %v918 = vunpack.c.l.b16 %v453
      %v919 = vunpack.c.l.b16 %v454
      %v920 = vunpack.c.l.b16 %v455
      %v921 = vunpack.c.l.b16 %v456
      %v922 = vpack.c.b16 %v779, %v778
      %v923 = vpack.c.b16 %v781, %v780
      %v924 = vpack.c.b16 %v783, %v782
      %v925 = vpack.c.b16 %v785, %v784
      %v926 = vpack.c.b16 %v787, %v786
      %v927 = vpack.c.b16 %v789, %v788
      %v928 = vpack.c.b16 %v791, %v790
      %v929 = vpack.c.b16 %v793, %v792
      %v930 = vpack.c.b16 %v795, %v794
      %v931 = vpack.c.b16 %v797, %v796
      %v932 = vpack.c.b16 %v799, %v798
      %v933 = vpack.c.b16 %v801, %v800
      %v934 = vpack.c.b16 %v803, %v802
      %v935 = vpack.c.b16 %v805, %v804
      %v936 = vpack.c.b16 %v807, %v806
      %v937 = vpack.c.b16 %v809, %v808
      %v938 = vpack.c.b16 %v811, %v810
      %v939 = vpack.c.b16 %v813, %v812
      %v940 = vpack.c.b16 %v815, %v814
      %v941 = vpack.c.b16 %v817, %v816
      %v942 = vpack.c.b16 %v819, %v818
      %v943 = vpack.c.b16 %v821, %v820
      %v944 = vpack.c.b16 %v823, %v822
      %v945 = vpack.c.b16 %v825, %v824
      %v946 = vpack.c.b16 %v827, %v826
      %v947 = vpack.c.b16 %v829, %v828
      %v948 = vpack.c.b16 %v831, %v830
      %v949 = vpack.c.b16 %v833, %v832
      %v950 = vpack.c.b16 %v835, %v834
      %v951 = vpack.c.b16 %v837, %v836
      %v952 = vpack.c.b16 %v839, %v838
      %v953 = vpack.c.b16 %v841, %v840
      %v954 = vpack.c.b16 %v843, %v842
      %v955 = vpack.c.b16 %v845, %v844
      %v956 = vpack.c.b16 %v847, %v846
      %v957 = vpack.c.b16 %v849, %v848
      %v958 = vpack.c.b16 %v851, %v850
      %v959 = vpack.c.b16 %v853, %v852
      %v960 = vpack.c.b16 %v855, %v854
      %v961 = vpack.c.b16 %v857, %v856
      %v962 = vpack.c.b16 %v859, %v858
      %v963 = vpack.c.b16 %v861, %v860
      %v964 = vpack.c.b16 %v863, %v862
      %v965 = vpack.c.b16 %v865, %v864
      %v966 = vpack.c.b16 %v867, %v866
      %v967 = vpack.c.b16 %v869, %v868
      %v968 = vpack.c.b16 %v871, %v870
      %v969 = vpack.c.b16 %v873, %v872
      %v970 = vpack.c.b16 %v875, %v874
      %v971 = vpack.c.b16 %v877, %v876
      %v972 = vpack.c.b16 %v879, %v878
      %v973 = vpack.c.b16 %v881, %v880
      %v974 = vpack.c.b16 %v883, %v882
      %v975 = vpack.c.b16 %v885, %v884
      %v976 = vpack.c.b16 %v887, %v886
      %v977 = vpack.c.b16 %v889, %v888
      %v978 = vpack.c.b16 %v891, %v890
      %v979 = vpack.c.b16 %v893, %v892
      %v980 = vpack.c.b16 %v895, %v894
      %v981 = vpack.c.b16 %v897, %v896
      %v982 = vpack.c.b16 %v899, %v898
      %v983 = vpack.c.b16 %v901, %v900
      %v984 = vpack.c.b16 %v903, %v902
      %v985 = vpack.c.b16 %v905, %v904
      %v986 = vpack.c.b16 %v907, %v906
      %v987 = vpack.c.b16 %v909, %v908
      %v988 = vpack.c.b16 %v911, %v910
      %v989 = vpack.c.b16 %v913, %v912
      %v990 = vpack.c.b16 %v915, %v914
      %v991 = vpack.c.b16 %v917, %v916
      %v992 = vpack.c.b16 %v919, %v918
      %v993 = vpack.c.b16 %v921, %v920
      %1066 = vmatprep.subr.bf16.mxu0 0
      %1067 = vmatpush1.bf16.msra.mxu0 %v922
      %1068 = vmatprep.subr.bf16.mxu0 0
      %1069 = vmatpush1.bf16.msra.mxu0 %v923
      %1070 = vmatprep.subr.bf16.mxu0 0
      %1071 = vmatpush1.bf16.msra.mxu0 %v924
      %1072 = vmatprep.subr.bf16.mxu0 0
      %1073 = vmatpush1.bf16.msra.mxu0 %v925
      %1074 = vmatprep.subr.bf16.mxu0 0
      %1075 = vmatpush1.bf16.msra.mxu0 %v926
      %1076 = vmatprep.subr.bf16.mxu0 0
      %1077 = vmatpush1.bf16.msra.mxu0 %v927
      %1078 = vmatprep.subr.bf16.mxu0 0
      %1079 = vmatpush1.bf16.msra.mxu0 %v928
      %1080 = vmatprep.subr.bf16.mxu0 0
      %1081 = vmatpush1.bf16.msra.mxu0 %v929
      %1082 = vmatprep.subr.bf16.mxu0 0
      %1083 = vmatpush1.bf16.msra.mxu0 %v930
      %1084 = vmatprep.subr.bf16.mxu0 0
      %1085 = vmatpush1.bf16.msra.mxu0 %v931
      %1086 = vmatprep.subr.bf16.mxu0 0
      %1087 = vmatpush1.bf16.msra.mxu0 %v932
      %1088 = vmatprep.subr.bf16.mxu0 0
      %1089 = vmatpush1.bf16.msra.mxu0 %v933
      %1090 = vmatprep.subr.bf16.mxu0 0
      %1091 = vmatpush1.bf16.msra.mxu0 %v934
      %1092 = vmatprep.subr.bf16.mxu0 0
      %1093 = vmatpush1.bf16.msra.mxu0 %v935
      %1094 = vmatprep.subr.bf16.mxu0 0
      %1095 = vmatpush1.bf16.msra.mxu0 %v936
      %1096 = vmatprep.subr.bf16.mxu0 0
      %1097 = vmatpush1.bf16.msra.mxu0 %v937
      %1098 = vmatprep.mubr.bf16.mxu0 %v563
      %1099 = vmatmul.mubr.bf16.gmra.mrb[0].mxu0 %v562
      %v1100 = vpop.f32.mrb[0].mxu0
      %v1101 = vadd.f32 %v462, %v1100
      %v1102 = vpop.f32.mrb[0].mxu0
      %v1103 = vpop.f32.mrb[0].mxu0
      %v1104 = vadd.f32 %v462, %v1103
      %v1105 = vpop.f32.mrb[0].mxu0
      %1106 = vmatprep.mubr.bf16.mxu0 %v572
      %1107 = vmatmul.mubr.bf16.gmra.mrb[0].mxu0 %v571
      %v1108 = vpop.f32.mrb[0].mxu0
      %v1109 = vadd.f32 %v462, %v1108
      %v1110 = vpop.f32.mrb[0].mxu0
      %v1111 = vpop.f32.mrb[0].mxu0
      %v1112 = vadd.f32 %v462, %v1111
      %v1113 = vpop.f32.mrb[0].mxu0
      %1114 = vmatprep.mubr.bf16.mxu0 %v581
      %1115 = vmatmul.mubr.bf16.gmra.mrb[0].mxu0 %v580
      %v1116 = vpop.f32.mrb[0].mxu0
      %v1117 = vadd.f32 %v462, %v1116
      %v1118 = vpop.f32.mrb[0].mxu0
      %v1119 = vpop.f32.mrb[0].mxu0
      %v1120 = vadd.f32 %v462, %v1119
      %v1121 = vpop.f32.mrb[0].mxu0
      %1122 = vmatprep.mubr.bf16.mxu0 %v590
      %1123 = vmatmul.mubr.bf16.gmra.mrb[0].mxu0 %v589
      %v1124 = vpop.f32.mrb[0].mxu0
      %v1125 = vadd.f32 %v462, %v1124
      %v1126 = vpop.f32.mrb[0].mxu0
      %v1127 = vpop.f32.mrb[0].mxu0
      %v1128 = vpop.f32.mrb[0].mxu0
      %1129 = vdwg.mxu0
      %1130 = vmatprep.subr.bf16.mxu0 0
      %1131 = vmatpush1.bf16.msra.mxu0 %v938
      %1132 = vmatprep.subr.bf16.mxu0 0
      %1133 = vmatpush1.bf16.msra.mxu0 %v939
      %1134 = vmatprep.subr.bf16.mxu0 0
      %1135 = vmatpush1.bf16.msra.mxu0 %v940
      %1136 = vmatprep.subr.bf16.mxu0 0
      %1137 = vmatpush1.bf16.msra.mxu0 %v941
      %1138 = vmatprep.subr.bf16.mxu0 0
      %1139 = vmatpush1.bf16.msra.mxu0 %v942
      %1140 = vmatprep.subr.bf16.mxu0 0
      %1141 = vmatpush1.bf16.msra.mxu0 %v943
      %1142 = vmatprep.subr.bf16.mxu0 0
      %1143 = vmatpush1.bf16.msra.mxu0 %v944
      %1144 = vmatprep.subr.bf16.mxu0 0
      %1145 = vmatpush1.bf16.msra.mxu0 %v945
      %1146 = vmatprep.subr.bf16.mxu0 0
      %1147 = vmatpush1.bf16.msra.mxu0 %v946
      %1148 = vmatprep.subr.bf16.mxu0 0
      %1149 = vmatpush1.bf16.msra.mxu0 %v947
      %1150 = vmatprep.subr.bf16.mxu0 0
      %1151 = vmatpush1.bf16.msra.mxu0 %v948
      %1152 = vmatprep.subr.bf16.mxu0 0
      %1153 = vmatpush1.bf16.msra.mxu0 %v949
      %1154 = vmatprep.subr.bf16.mxu0 0
      %1155 = vmatpush1.bf16.msra.mxu0 %v950
      %1156 = vmatprep.subr.bf16.mxu0 0
      %1157 = vmatpush1.bf16.msra.mxu0 %v951
      %1158 = vmatprep.subr.bf16.mxu0 0
      %1159 = vmatpush1.bf16.msra.mxu0 %v952
      %1160 = vmatprep.subr.bf16.mxu0 0
      %1161 = vmatpush1.bf16.msra.mxu0 %v953
      %1162 = vmatprep.mubr.bf16.mxu0 %v565
      %1163 = vmatmul.mubr.bf16.gmra.mrb[0].mxu0 %v564
      %v1164 = vpop.f32.mrb[0].mxu0
      %v1165 = vadd.f32 %v1101, %v1164
      %v1166 = vpop.f32.mrb[0].mxu0
      %v1167 = vpop.f32.mrb[0].mxu0
      %v1168 = vadd.f32 %v1104, %v1167
      %v1169 = vpop.f32.mrb[0].mxu0
      %1170 = vmatprep.mubr.bf16.mxu0 %v574
      %1171 = vmatmul.mubr.bf16.gmra.mrb[0].mxu0 %v573
      %v1172 = vpop.f32.mrb[0].mxu0
      %v1173 = vadd.f32 %v1109, %v1172
      %v1174 = vpop.f32.mrb[0].mxu0
      %v1175 = vpop.f32.mrb[0].mxu0
      %v1176 = vadd.f32 %v1112, %v1175
      %v1177 = vpop.f32.mrb[0].mxu0
      %1178 = vmatprep.mubr.bf16.mxu0 %v583
      %1179 = vmatmul.mubr.bf16.gmra.mrb[0].mxu0 %v582
      %v1180 = vpop.f32.mrb[0].mxu0
      %v1181 = vadd.f32 %v1117, %v1180
      %v1182 = vpop.f32.mrb[0].mxu0
      %v1183 = vpop.f32.mrb[0].mxu0
      %v1184 = vadd.f32 %v1120, %v1183
      %v1185 = vpop.f32.mrb[0].mxu0
      %1186 = vmatprep.mubr.bf16.mxu0 %v592
      %1187 = vmatmul.mubr.bf16.gmra.mrb[0].mxu0 %v591
      %v1188 = vpop.f32.mrb[0].mxu0
      %v1189 = vadd.f32 %v1125, %v1188
      %v1190 = vpop.f32.mrb[0].mxu0
      %v1191 = vpop.f32.mrb[0].mxu0
      %v1192 = vpop.f32.mrb[0].mxu0
      %1193 = vdwg.mxu0
      %1194 = vmatprep.subr.bf16.mxu0 0
      %1195 = vmatpush1.bf16.msra.mxu0 %v954
      %1196 = vmatprep.subr.bf16.mxu0 0
      %1197 = vmatpush1.bf16.msra.mxu0 %v955
      %1198 = vmatprep.subr.bf16.mxu0 0
      %1199 = vmatpush1.bf16.msra.mxu0 %v956
      %1200 = vmatprep.subr.bf16.mxu0 0
      %1201 = vmatpush1.bf16.msra.mxu0 %v957
      %1202 = vmatprep.subr.bf16.mxu0 0
      %1203 = vmatpush1.bf16.msra.mxu0 %v958
      %1204 = vmatprep.subr.bf16.mxu0 0
      %1205 = vmatpush1.bf16.msra.mxu0 %v959
      %1206 = vmatprep.subr.bf16.mxu0 0
      %1207 = vmatpush1.bf16.msra.mxu0 %v960
      %1208 = vmatprep.subr.bf16.mxu0 0
      %1209 = vmatpush1.bf16.msra.mxu0 %v961
      %1210 = vmatprep.subr.bf16.mxu0 0
      %1211 = vmatpush1.bf16.msra.mxu0 %v962
      %1212 = vmatprep.subr.bf16.mxu0 0
      %1213 = vmatpush1.bf16.msra.mxu0 %v963
      %1214 = vmatprep.subr.bf16.mxu0 0
      %1215 = vmatpush1.bf16.msra.mxu0 %v964
      %1216 = vmatprep.subr.bf16.mxu0 0
      %1217 = vmatpush1.bf16.msra.mxu0 %v965
      %1218 = vmatprep.subr.bf16.mxu0 0
      %1219 = vmatpush1.bf16.msra.mxu0 %v966
      %1220 = vmatprep.subr.bf16.mxu0 0
      %1221 = vmatpush1.bf16.msra.mxu0 %v967
      %1222 = vmatprep.subr.bf16.mxu0 0
      %1223 = vmatpush1.bf16.msra.mxu0 %v968
      %1224 = vmatprep.subr.bf16.mxu0 0
      %1225 = vmatpush1.bf16.msra.mxu0 %v969
      %1226 = vmatprep.mubr.bf16.mxu0 %v567
      %1227 = vmatmul.mubr.bf16.gmra.mrb[0].mxu0 %v566
      %v1228 = vpop.f32.mrb[0].mxu0
      %v1229 = vadd.f32 %v1165, %v1228
      %v1230 = vpop.f32.mrb[0].mxu0
      %v1231 = vpop.f32.mrb[0].mxu0
      %v1232 = vadd.f32 %v1168, %v1231
      %v1233 = vpop.f32.mrb[0].mxu0
      %1234 = vmatprep.mubr.bf16.mxu0 %v576
      %1235 = vmatmul.mubr.bf16.gmra.mrb[0].mxu0 %v575
      %v1236 = vpop.f32.mrb[0].mxu0
      %v1237 = vadd.f32 %v1173, %v1236
      %v1238 = vpop.f32.mrb[0].mxu0
      %v1239 = vpop.f32.mrb[0].mxu0
      %v1240 = vadd.f32 %v1176, %v1239
      %v1241 = vpop.f32.mrb[0].mxu0
      %1242 = vmatprep.mubr.bf16.mxu0 %v585
      %1243 = vmatmul.mubr.bf16.gmra.mrb[0].mxu0 %v584
      %v1244 = vpop.f32.mrb[0].mxu0
      %v1245 = vadd.f32 %v1181, %v1244
      %v1246 = vpop.f32.mrb[0].mxu0
      %v1247 = vpop.f32.mrb[0].mxu0
      %v1248 = vadd.f32 %v1184, %v1247
      %v1249 = vpop.f32.mrb[0].mxu0
      %1250 = vmatprep.mubr.bf16.mxu0 %v594
      %1251 = vmatmul.mubr.bf16.gmra.mrb[0].mxu0 %v593
      %v1252 = vpop.f32.mrb[0].mxu0
      %v1253 = vadd.f32 %v1189, %v1252
      %v1254 = vpop.f32.mrb[0].mxu0
      %v1255 = vpop.f32.mrb[0].mxu0
      %v1256 = vpop.f32.mrb[0].mxu0
      %1257 = vdwg.mxu0
      %1258 = vmatprep.subr.bf16.mxu0 0
      %1259 = vmatpush1.bf16.msra.mxu0 %v970
      %1260 = vmatprep.subr.bf16.mxu0 0
      %1261 = vmatpush1.bf16.msra.mxu0 %v971
      %1262 = vmatprep.subr.bf16.mxu0 0
      %1263 = vmatpush1.bf16.msra.mxu0 %v972
      %1264 = vmatprep.subr.bf16.mxu0 0
      %1265 = vmatpush1.bf16.msra.mxu0 %v973
      %1266 = vmatprep.subr.bf16.mxu0 0
      %1267 = vmatpush1.bf16.msra.mxu0 %v974
      %1268 = vmatprep.subr.bf16.mxu0 0
      %1269 = vmatpush1.bf16.msra.mxu0 %v975
      %1270 = vmatprep.subr.bf16.mxu0 0
      %1271 = vmatpush1.bf16.msra.mxu0 %v976
      %1272 = vmatprep.subr.bf16.mxu0 0
      %1273 = vmatpush1.bf16.msra.mxu0 %v977
      %1274 = vmatprep.subr.bf16.mxu0 0
      %1275 = vmatpush1.bf16.msra.mxu0 %v978
      %1276 = vmatprep.subr.bf16.mxu0 0
      %1277 = vmatpush1.bf16.msra.mxu0 %v979
      %1278 = vmatprep.subr.bf16.mxu0 0
      %1279 = vmatpush1.bf16.msra.mxu0 %v980
      %1280 = vmatprep.subr.bf16.mxu0 0
      %1281 = vmatpush1.bf16.msra.mxu0 %v981
      %1282 = vmatprep.subr.bf16.mxu0 0
      %1283 = vmatpush1.bf16.msra.mxu0 %v982
      %1284 = vmatprep.subr.bf16.mxu0 0
      %1285 = vmatpush1.bf16.msra.mxu0 %v983
      %1286 = vmatprep.subr.bf16.mxu0 0
      %1287 = vmatpush1.bf16.msra.mxu0 %v984
      %1288 = vmatprep.subr.bf16.mxu0 0
      %1289 = vmatpush1.bf16.msra.mxu0 %v985
      %1290 = vmatprep.mubr.bf16.mxu0 %v569
      %1291 = vmatmul.mubr.bf16.gmra.mrb[0].mxu0 %v568
      %v1292 = vpop.f32.mrb[0].mxu0
      %v1293 = vadd.f32 %v1229, %v1292
      %v1294 = vpop.f32.mrb[0].mxu0
      %v1295 = vpop.f32.mrb[0].mxu0
      %v1296 = vadd.f32 %v1232, %v1295
      %v1297 = vpop.f32.mrb[0].mxu0
      %1298 = vmatprep.mubr.bf16.mxu0 %v578
      %1299 = vmatmul.mubr.bf16.gmra.mrb[0].mxu0 %v577
      %v1300 = vpop.f32.mrb[0].mxu0
      %v1301 = vadd.f32 %v1237, %v1300
      %v1302 = vpop.f32.mrb[0].mxu0
      %v1303 = vpop.f32.mrb[0].mxu0
      %v1304 = vadd.f32 %v1240, %v1303
      %v1305 = vpop.f32.mrb[0].mxu0
      %1306 = vmatprep.mubr.bf16.mxu0 %v587
      %1307 = vmatmul.mubr.bf16.gmra.mrb[0].mxu0 %v586
      %v1308 = vpop.f32.mrb[0].mxu0
      %v1309 = vadd.f32 %v1245, %v1308
      %v1310 = vpop.f32.mrb[0].mxu0
      %v1311 = vpop.f32.mrb[0].mxu0
      %v1312 = vadd.f32 %v1248, %v1311
      %v1313 = vpop.f32.mrb[0].mxu0
      %1314 = vmatprep.mubr.bf16.mxu0 %v596
      %1315 = vmatmul.mubr.bf16.gmra.mrb[0].mxu0 %v595
      %v1316 = vpop.f32.mrb[0].mxu0
      %v1317 = vadd.f32 %v1253, %v1316
      %v1318 = vpop.f32.mrb[0].mxu0
      %v1319 = vpop.f32.mrb[0].mxu0
      %v1320 = vpop.f32.mrb[0].mxu0
      %1321 = vdwg.mxu0
      %1322 = vmatprep.subr.bf16.mxu0 0
      %1323 = vmatpush1.bf16.msra.mxu0 %v986
      %1324 = vmatprep.subr.bf16.mxu0 0
      %1325 = vmatpush1.bf16.msra.mxu0 %v987
      %1326 = vmatprep.subr.bf16.mxu0 0
      %1327 = vmatpush1.bf16.msra.mxu0 %v988
      %1328 = vmatprep.subr.bf16.mxu0 0
      %1329 = vmatpush1.bf16.msra.mxu0 %v989
      %1330 = vmatprep.subr.bf16.mxu0 0
      %1331 = vmatpush1.bf16.msra.mxu0 %v990
      %1332 = vmatprep.subr.bf16.mxu0 0
      %1333 = vmatpush1.bf16.msra.mxu0 %v991
      %1334 = vmatprep.subr.bf16.mxu0 0
      %1335 = vmatpush1.bf16.msra.mxu0 %v992
      %1336 = vmatprep.subr.bf16.mxu0 0
      %1337 = vmatpush1.bf16.msra.mxu0 %v993
      %1338 = vmatprep.subr.bf16.mxu0 0
      %1339 = vmatpush1.bf16.msra.mxu0 0
      %1340 = vmatprep.subr.bf16.mxu0 0
      %1341 = vmatpush1.bf16.msra.mxu0 0
      %1342 = vmatprep.subr.bf16.mxu0 0
      %1343 = vmatpush1.bf16.msra.mxu0 0
      %1344 = vmatprep.subr.bf16.mxu0 0
      %1345 = vmatpush1.bf16.msra.mxu0 0
      %1346 = vmatprep.subr.bf16.mxu0 0
      %1347 = vmatpush1.bf16.msra.mxu0 0
      %1348 = vmatprep.subr.bf16.mxu0 0
      %1349 = vmatpush1.bf16.msra.mxu0 0
      %1350 = vmatprep.subr.bf16.mxu0 0
      %1351 = vmatpush1.bf16.msra.mxu0 0
      %1352 = vmatprep.subr.bf16.mxu0 0
      %1353 = vmatpush1.bf16.msra.mxu0 0
      %1354 = vmatprep.mubr.bf16.mxu0 0
      %1355 = vmatmul.mubr.bf16.gmra.mrb[0].mxu0 %v570
      %v1356 = vpop.f32.mrb[0].mxu0
      %v1357 = vadd.f32 %v1293, %v1356
      %v1358 = vpop.f32.mrb[0].mxu0
      %v1359 = vpop.f32.mrb[0].mxu0
      %v1360 = vadd.f32 %v1296, %v1359
      %v1361 = vpop.f32.mrb[0].mxu0
      %1362 = vmatprep.mubr.bf16.mxu0 0
      %1363 = vmatmul.mubr.bf16.gmra.mrb[0].mxu0 %v579
      %v1364 = vpop.f32.mrb[0].mxu0
      %v1365 = vadd.f32 %v1301, %v1364
      %v1366 = vpop.f32.mrb[0].mxu0
      %v1367 = vpop.f32.mrb[0].mxu0
      %v1368 = vadd.f32 %v1304, %v1367
      %v1369 = vpop.f32.mrb[0].mxu0
      %1370 = vmatprep.mubr.bf16.mxu0 0
      %1371 = vmatmul.mubr.bf16.gmra.mrb[0].mxu0 %v588
      %v1372 = vpop.f32.mrb[0].mxu0
      %v1373 = vadd.f32 %v1309, %v1372
      %v1374 = vpop.f32.mrb[0].mxu0
      %v1375 = vpop.f32.mrb[0].mxu0
      %v1376 = vadd.f32 %v1312, %v1375
      %v1377 = vpop.f32.mrb[0].mxu0
      %1378 = vmatprep.mubr.bf16.mxu0 0
      %1379 = vmatmul.mubr.bf16.gmra.mrb[0].mxu0 %v597
      %v1380 = vpop.f32.mrb[0].mxu0
      %v1381 = vadd.f32 %v1317, %v1380
      %v1382 = vpop.f32.mrb[0].mxu0
      %v1383 = vpop.f32.mrb[0].mxu0
      %v1384 = vpop.f32.mrb[0].mxu0
      %1385 = vdwg.mxu0
      %v1386 = vmax.f32 %v1357, 0.0
      %v1387 = vmax.f32 %v1360, 0.0
      %v1388 = vmax.f32 %v1365, 0.0
      %v1389 = vmax.f32 %v1368, 0.0
      %v1390 = vmax.f32 %v1373, 0.0
      %v1391 = vmax.f32 %v1376, 0.0
      %v1392 = vmax.f32 %v1381, 0.0
      %v1393 = vpack.c.bf16 %v1387, %v1386
      %v1394 = vpack.c.bf16 %v1389, %v1388
      %v1395 = vpack.c.bf16 %v1391, %v1390
      %v1396 = vpack.c.bf16 %v1392, %v1392
      %v1397 = vld [vmem:[%s3] sm:$0xf]
      %v1398 = vld [vmem:[%s3 + $0x4] sm:$0xf]
      %v1399 = vld [vmem:[%s3 + $0x8] sm:$0xf]
      %v1400 = vld [vmem:[%s3 + $0xc] sm:$0xf]
      %v1401 = vld [vmem:[%s3 + $0x10] sm:$0xf]
      %v1402 = vld [vmem:[%s3 + $0x14] sm:$0xf]
      %v1403 = vld [vmem:[%s3 + $0x18] sm:$0xf]
      %v1404 = vld [vmem:[%s3 + $0x1c] sm:$0xf]
      %v1405 = vld [vmem:[%s3 + $0x20] sm:$0xf]
      %v1406 = vld [vmem:[%s3 + $0x24] sm:$0xf]
      %v1407 = vld [vmem:[%s3 + $0x28] sm:$0xf]
      %v1408 = vld [vmem:[%s3 + $0x2c] sm:$0xf]
      %v1409 = vld [vmem:[%s3 + $0x30] sm:$0xf]
      %v1410 = vld [vmem:[%s3 + $0x34] sm:$0xf]
      %v1411 = vld [vmem:[%s3 + $0x38] sm:$0xf]
      %v1412 = vld [vmem:[%s3 + $0x3c] sm:$0xf]
      %v1413 = vld [vmem:[%s4] sm:$0x1]
      %v1415 = vlaneseq
      %v1416 = vshrl.u32 %v1415, 7
      %v1417 = vsub.s32 0, %v1416
      %v1418 = vrot.slane %v1413, %v1417
      %v1436 = vunpack.c.l.b16 %v1397
      %v1437 = vunpack.c.l.b16 %v1398
      %v1438 = vunpack.c.l.b16 %v1399
      %v1439 = vunpack.c.l.b16 %v1400
      %v1440 = vunpack.c.l.b16 %v1401
      %v1441 = vunpack.c.l.b16 %v1402
      %v1442 = vunpack.c.l.b16 %v1403
      %v1443 = vunpack.c.l.b16 %v1404
      %v1444 = vunpack.c.l.b16 %v1405
      %v1445 = vunpack.c.l.b16 %v1406
      %v1446 = vunpack.c.l.b16 %v1407
      %v1447 = vunpack.c.l.b16 %v1408
      %v1448 = vunpack.c.l.b16 %v1409
      %v1449 = vunpack.c.l.b16 %v1410
      %v1450 = vunpack.c.l.b16 %v1411
      %v1451 = vunpack.c.l.b16 %v1412
      %v1452 = vpack.c.b16 %v1437, %v1436
      %v1453 = vpack.c.b16 %v1439, %v1438
      %v1454 = vpack.c.b16 %v1441, %v1440
      %v1455 = vpack.c.b16 %v1443, %v1442
      %v1456 = vpack.c.b16 %v1445, %v1444
      %v1457 = vpack.c.b16 %v1447, %v1446
      %v1458 = vpack.c.b16 %v1449, %v1448
      %v1459 = vpack.c.b16 %v1451, %v1450
      %1468 = vmatprep.subr.bf16.mxu0 0
      %1469 = vmatpush1.bf16.msra.mxu0 %v1452
      %1470 = vmatprep.subr.bf16.mxu0 0
      %1471 = vmatpush1.bf16.msra.mxu0 %v1453
      %1472 = vmatprep.subr.bf16.mxu0 0
      %1473 = vmatpush1.bf16.msra.mxu0 %v1454
      %1474 = vmatprep.subr.bf16.mxu0 0
      %1475 = vmatpush1.bf16.msra.mxu0 %v1455
      %1476 = vmatprep.subr.bf16.mxu0 0
      %1477 = vmatpush1.bf16.msra.mxu0 %v1456
      %1478 = vmatprep.subr.bf16.mxu0 0
      %1479 = vmatpush1.bf16.msra.mxu0 %v1457
      %1480 = vmatprep.subr.bf16.mxu0 0
      %1481 = vmatpush1.bf16.msra.mxu0 %v1458
      %1482 = vmatprep.subr.bf16.mxu0 0
      %1483 = vmatpush1.bf16.msra.mxu0 %v1459
      %1484 = vmatprep.subr.bf16.mxu0 0
      %1485 = vmatpush1.bf16.msra.mxu0 0
      %1486 = vmatprep.subr.bf16.mxu0 0
      %1487 = vmatpush1.bf16.msra.mxu0 0
      %1488 = vmatprep.subr.bf16.mxu0 0
      %1489 = vmatpush1.bf16.msra.mxu0 0
      %1490 = vmatprep.subr.bf16.mxu0 0
      %1491 = vmatpush1.bf16.msra.mxu0 0
      %1492 = vmatprep.subr.bf16.mxu0 0
      %1493 = vmatpush1.bf16.msra.mxu0 0
      %1494 = vmatprep.subr.bf16.mxu0 0
      %1495 = vmatpush1.bf16.msra.mxu0 0
      %1496 = vmatprep.subr.bf16.mxu0 0
      %1497 = vmatpush1.bf16.msra.mxu0 0
      %1498 = vmatprep.subr.bf16.mxu0 0
      %1499 = vmatpush1.bf16.msra.mxu0 0
      %1500 = vmatprep.mubr.bf16.mxu0 0
      %1501 = vmatmul.mubr.bf16.gmra.mrb[0].mxu0 %v1393
      %v1502 = vpop.f32.mrb[0].mxu0
      %v1503 = vadd.f32 %v1418, %v1502
      %v1504 = vpop.f32.mrb[0].mxu0
      %v1505 = vpop.f32.mrb[0].mxu0
      %v1506 = vadd.f32 %v1418, %v1505
      %v1507 = vpop.f32.mrb[0].mxu0
      %1508 = vmatprep.mubr.bf16.mxu0 0
      %1509 = vmatmul.mubr.bf16.gmra.mrb[0].mxu0 %v1394
      %v1510 = vpop.f32.mrb[0].mxu0
      %v1511 = vadd.f32 %v1418, %v1510
      %v1512 = vpop.f32.mrb[0].mxu0
      %v1513 = vpop.f32.mrb[0].mxu0
      %v1514 = vadd.f32 %v1418, %v1513
      %v1515 = vpop.f32.mrb[0].mxu0
      %1516 = vmatprep.mubr.bf16.mxu0 0
      %1517 = vmatmul.mubr.bf16.gmra.mrb[0].mxu0 %v1395
      %v1518 = vpop.f32.mrb[0].mxu0
      %v1519 = vadd.f32 %v1418, %v1518
      %v1520 = vpop.f32.mrb[0].mxu0
      %v1521 = vpop.f32.mrb[0].mxu0
      %v1522 = vadd.f32 %v1418, %v1521
      %v1523 = vpop.f32.mrb[0].mxu0
      %1524 = vmatprep.mubr.bf16.mxu0 0
      %1525 = vmatmul.mubr.bf16.gmra.mrb[0].mxu0 %v1396
      %v1526 = vpop.f32.mrb[0].mxu0
      %v1527 = vadd.f32 %v1418, %v1526
      %v1528 = vpop.f32.mrb[0].mxu0
      %v1529 = vpop.f32.mrb[0].mxu0
      %v1530 = vpop.f32.mrb[0].mxu0
      %1531 = vdwg.mxu0
      %v1532 = vmax.f32 %v1503, 0.0
      %v1533 = vmax.f32 %v1506, 0.0
      %v1534 = vmax.f32 %v1511, 0.0
      %v1535 = vmax.f32 %v1514, 0.0
      %v1536 = vmax.f32 %v1519, 0.0
      %v1537 = vmax.f32 %v1522, 0.0
      %v1538 = vmax.f32 %v1527, 0.0
      %v1539 = vpack.c.bf16 %v1533, %v1532
      %v1540 = vpack.c.bf16 %v1535, %v1534
      %v1541 = vpack.c.bf16 %v1537, %v1536
      %v1542 = vpack.c.bf16 %v1538, %v1538
      %v1543 = vld [vmem:[%s5] sm:$0xf]
      %v1544 = vld [vmem:[%s5 + $0x4] sm:$0xf]
      %v1545 = vld [vmem:[%s5 + $0x8] sm:$0xf]
      %v1546 = vld [vmem:[%s5 + $0xc] sm:$0xf]
      %v1547 = vld [vmem:[%s5 + $0x10] sm:$0xf]
      %v1548 = vld [vmem:[%s5 + $0x14] sm:$0xf]
      %v1549 = vld [vmem:[%s5 + $0x18] sm:$0xf]
      %v1550 = vld [vmem:[%s5 + $0x1c] sm:$0xf]
      %v1551 = vld [vmem:[%s5 + $0x20] sm:$0xf]
      %v1552 = vld [vmem:[%s5 + $0x24] sm:$0xf]
      %v1553 = vld [vmem:[%s5 + $0x28] sm:$0xf]
      %v1554 = vld [vmem:[%s5 + $0x2c] sm:$0xf]
      %v1555 = vld [vmem:[%s5 + $0x30] sm:$0xf]
      %v1556 = vld [vmem:[%s5 + $0x34] sm:$0xf]
      %v1557 = vld [vmem:[%s5 + $0x38] sm:$0xf]
      %v1558 = vld [vmem:[%s5 + $0x3c] sm:$0xf]
      %v1559 = vld [vmem:[%s6] sm:$0x1]
      %v1561 = vlaneseq
      %v1562 = vshrl.u32 %v1561, 7
      %v1563 = vsub.s32 0, %v1562
      %v1564 = vrot.slane %v1559, %v1563
      %v1582 = vunpack.c.l.b16 %v1543
      %v1583 = vunpack.c.l.b16 %v1544
      %v1584 = vunpack.c.l.b16 %v1545
      %v1585 = vunpack.c.l.b16 %v1546
      %v1586 = vunpack.c.l.b16 %v1547
      %v1587 = vunpack.c.l.b16 %v1548
      %v1588 = vunpack.c.l.b16 %v1549
      %v1589 = vunpack.c.l.b16 %v1550
      %v1590 = vunpack.c.l.b16 %v1551
      %v1591 = vunpack.c.l.b16 %v1552
      %v1592 = vunpack.c.l.b16 %v1553
      %v1593 = vunpack.c.l.b16 %v1554
      %v1594 = vunpack.c.l.b16 %v1555
      %v1595 = vunpack.c.l.b16 %v1556
      %v1596 = vunpack.c.l.b16 %v1557
      %v1597 = vunpack.c.l.b16 %v1558
      %v1598 = vpack.c.b16 %v1583, %v1582
      %v1599 = vpack.c.b16 %v1585, %v1584
      %v1600 = vpack.c.b16 %v1587, %v1586
      %v1601 = vpack.c.b16 %v1589, %v1588
      %v1602 = vpack.c.b16 %v1591, %v1590
      %v1603 = vpack.c.b16 %v1593, %v1592
      %v1604 = vpack.c.b16 %v1595, %v1594
      %v1605 = vpack.c.b16 %v1597, %v1596
      %1614 = vmatprep.subr.bf16.mxu0 0
      %1615 = vmatpush1.bf16.msra.mxu0 %v1598
      %1616 = vmatprep.subr.bf16.mxu0 0
      %1617 = vmatpush1.bf16.msra.mxu0 %v1599
      %1618 = vmatprep.subr.bf16.mxu0 0
      %1619 = vmatpush1.bf16.msra.mxu0 %v1600
      %1620 = vmatprep.subr.bf16.mxu0 0
      %1621 = vmatpush1.bf16.msra.mxu0 %v1601
      %1622 = vmatprep.subr.bf16.mxu0 0
      %1623 = vmatpush1.bf16.msra.mxu0 %v1602
      %1624 = vmatprep.subr.bf16.mxu0 0
      %1625 = vmatpush1.bf16.msra.mxu0 %v1603
      %1626 = vmatprep.subr.bf16.mxu0 0
      %1627 = vmatpush1.bf16.msra.mxu0 %v1604
      %1628 = vmatprep.subr.bf16.mxu0 0
      %1629 = vmatpush1.bf16.msra.mxu0 %v1605
      %1630 = vmatprep.subr.bf16.mxu0 0
      %1631 = vmatpush1.bf16.msra.mxu0 0
      %1632 = vmatprep.subr.bf16.mxu0 0
      %1633 = vmatpush1.bf16.msra.mxu0 0
      %1634 = vmatprep.subr.bf16.mxu0 0
      %1635 = vmatpush1.bf16.msra.mxu0 0
      %1636 = vmatprep.subr.bf16.mxu0 0
      %1637 = vmatpush1.bf16.msra.mxu0 0
      %1638 = vmatprep.subr.bf16.mxu0 0
      %1639 = vmatpush1.bf16.msra.mxu0 0
      %1640 = vmatprep.subr.bf16.mxu0 0
      %1641 = vmatpush1.bf16.msra.mxu0 0
      %1642 = vmatprep.subr.bf16.mxu0 0
      %1643 = vmatpush1.bf16.msra.mxu0 0
      %1644 = vmatprep.subr.bf16.mxu0 0
      %1645 = vmatpush1.bf16.msra.mxu0 0
      %1646 = vmatprep.mubr.bf16.mxu0 0
      %1647 = vmatmul.mubr.bf16.gmra.mrb[0].mxu0 %v1539
      %v1648 = vpop.f32.mrb[0].mxu0
      %v1649 = vadd.f32 %v1564, %v1648
      %v1650 = vpop.f32.mrb[0].mxu0
      %v1651 = vpop.f32.mrb[0].mxu0
      %v1652 = vadd.f32 %v1564, %v1651
      %v1653 = vpop.f32.mrb[0].mxu0
      %1654 = vmatprep.mubr.bf16.mxu0 0
      %1655 = vmatmul.mubr.bf16.gmra.mrb[0].mxu0 %v1540
      %v1656 = vpop.f32.mrb[0].mxu0
      %v1657 = vadd.f32 %v1564, %v1656
      %v1658 = vpop.f32.mrb[0].mxu0
      %v1659 = vpop.f32.mrb[0].mxu0
      %v1660 = vadd.f32 %v1564, %v1659
      %v1661 = vpop.f32.mrb[0].mxu0
      %1662 = vmatprep.mubr.bf16.mxu0 0
      %1663 = vmatmul.mubr.bf16.gmra.mrb[0].mxu0 %v1541
      %v1664 = vpop.f32.mrb[0].mxu0
      %v1665 = vadd.f32 %v1564, %v1664
      %v1666 = vpop.f32.mrb[0].mxu0
      %v1667 = vpop.f32.mrb[0].mxu0
      %v1668 = vadd.f32 %v1564, %v1667
      %v1669 = vpop.f32.mrb[0].mxu0
      %1670 = vmatprep.mubr.bf16.mxu0 0
      %1671 = vmatmul.mubr.bf16.gmra.mrb[0].mxu0 %v1542
      %v1672 = vpop.f32.mrb[0].mxu0
      %v1673 = vadd.f32 %v1564, %v1672
      %v1674 = vpop.f32.mrb[0].mxu0
      %v1675 = vpop.f32.mrb[0].mxu0
      %v1676 = vpop.f32.mrb[0].mxu0
      %1677 = vdwg.mxu0
      %v1678 = vmax.f32 %v1649, 0.0
      %v1679 = vmax.f32 %v1652, 0.0
      %v1680 = vmax.f32 %v1657, 0.0
      %v1681 = vmax.f32 %v1660, 0.0
      %v1682 = vmax.f32 %v1665, 0.0
      %v1683 = vmax.f32 %v1668, 0.0
      %v1684 = vmax.f32 %v1673, 0.0
      %v1685 = vadd.f32 %v1678, %v1679
      %v1686 = vadd.f32 %v1685, %v1680
      %v1687 = vadd.f32 %v1686, %v1681
      %v1688 = vadd.f32 %v1687, %v1682
      %v1689 = vadd.f32 %v1688, %v1683
      %vm1690 = vcmask 1040384
      %v1691 = vsel %vm1690, %v1684, 0.0
      %v1692 = vadd.f32 %v1689, %v1691
      %v1693 = vrot.slane %v1692, 4
      %v1694 = vadd.f32 %v1692, %v1693
      %v1695 = vrot.slane %v1694, 2
      %v1696 = vadd.f32 %v1694, %v1695
      %v1697 = vrot.slane %v1696, 1
      %v1698 = vadd.f32 %v1696, %v1697
      %v1699 = vrcp.pop 49.0
      %v1700 = vmul.f32 %v1698, %v1699
      %1701 = vst [vmem:[%s276] sm:$0xff] %v1700
      %p1702 = scmp.lt.s32.totalorder %s18, 1
      %s1703 = scalar_select %p1702, %s18, 1
      %s1704 = smul.addr %s1703, 8
      %s1705 = scalar_lea.vmem %s7, %s1704
      // Predicated region
      $region49: #{nin_forward.7} parent=47 // pred_check
        %p1706 = pneg %p188
      $region50: #{nin_forward.7} parent=47 // pred_check_branch
        %1708 = sbr.rel (%p1706) target = $region52
      $region51: #{nin_forward.7} parent=47 // pred_region
        _
      $region52: #{nin_forward.7} parent=47 // pred_fallthru
        _
    $region48: #{nin_forward.7} parent=5 // pred_fallthru
      _
    %p1709 = scmp.le.s32.totalorder 2, %s13
    // Predicated region
    $region53: #{nin_forward.7} parent=5 // pred_check
      %p1710 = pneg %p1709
    $region54: #{nin_forward.7} parent=5 // pred_check_branch
      %1712 = sbr.rel (%p1710) target = $region56
    $region55: #{nin_forward.7} parent=5 // pred_region
      %s1713 = ssub.s32 %s13, 2
      // Predicated region
      $region57: #{nin_forward.7} parent=55 // pred_check
        %p1714 = pneg %p194
      $region58: #{nin_forward.7} parent=55 // pred_check_branch
        %1716 = sbr.rel (%p1714) target = $region60
      $region59: #{nin_forward.7} parent=55 // pred_region
        %p1717 = scmp.lt.s32.totalorder %s19, 1
        %s1718 = scalar_select %p1717, %s19, 1
        %s1719 = smul.addr %s1718, 8
        %s1720 = scalar_lea.vmem %s7, %s1719
      $region60: #{nin_forward.7} parent=55 // pred_fallthru
        _
    $region56: #{nin_forward.7} parent=5 // pred_fallthru
      _
  $region6: #{nin_forward.7} parent=0 // loop_footer
    %s17 = sadd.s32 1, %s13
  $region7: #{nin_forward.7} parent=0 // loop_footer_branch
    %12 = sbr.rel target = $region3
  $region8: #{nin_forward.7} parent=0 // loop_exit
    _

</llo_original>
